<compile_context>
chip_gen: v6e
topology: v6e:2x2x1
jax: 0.10.0
libtpu: 0.0.40
codegen_flags: <defaults>
</compile_context>

<pallas_src>
import math

import jax
import jax.numpy as jnp
from jax import lax
from jax.experimental import pallas as pl
from jax.experimental.pallas import tpu as pltpu


ATTN1_NAME = "mid_block.attentions.0.transformer_blocks.0.attn1.processor"


# ----------------------------------------------------------------------------
# Kernel 1: 'w' (write / reference) pass.
# ----------------------------------------------------------------------------

def _write_pass_kernel(sig_ref, t_ref, x_ref, n_ref, w_in_ref, time_w_ref, o_ref):
    b = pl.program_id(0)
    sigma = sig_ref[b]
    t = t_ref[b]
    # Euler-ancestral eval path: noisy = x + sigma*noise ; scaled = noisy / sqrt(sigma^2+1)
    noisy = (x_ref[0] + sigma * n_ref[0]) * lax.rsqrt(sigma * sigma + 1.0)
    tok = jnp.dot(noisy, w_in_ref[...], preferred_element_type=jnp.float32)
    o_ref[0] = (tok + t * time_w_ref[...]).astype(o_ref.dtype)


def write_pass(cond_tok, noise_tok, sigma, t, w_in, time_w_2d):
    """cond_tok/noise_tok: (bs, vn*S, c); sigma/t: (bs,) f32 -> (bs, vn*S, D)."""
    bs, R, C = cond_tok.shape
    D = w_in.shape[1]
    return pl.pallas_call(
        _write_pass_kernel,
        out_shape=jax.ShapeDtypeStruct((bs, R, D), jnp.float32),
        grid=(bs,),
        in_specs=[
            pl.BlockSpec(memory_space=pltpu.MemorySpace.SMEM),   # sigma (bs,)
            pl.BlockSpec(memory_space=pltpu.MemorySpace.SMEM),   # t     (bs,)
            pl.BlockSpec((1, R, C), lambda b: (b, 0, 0)),
            pl.BlockSpec((1, R, C), lambda b: (b, 0, 0)),
            pl.BlockSpec((C, D), lambda b: (0, 0)),
            pl.BlockSpec((1, D), lambda b: (0, 0)),
        ],
        out_specs=pl.BlockSpec((1, R, D), lambda b: (b, 0, 0)),
        compiler_params=pltpu.CompilerParams(dimension_semantics=("parallel",)),
    )(sigma, t, cond_tok, noise_tok, w_in, time_w_2d)


# ----------------------------------------------------------------------------
# Kernel 2: 'r' (main) pass — one fused transformer block per batch element.
# ----------------------------------------------------------------------------

def _sdpa(q, k, v):
    # q: (Sq, D), k/v: (Sk, D).  1/sqrt(D) is pre-folded into the q-projection
    # weight, so no score-matrix scaling here.  Contract last dims directly to
    # avoid an explicit transpose of k.
    s = lax.dot_general(q, k, (((1,), (1,)), ((), ())),
                        preferred_element_type=jnp.float32)
    m = jnp.max(s, axis=-1, keepdims=True)
    p = jnp.exp(s - m)
    denom = jnp.sum(p, axis=-1, keepdims=True)
    o = jnp.dot(p, v, preferred_element_type=jnp.float32)
    # Fold 1/sum into the (Sq, D) output rather than the (Sq, Sk) score matrix.
    return o * pl.reciprocal(denom, approx=True)


def _main_block_kernel(t_ref, x_ref, ehs_ref, ref_ref,
                       w_in_ref, time_w_ref,
                       wq1_ref, wkv1_ref, wo1_ref,
                       wq2_ref, wkv2_ref, wo2_ref,
                       w_out_ref, o_ref):
    b = pl.program_id(0)
    t = t_ref[b]
    x = x_ref[0]                                          # (S, C)
    D = w_in_ref.shape[1]

    tokens = jnp.dot(x, w_in_ref[...], preferred_element_type=jnp.float32)
    tokens = tokens + t * time_w_ref[...]                 # (S, D)

    # attn1 — ReferenceOnlyAttnProc, mode='r': KV = concat([self, ref_dict[name]])
    kv_src = jnp.concatenate([tokens, ref_ref[0]], axis=0)            # (S+vn*S, D)
    q = jnp.dot(tokens, wq1_ref[...], preferred_element_type=jnp.float32)
    kvp = jnp.dot(kv_src, wkv1_ref[...], preferred_element_type=jnp.float32)
    a1 = _sdpa(q, kvp[:, :D], kvp[:, D:])
    tokens = tokens + jnp.dot(a1, wo1_ref[...], preferred_element_type=jnp.float32)

    # attn2 — ordinary cross-attention with encoder_hidden_states
    q2 = jnp.dot(tokens, wq2_ref[...], preferred_element_type=jnp.float32)
    kvp2 = jnp.dot(ehs_ref[0], wkv2_ref[...], preferred_element_type=jnp.float32)
    a2 = _sdpa(q2, kvp2[:, :D], kvp2[:, D:])
    tokens = tokens + jnp.dot(a2, wo2_ref[...], preferred_element_type=jnp.float32)

    out = jnp.dot(tokens, w_out_ref[...], preferred_element_type=jnp.float32)
    o_ref[0] = (x + out).astype(o_ref.dtype)


def main_pass(x_tok, ehs, ref_kv, t, params):
    """x_tok: (bs, S, c); ehs: (bs, seq, D); ref_kv: (bs, vn*S, D); t: (bs,)."""
    bs, S, C = x_tok.shape
    D = params["w_in"].shape[1]
    Sr = ref_kv.shape[1]
    seq = ehs.shape[1]

    scale = 1.0 / math.sqrt(D)
    wq1 = params["wq1"] * scale                      # fold attention scale into Wq
    wq2 = params["wq2"] * scale
    wkv1 = jnp.concatenate([params["wk1"], params["wv1"]], axis=1)   # (D, 2D)
    wkv2 = jnp.concatenate([params["wk2"], params["wv2"]], axis=1)   # (D, 2D)
    time_w_2d = params["time_w"].reshape(1, D)

    def full(shape):
        return pl.BlockSpec(shape, lambda b: (0,) * len(shape))

    return pl.pallas_call(
        _main_block_kernel,
        out_shape=jax.ShapeDtypeStruct((bs, S, C), jnp.float32),
        grid=(bs,),
        in_specs=[
            pl.BlockSpec(memory_space=pltpu.MemorySpace.SMEM),       # t (bs,)
            pl.BlockSpec((1, S, C), lambda b: (b, 0, 0)),            # x tokens
            pl.BlockSpec((1, seq, D), lambda b: (b, 0, 0)),          # encoder hidden states
            pl.BlockSpec((1, Sr, D), lambda b: (b, 0, 0)),           # ref_dict entry
            full((C, D)),            # w_in
            full((1, D)),            # time_w
            full((D, D)),            # wq1 (pre-scaled)
            full((D, 2 * D)),        # wkv1
            full((D, D)),            # wo1
            full((D, D)),            # wq2 (pre-scaled)
            full((D, 2 * D)),        # wkv2
            full((D, D)),            # wo2
            full((D, C)),            # w_out
        ],
        out_specs=pl.BlockSpec((1, S, C), lambda b: (b, 0, 0)),
        compiler_params=pltpu.CompilerParams(dimension_semantics=("parallel",)),
    )(t, x_tok, ehs, ref_kv,
      params["w_in"], time_w_2d,
      wq1, wkv1, params["wo1"],
      wq2, wkv2, params["wo2"],
      params["w_out"])


# ----------------------------------------------------------------------------
# RefOnlyNoisedUNet.forward (eval / val_sched path)
# ----------------------------------------------------------------------------

def ref_only_noised_unet_forward(
    params,
    sample,                         # (bs, c, h, w)
    timestep,                       # (bs,) int32
    encoder_hidden_states_prompt,   # (bs, seq, D)
    cond_encoded_clip,              # (bs, seq, D)
    cond_lat,                       # (bs, vn, c, h, w)
    noise,                          # randn_like(cond_lat)
    drop_idx=None,
):
    # ramping_add: prompt + ramping_weights[token] * clip  (XLA fuses under jit)
    encoder_hidden_states = (
        encoder_hidden_states_prompt
        + params["ramping_weights"][None, :, None] * cond_encoded_clip
    )
    if drop_idx is not None:
        encoder_hidden_states = encoder_hidden_states.at[drop_idx].set(
            encoder_hidden_states_prompt[drop_idx]
        )

    assert cond_lat.shape[0] == 2, (
        "batch size must be 2 include negative condition"
    )
    bs, vn, c, h, w = cond_lat.shape

    t = timestep.reshape(-1).astype(jnp.float32)                       # (bs,)
    sigma = params["sigmas"][timestep.reshape(-1)].astype(jnp.float32)  # (bs,)

    # NCHW -> token layout; views folded into the sequence axis.
    cond_tok = jnp.transpose(cond_lat, (0, 1, 3, 4, 2)).reshape(bs, vn * h * w, c)
    noise_tok = jnp.transpose(noise, (0, 1, 3, 4, 2)).reshape(bs, vn * h * w, c)

    # forward_cond ('w' pass): the only live value is the attn1 stash (the
    # in-proj + time-embedded hidden states).  add_noise/scale_model_input is
    # fused into the same kernel; the output is already the ref_dict entry in
    # .view(bs, -1, dim) layout, and the repeated encoder_hidden_states_v /
    # timestep tensors are never materialized (per-batch scalars via SMEM).
    ref_dict = {}
    ref_dict[ATTN1_NAME] = write_pass(
        cond_tok, noise_tok, sigma, t,
        params["w_in"], params["time_w"].reshape(1, -1))
    # TODO(synk): the real UNet's layers after the attn1 stash in the 'w' pass
    # are dead work (forward_cond output is discarded) and are skipped here.
    # TODO(synk): is_cfg_guidance=True slicing and class_labels /
    # down_block_res_samples / mid_block_res_sample ControlNet plumbing of the
    # real UNet are not reproduced by the stand-in UNet.

    # main ('r') pass — one fused Pallas transformer-block kernel.
    x_tok = jnp.transpose(sample, (0, 2, 3, 1)).reshape(bs, h * w, c)
    out_tok = main_pass(x_tok, encoder_hidden_states,
                        ref_dict.pop(ATTN1_NAME), t, params)
    return jnp.transpose(out_tok.reshape(bs, h, w, c), (0, 3, 1, 2))


# ----------------------------------------------------------------------------
# Deterministic parameter init + example run
# ----------------------------------------------------------------------------

def init_params(key, *, c, d, seq, num_train_timesteps=1000):
    ks = jax.random.split(key, 11)
    s = 0.05
    p = {
        "w_in":  s * jax.random.normal(ks[0], (c, d), jnp.float32),
        "wq1":   s * jax.random.normal(ks[1], (d, d), jnp.float32),
        "wk1":   s * jax.random.normal(ks[2], (d, d), jnp.float32),
        "wv1":   s * jax.random.normal(ks[3], (d, d), jnp.float32),
        "wo1":   s * jax.random.normal(ks[4], (d, d), jnp.float32),
        "wq2":   s * jax.random.normal(ks[5], (d, d), jnp.float32),
        "wk2":   s * jax.random.normal(ks[6], (d, d), jnp.float32),
        "wv2":   s * jax.random.normal(ks[7], (d, d), jnp.float32),
        "wo2":   s * jax.random.normal(ks[8], (d, d), jnp.float32),
        "w_out": s * jax.random.normal(ks[9], (d, c), jnp.float32),
        "time_w": s * jax.random.normal(ks[10], (d,), jnp.float32),
        "ramping_weights": jnp.linspace(0.0, 1.0, seq, dtype=jnp.float32),
    }
    # EulerAncestral-style sigma table derived from DDPM betas.
    betas = jnp.linspace(1e-4, 0.02, num_train_timesteps, dtype=jnp.float32)
    alphas_cumprod = jnp.cumprod(1.0 - betas)
    p["sigmas"] = jnp.sqrt((1.0 - alphas_cumprod) / alphas_cumprod)
    return p


if __name__ == "__main__":
    bs, vn, c, h, w = 2, 3, 4, 8, 8
    seq, d = 8, 128                      # lane-dense hidden dim

    key = jax.random.PRNGKey(0)
    k_par, k_smp, k_lat, k_prm, k_clip, k_noise = jax.random.split(key, 6)

    params = init_params(k_par, c=c, d=d, seq=seq)

    sample = jax.random.normal(k_smp, (bs, c, h, w), jnp.float32)
    cond_lat = jax.random.normal(k_lat, (bs, vn, c, h, w), jnp.float32)
    encoder_hidden_states_prompt = jax.random.normal(k_prm, (bs, seq, d), jnp.float32)
    cond_encoded_clip = jax.random.normal(k_clip, (bs, seq, d), jnp.float32)
    timestep = jnp.array([500, 10], dtype=jnp.int32)
    # torch.randn_like(cond_lat) — deterministic here
    noise = jax.random.normal(k_noise, cond_lat.shape, jnp.float32)

    fwd = jax.jit(ref_only_noised_unet_forward, static_argnames=("drop_idx",))
    out = fwd(params, sample, timestep,
              encoder_hidden_states_prompt, cond_encoded_clip,
              cond_lat, noise)
    out = jax.block_until_ready(out)
    assert out.shape == (bs, c, h, w)
    assert bool(jnp.all(jnp.isfinite(out)))
    print("KERNEL_OK")
</pallas_src>

<mosaic_0001>
module attributes {stable_mosaic.version = 11 : i64} {
  func.func @_write_pass_kernel(%arg0: i32, %arg1: memref<2xf32, #tpu.memory_space<smem>>, %arg2: memref<2xf32, #tpu.memory_space<smem>>, %arg3: memref<1x192x4xf32, #tpu.memory_space<vmem>>, %arg4: memref<1x192x4xf32, #tpu.memory_space<vmem>>, %arg5: memref<4x128xf32, #tpu.memory_space<vmem>>, %arg6: memref<1x128xf32, #tpu.memory_space<vmem>>, %arg7: memref<1x192x128xf32, #tpu.memory_space<vmem>>) attributes {dimension_semantics = [#tpu.dimension_semantics<parallel>], iteration_bounds = array<i64: 2>, scalar_prefetch = 0 : i64, scratch_operands = 0 : i64, tpu.core_type = #tpu.core_type<tc>, window_params = [{transform_indices = @transform_0, window_bounds = array<i64: 2>}, {transform_indices = @transform_1, window_bounds = array<i64: 2>}, {transform_indices = @transform_2, window_bounds = array<i64: 1, 192, 4>}, {transform_indices = @transform_3, window_bounds = array<i64: 1, 192, 4>}, {pipeline_mode = #tpu.pipeline_mode<synchronous>, transform_indices = @transform_4, window_bounds = array<i64: 4, 128>}, {pipeline_mode = #tpu.pipeline_mode<synchronous>, transform_indices = @transform_5, window_bounds = array<i64: 1, 128>}, {transform_indices = @transform_6, window_bounds = array<i64: 1, 192, 128>}]} {
    %0 = arith.index_cast %arg0 : i32 to index
    %1 = memref.load %arg1[%0] : memref<2xf32, #tpu.memory_space<smem>>
    %2 = arith.index_cast %arg0 : i32 to index
    %3 = memref.load %arg2[%2] : memref<2xf32, #tpu.memory_space<smem>>
    %c0 = arith.constant 0 : index
    %c0_0 = arith.constant 0 : index
    %c0_1 = arith.constant 0 : index
    %4 = vector.load %arg3[%c0, %c0_0, %c0_1] : memref<1x192x4xf32, #tpu.memory_space<vmem>>, vector<1x192x4xf32>
    %5 = vector.shape_cast %4 : vector<1x192x4xf32> to vector<192x4xf32>
    %c0_2 = arith.constant 0 : index
    %c0_3 = arith.constant 0 : index
    %c0_4 = arith.constant 0 : index
    %6 = vector.load %arg4[%c0_2, %c0_3, %c0_4] : memref<1x192x4xf32, #tpu.memory_space<vmem>>, vector<1x192x4xf32>
    %7 = vector.shape_cast %6 : vector<1x192x4xf32> to vector<192x4xf32>
    %8 = vector.broadcast %1 : f32 to vector<192x4xf32>
    %9 = arith.mulf %8, %7 : vector<192x4xf32>
    %10 = arith.addf %5, %9 : vector<192x4xf32>
    %11 = arith.mulf %1, %1 : f32
    %cst = arith.constant 1.000000e+00 : f32
    %12 = arith.addf %11, %cst : f32
    %13 = math.rsqrt %12 : f32
    %14 = vector.broadcast %13 : f32 to vector<192x4xf32>
    %15 = arith.mulf %10, %14 : vector<192x4xf32>
    %c0_5 = arith.constant 0 : index
    %c0_6 = arith.constant 0 : index
    %16 = vector.load %arg5[%c0_5, %c0_6] : memref<4x128xf32, #tpu.memory_space<vmem>>, vector<4x128xf32>
    %cst_7 = arith.constant dense<0.000000e+00> : vector<192x128xf32>
    %17 = tpu.matmul %15, %16, %cst_7 {dimension_numbers = #tpu.dot_dimension_numbers<[1], [0], [0], [1], [0, 0, 1, 1], [], []>} : vector<192x4xf32>, vector<4x128xf32>, vector<192x128xf32> -> vector<192x128xf32>
    %c0_8 = arith.constant 0 : index
    %c0_9 = arith.constant 0 : index
    %18 = vector.load %arg6[%c0_8, %c0_9] : memref<1x128xf32, #tpu.memory_space<vmem>>, vector<1x128xf32>
    %19 = vector.broadcast %3 : f32 to vector<1x128xf32>
    %20 = arith.mulf %19, %18 : vector<1x128xf32>
    %21 = vector.broadcast %20 : vector<1x128xf32> to vector<192x128xf32>
    %22 = arith.addf %17, %21 : vector<192x128xf32>
    %c0_10 = arith.constant 0 : index
    %c0_11 = arith.constant 0 : index
    %c0_12 = arith.constant 0 : index
    %23 = vector.load %arg7[%c0_10, %c0_11, %c0_12] : memref<1x192x128xf32, #tpu.memory_space<vmem>>, vector<1x192x128xf32>
    %24 = vector.shape_cast %23 : vector<1x192x128xf32> to vector<192x128xf32>
    %25 = vector.shape_cast %22 : vector<192x128xf32> to vector<1x192x128xf32>
    tpu.vector_store %arg7[%c0_10, %c0_11, %c0_12], %25 {strides = array<i32>} : memref<1x192x128xf32, #tpu.memory_space<vmem>>, vector<1x192x128xf32>,
    return
  }
  func.func @transform_0(%arg0: i32) -> i32 {
    %c0_i32 = arith.constant 0 : i32
    %c0_i32_0 = arith.constant 0 : i32
    return %c0_i32 : i32
  }
  func.func @transform_1(%arg0: i32) -> i32 {
    %c0_i32 = arith.constant 0 : i32
    %c0_i32_0 = arith.constant 0 : i32
    return %c0_i32 : i32
  }
  func.func @transform_2(%arg0: i32) -> (i32, i32, i32) {
    %c0_i32 = arith.constant 0 : i32
    %c0_i32_0 = arith.constant 0 : i32
    %c0_i32_1 = arith.constant 0 : i32
    return %arg0, %c0_i32, %c0_i32_0 : i32, i32, i32
  }
  func.func @transform_3(%arg0: i32) -> (i32, i32, i32) {
    %c0_i32 = arith.constant 0 : i32
    %c0_i32_0 = arith.constant 0 : i32
    %c0_i32_1 = arith.constant 0 : i32
    return %arg0, %c0_i32, %c0_i32_0 : i32, i32, i32
  }
  func.func @transform_4(%arg0: i32) -> (i32, i32) {
    %c0_i32 = arith.constant 0 : i32
    %c0_i32_0 = arith.constant 0 : i32
    %c0_i32_1 = arith.constant 0 : i32
    return %c0_i32, %c0_i32_0 : i32, i32
  }
  func.func @transform_5(%arg0: i32) -> (i32, i32) {
    %c0_i32 = arith.constant 0 : i32
    %c0_i32_0 = arith.constant 0 : i32
    %c0_i32_1 = arith.constant 0 : i32
    return %c0_i32, %c0_i32_0 : i32, i32
  }
  func.func @transform_6(%arg0: i32) -> (i32, i32, i32) {
    %c0_i32 = arith.constant 0 : i32
    %c0_i32_0 = arith.constant 0 : i32
    %c0_i32_1 = arith.constant 0 : i32
    return %arg0, %c0_i32, %c0_i32_0 : i32, i32, i32
  }
}

module attributes {stable_mosaic.version = 11 : i64} {
  func.func @_main_block_kernel(%arg0: i32, %arg1: memref<2xf32, #tpu.memory_space<smem>>, %arg2: memref<1x64x4xf32, #tpu.memory_space<vmem>>, %arg3: memref<1x8x128xf32, #tpu.memory_space<vmem>>, %arg4: memref<1x192x128xf32, #tpu.memory_space<vmem>>, %arg5: memref<4x128xf32, #tpu.memory_space<vmem>>, %arg6: memref<1x128xf32, #tpu.memory_space<vmem>>, %arg7: memref<128x128xf32, #tpu.memory_space<vmem>>, %arg8: memref<128x256xf32, #tpu.memory_space<vmem>>, %arg9: memref<128x128xf32, #tpu.memory_space<vmem>>, %arg10: memref<128x128xf32, #tpu.memory_space<vmem>>, %arg11: memref<128x256xf32, #tpu.memory_space<vmem>>, %arg12: memref<128x128xf32, #tpu.memory_space<vmem>>, %arg13: memref<128x4xf32, #tpu.memory_space<vmem>>, %arg14: memref<1x64x4xf32, #tpu.memory_space<vmem>>) attributes {dimension_semantics = [#tpu.dimension_semantics<parallel>], iteration_bounds = array<i64: 2>, scalar_prefetch = 0 : i64, scratch_operands = 0 : i64, tpu.core_type = #tpu.core_type<tc>, window_params = [{transform_indices = @transform_0, window_bounds = array<i64: 2>}, {transform_indices = @transform_1, window_bounds = array<i64: 1, 64, 4>}, {transform_indices = @transform_2, window_bounds = array<i64: 1, 8, 128>}, {transform_indices = @transform_3, window_bounds = array<i64: 1, 192, 128>}, {pipeline_mode = #tpu.pipeline_mode<synchronous>, transform_indices = @transform_4, window_bounds = array<i64: 4, 128>}, {pipeline_mode = #tpu.pipeline_mode<synchronous>, transform_indices = @transform_5, window_bounds = array<i64: 1, 128>}, {pipeline_mode = #tpu.pipeline_mode<synchronous>, transform_indices = @transform_6, window_bounds = array<i64: 128, 128>}, {pipeline_mode = #tpu.pipeline_mode<synchronous>, transform_indices = @transform_7, window_bounds = array<i64: 128, 256>}, {pipeline_mode = #tpu.pipeline_mode<synchronous>, transform_indices = @transform_8, window_bounds = array<i64: 128, 128>}, {pipeline_mode = #tpu.pipeline_mode<synchronous>, transform_indices = @transform_9, window_bounds = array<i64: 128, 128>}, {pipeline_mode = #tpu.pipeline_mode<synchronous>, transform_indices = @transform_10, window_bounds = array<i64: 128, 256>}, {pipeline_mode = #tpu.pipeline_mode<synchronous>, transform_indices = @transform_11, window_bounds = array<i64: 128, 128>}, {pipeline_mode = #tpu.pipeline_mode<synchronous>, transform_indices = @transform_12, window_bounds = array<i64: 128, 4>}, {transform_indices = @transform_13, window_bounds = array<i64: 1, 64, 4>}]} {
    %0 = arith.index_cast %arg0 : i32 to index
    %1 = memref.load %arg1[%0] : memref<2xf32, #tpu.memory_space<smem>>
    %c0 = arith.constant 0 : index
    %c0_0 = arith.constant 0 : index
    %c0_1 = arith.constant 0 : index
    %2 = vector.load %arg2[%c0, %c0_0, %c0_1] : memref<1x64x4xf32, #tpu.memory_space<vmem>>, vector<1x64x4xf32>
    %3 = vector.shape_cast %2 : vector<1x64x4xf32> to vector<64x4xf32>
    %c0_2 = arith.constant 0 : index
    %c0_3 = arith.constant 0 : index
    %4 = vector.load %arg5[%c0_2, %c0_3] : memref<4x128xf32, #tpu.memory_space<vmem>>, vector<4x128xf32>
    %cst = arith.constant dense<0.000000e+00> : vector<64x128xf32>
    %5 = tpu.matmul %3, %4, %cst {dimension_numbers = #tpu.dot_dimension_numbers<[1], [0], [0], [1], [0, 0, 1, 1], [], []>} : vector<64x4xf32>, vector<4x128xf32>, vector<64x128xf32> -> vector<64x128xf32>
    %c0_4 = arith.constant 0 : index
    %c0_5 = arith.constant 0 : index
    %6 = vector.load %arg6[%c0_4, %c0_5] : memref<1x128xf32, #tpu.memory_space<vmem>>, vector<1x128xf32>
    %7 = vector.broadcast %1 : f32 to vector<1x128xf32>
    %8 = arith.mulf %7, %6 : vector<1x128xf32>
    %9 = vector.broadcast %8 : vector<1x128xf32> to vector<64x128xf32>
    %10 = arith.addf %5, %9 : vector<64x128xf32>
    %c0_6 = arith.constant 0 : index
    %c0_7 = arith.constant 0 : index
    %c0_8 = arith.constant 0 : index
    %11 = vector.load %arg4[%c0_6, %c0_7, %c0_8] : memref<1x192x128xf32, #tpu.memory_space<vmem>>, vector<1x192x128xf32>
    %12 = vector.shape_cast %11 : vector<1x192x128xf32> to vector<192x128xf32>
    %13 = tpu.concatenate %10, %12 in 0 : vector<64x128xf32>, vector<192x128xf32> -> vector<256x128xf32>
    %c0_9 = arith.constant 0 : index
    %c0_10 = arith.constant 0 : index
    %14 = vector.load %arg7[%c0_9, %c0_10] : memref<128x128xf32, #tpu.memory_space<vmem>>, vector<128x128xf32>
    %cst_11 = arith.constant dense<0.000000e+00> : vector<64x128xf32>
    %15 = tpu.matmul %10, %14, %cst_11 {dimension_numbers = #tpu.dot_dimension_numbers<[1], [0], [0], [1], [0, 0, 1, 1], [], []>} : vector<64x128xf32>, vector<128x128xf32>, vector<64x128xf32> -> vector<64x128xf32>
    %c0_12 = arith.constant 0 : index
    %c0_13 = arith.constant 0 : index
    %16 = vector.load %arg8[%c0_12, %c0_13] : memref<128x256xf32, #tpu.memory_space<vmem>>, vector<128x256xf32>
    %cst_14 = arith.constant dense<0.000000e+00> : vector<256x256xf32>
    %17 = tpu.matmul %13, %16, %cst_14 {dimension_numbers = #tpu.dot_dimension_numbers<[1], [0], [0], [1], [0, 0, 1, 1], [], []>} : vector<256x128xf32>, vector<128x256xf32>, vector<256x256xf32> -> vector<256x256xf32>
    %18 = vector.extract_strided_slice %17 {offsets = [0, 0], sizes = [256, 128], strides = [1, 1]} : vector<256x256xf32> to vector<256x128xf32>
    %19 = vector.extract_strided_slice %17 {offsets = [0, 128], sizes = [256, 128], strides = [1, 1]} : vector<256x256xf32> to vector<256x128xf32>
    %cst_15 = arith.constant dense<0.000000e+00> : vector<64x256xf32>
    %20 = tpu.matmul %15, %18, %cst_15 {dimension_numbers = #tpu.dot_dimension_numbers<[1], [1], [0], [0], [0, 0, 1, 0], [], []>} : vector<64x128xf32>, vector<256x128xf32>, vector<64x256xf32> -> vector<64x256xf32>
    %cst_16 = arith.constant dense<0xFF800000> : vector<64xf32>
    %21 = vector.multi_reduction <maximumf>, %20, %cst_16 [1] : vector<64x256xf32> to vector<64xf32>
    %22 = vector.shape_cast %21 : vector<64xf32> to vector<64x1xf32>
    %23 = vector.broadcast %22 : vector<64x1xf32> to vector<64x256xf32>
    %24 = arith.subf %20, %23 : vector<64x256xf32>
    %25 = math.exp %24 : vector<64x256xf32>
    %cst_17 = arith.constant dense<0.000000e+00> : vector<64xf32>
    %26 = vector.multi_reduction <add>, %25, %cst_17 [1] : vector<64x256xf32> to vector<64xf32>
    %27 = vector.shape_cast %26 : vector<64xf32> to vector<64x1xf32>
    %cst_18 = arith.constant dense<0.000000e+00> : vector<64x128xf32>
    %28 = tpu.matmul %25, %19, %cst_18 {dimension_numbers = #tpu.dot_dimension_numbers<[1], [0], [0], [1], [0, 0, 1, 1], [], []>} : vector<64x256xf32>, vector<256x128xf32>, vector<64x128xf32> -> vector<64x128xf32>
    %29 = tpu.reciprocal %27 {approx = true} : vector<64x1xf32> -> vector<64x1xf32>
    %30 = vector.broadcast %29 : vector<64x1xf32> to vector<64x128xf32>
    %31 = arith.mulf %28, %30 : vector<64x128xf32>
    %c0_19 = arith.constant 0 : index
    %c0_20 = arith.constant 0 : index
    %32 = vector.load %arg9[%c0_19, %c0_20] : memref<128x128xf32, #tpu.memory_space<vmem>>, vector<128x128xf32>
    %cst_21 = arith.constant dense<0.000000e+00> : vector<64x128xf32>
    %33 = tpu.matmul %31, %32, %cst_21 {dimension_numbers = #tpu.dot_dimension_numbers<[1], [0], [0], [1], [0, 0, 1, 1], [], []>} : vector<64x128xf32>, vector<128x128xf32>, vector<64x128xf32> -> vector<64x128xf32>
    %34 = arith.addf %10, %33 : vector<64x128xf32>
    %c0_22 = arith.constant 0 : index
    %c0_23 = arith.constant 0 : index
    %35 = vector.load %arg10[%c0_22, %c0_23] : memref<128x128xf32, #tpu.memory_space<vmem>>, vector<128x128xf32>
    %cst_24 = arith.constant dense<0.000000e+00> : vector<64x128xf32>
    %36 = tpu.matmul %34, %35, %cst_24 {dimension_numbers = #tpu.dot_dimension_numbers<[1], [0], [0], [1], [0, 0, 1, 1], [], []>} : vector<64x128xf32>, vector<128x128xf32>, vector<64x128xf32> -> vector<64x128xf32>
    %c0_25 = arith.constant 0 : index
    %c0_26 = arith.constant 0 : index
    %c0_27 = arith.constant 0 : index
    %37 = vector.load %arg3[%c0_25, %c0_26, %c0_27] : memref<1x8x128xf32, #tpu.memory_space<vmem>>, vector<1x8x128xf32>
    %38 = vector.shape_cast %37 : vector<1x8x128xf32> to vector<8x128xf32>
    %c0_28 = arith.constant 0 : index
    %c0_29 = arith.constant 0 : index
    %39 = vector.load %arg11[%c0_28, %c0_29] : memref<128x256xf32, #tpu.memory_space<vmem>>, vector<128x256xf32>
    %cst_30 = arith.constant dense<0.000000e+00> : vector<8x256xf32>
    %40 = tpu.matmul %38, %39, %cst_30 {dimension_numbers = #tpu.dot_dimension_numbers<[1], [0], [0], [1], [0, 0, 1, 1], [], []>} : vector<8x128xf32>, vector<128x256xf32>, vector<8x256xf32> -> vector<8x256xf32>
    %41 = vector.extract_strided_slice %40 {offsets = [0, 0], sizes = [8, 128], strides = [1, 1]} : vector<8x256xf32> to vector<8x128xf32>
    %42 = vector.extract_strided_slice %40 {offsets = [0, 128], sizes = [8, 128], strides = [1, 1]} : vector<8x256xf32> to vector<8x128xf32>
    %cst_31 = arith.constant dense<0.000000e+00> : vector<64x8xf32>
    %43 = tpu.matmul %36, %41, %cst_31 {dimension_numbers = #tpu.dot_dimension_numbers<[1], [1], [0], [0], [0, 0, 1, 0], [], []>} : vector<64x128xf32>, vector<8x128xf32>, vector<64x8xf32> -> vector<64x8xf32>
    %cst_32 = arith.constant dense<0xFF800000> : vector<64xf32>
    %44 = vector.multi_reduction <maximumf>, %43, %cst_32 [1] : vector<64x8xf32> to vector<64xf32>
    %45 = vector.shape_cast %44 : vector<64xf32> to vector<64x1xf32>
    %46 = vector.broadcast %45 : vector<64x1xf32> to vector<64x8xf32>
    %47 = arith.subf %43, %46 : vector<64x8xf32>
    %48 = math.exp %47 : vector<64x8xf32>
    %cst_33 = arith.constant dense<0.000000e+00> : vector<64xf32>
    %49 = vector.multi_reduction <add>, %48, %cst_33 [1] : vector<64x8xf32> to vector<64xf32>
    %50 = vector.shape_cast %49 : vector<64xf32> to vector<64x1xf32>
    %cst_34 = arith.constant dense<0.000000e+00> : vector<64x128xf32>
    %51 = tpu.matmul %48, %42, %cst_34 {dimension_numbers = #tpu.dot_dimension_numbers<[1], [0], [0], [1], [0, 0, 1, 1], [], []>} : vector<64x8xf32>, vector<8x128xf32>, vector<64x128xf32> -> vector<64x128xf32>
    %52 = tpu.reciprocal %50 {approx = true} : vector<64x1xf32> -> vector<64x1xf32>
    %53 = vector.broadcast %52 : vector<64x1xf32> to vector<64x128xf32>
    %54 = arith.mulf %51, %53 : vector<64x128xf32>
    %c0_35 = arith.constant 0 : index
    %c0_36 = arith.constant 0 : index
    %55 = vector.load %arg12[%c0_35, %c0_36] : memref<128x128xf32, #tpu.memory_space<vmem>>, vector<128x128xf32>
    %cst_37 = arith.constant dense<0.000000e+00> : vector<64x128xf32>
    %56 = tpu.matmul %54, %55, %cst_37 {dimension_numbers = #tpu.dot_dimension_numbers<[1], [0], [0], [1], [0, 0, 1, 1], [], []>} : vector<64x128xf32>, vector<128x128xf32>, vector<64x128xf32> -> vector<64x128xf32>
    %57 = arith.addf %34, %56 : vector<64x128xf32>
    %c0_38 = arith.constant 0 : index
    %c0_39 = arith.constant 0 : index
    %58 = vector.load %arg13[%c0_38, %c0_39] : memref<128x4xf32, #tpu.memory_space<vmem>>, vector<128x4xf32>
    %cst_40 = arith.constant dense<0.000000e+00> : vector<64x4xf32>
    %59 = tpu.matmul %57, %58, %cst_40 {dimension_numbers = #tpu.dot_dimension_numbers<[1], [0], [0], [1], [0, 0, 1, 1], [], []>} : vector<64x128xf32>, vector<128x4xf32>, vector<64x4xf32> -> vector<64x4xf32>
    %60 = arith.addf %3, %59 : vector<64x4xf32>
    %c0_41 = arith.constant 0 : index
    %c0_42 = arith.constant 0 : index
    %c0_43 = arith.constant 0 : index
    %61 = vector.load %arg14[%c0_41, %c0_42, %c0_43] : memref<1x64x4xf32, #tpu.memory_space<vmem>>, vector<1x64x4xf32>
    %62 = vector.shape_cast %61 : vector<1x64x4xf32> to vector<64x4xf32>
    %63 = vector.shape_cast %60 : vector<64x4xf32> to vector<1x64x4xf32>
    tpu.vector_store %arg14[%c0_41, %c0_42, %c0_43], %63 {strides = array<i32>} : memref<1x64x4xf32, #tpu.memory_space<vmem>>, vector<1x64x4xf32>,
    return
  }
  func.func @transform_0(%arg0: i32) -> i32 {
    %c0_i32 = arith.constant 0 : i32
    %c0_i32_0 = arith.constant 0 : i32
    return %c0_i32 : i32
  }
  func.func @transform_1(%arg0: i32) -> (i32, i32, i32) {
    %c0_i32 = arith.constant 0 : i32
    %c0_i32_0 = arith.constant 0 : i32
    %c0_i32_1 = arith.constant 0 : i32
    return %arg0, %c0_i32, %c0_i32_0 : i32, i32, i32
  }
  func.func @transform_2(%arg0: i32) -> (i32, i32, i32) {
    %c0_i32 = arith.constant 0 : i32
    %c0_i32_0 = arith.constant 0 : i32
    %c0_i32_1 = arith.constant 0 : i32
    return %arg0, %c0_i32, %c0_i32_0 : i32, i32, i32
  }
  func.func @transform_3(%arg0: i32) -> (i32, i32, i32) {
    %c0_i32 = arith.constant 0 : i32
    %c0_i32_0 = arith.constant 0 : i32
    %c0_i32_1 = arith.constant 0 : i32
    return %arg0, %c0_i32, %c0_i32_0 : i32, i32, i32
  }
  func.func @transform_4(%arg0: i32) -> (i32, i32) {
    %c0_i32 = arith.constant 0 : i32
    %c0_i32_0 = arith.constant 0 : i32
    %c0_i32_1 = arith.constant 0 : i32
    return %c0_i32, %c0_i32_0 : i32, i32
  }
  func.func @transform_5(%arg0: i32) -> (i32, i32) {
    %c0_i32 = arith.constant 0 : i32
    %c0_i32_0 = arith.constant 0 : i32
    %c0_i32_1 = arith.constant 0 : i32
    return %c0_i32, %c0_i32_0 : i32, i32
  }
  func.func @transform_6(%arg0: i32) -> (i32, i32) {
    %c0_i32 = arith.constant 0 : i32
    %c0_i32_0 = arith.constant 0 : i32
    %c0_i32_1 = arith.constant 0 : i32
    return %c0_i32, %c0_i32_0 : i32, i32
  }
  func.func @transform_7(%arg0: i32) -> (i32, i32) {
    %c0_i32 = arith.constant 0 : i32
    %c0_i32_0 = arith.constant 0 : i32
    %c0_i32_1 = arith.constant 0 : i32
    return %c0_i32, %c0_i32_0 : i32, i32
  }
  func.func @transform_8(%arg0: i32) -> (i32, i32) {
    %c0_i32 = arith.constant 0 : i32
    %c0_i32_0 = arith.constant 0 : i32
    %c0_i32_1 = arith.constant 0 : i32
    return %c0_i32, %c0_i32_0 : i32, i32
  }
  func.func @transform_9(%arg0: i32) -> (i32, i32) {
    %c0_i32 = arith.constant 0 : i32
    %c0_i32_0 = arith.constant 0 : i32
    %c0_i32_1 = arith.constant 0 : i32
    return %c0_i32, %c0_i32_0 : i32, i32
  }
  func.func @transform_10(%arg0: i32) -> (i32, i32) {
    %c0_i32 = arith.constant 0 : i32
    %c0_i32_0 = arith.constant 0 : i32
    %c0_i32_1 = arith.constant 0 : i32
    return %c0_i32, %c0_i32_0 : i32, i32
  }
  func.func @transform_11(%arg0: i32) -> (i32, i32) {
    %c0_i32 = arith.constant 0 : i32
    %c0_i32_0 = arith.constant 0 : i32
    %c0_i32_1 = arith.constant 0 : i32
    return %c0_i32, %c0_i32_0 : i32, i32
  }
  func.func @transform_12(%arg0: i32) -> (i32, i32) {
    %c0_i32 = arith.constant 0 : i32
    %c0_i32_0 = arith.constant 0 : i32
    %c0_i32_1 = arith.constant 0 : i32
    return %c0_i32, %c0_i32_0 : i32, i32
  }
  func.func @transform_13(%arg0: i32) -> (i32, i32, i32) {
    %c0_i32 = arith.constant 0 : i32
    %c0_i32_0 = arith.constant 0 : i32
    %c0_i32_1 = arith.constant 0 : i32
    return %arg0, %c0_i32, %c0_i32_0 : i32, i32, i32
  }
}

</mosaic_0001>

<llo_original>
// kernel: ref_only_noised_unet_forward.2
$region0: #{ref_only_noised_unet_forward.2}
  #allocation0 [shape = 'u32[]', space=smem, size = 0x4, offset = 0x4, fixed_abs, tag = 'smem constant byte address 0x4 - core index']
  #allocation1 [shape = 'u32[144,128]{1,0:T(1,128)}', space=vmem, size = 0x12000, scoped, tag = 'internal scratch']
  %s0 = inlined_call_operand.vmem [shape: f32[2], index: 0, kind: input, shape index: {}]
  %s1 = inlined_call_operand.vmem [shape: f32[2], index: 1, kind: input, shape index: {}]
  %s2 = inlined_call_operand.vmem [shape: f32[2,192,4], index: 2, kind: input, shape index: {}]
  %s3 = inlined_call_operand.vmem [shape: f32[2,192,4], index: 3, kind: input, shape index: {}]
  %s4 = inlined_call_operand.vmem [shape: f32[4,128], index: 4, kind: input, shape index: {}]
  %s5 = inlined_call_operand.vmem [shape: f32[1,128], index: 5, kind: input, shape index: {}]
  %s6 = inlined_call_operand.vmem [shape: f32[2,192,128], index: 6, kind: output, shape index: {}]
  %s7 = sld [smem:[#allocation0]]
  $region65: #{ref_only_noised_unet_forward.2} parent=0
    _
  %s9 = ssub.s32 1, %s7
  %s10 = scalar_select 0, %s9, %s7
  $region1: #{ref_only_noised_unet_forward.2} parent=0
    #allocation2 [shape = 'u8[512]{0}', space=smem, size = 0x200, scoped, tag = 'input window, operand 0, single buffered']
    #allocation3 [shape = 's32[2]{0}', space=sflag, size = 0x8, scoped, tag = 'scoped memory for ref_only_noised_unet_forward.2']
    #allocation4 [shape = 'u8[512]{0}', space=smem, size = 0x200, scoped, tag = 'input window, operand 1, single buffered']
    #allocation5 [shape = 's32[1]{0}', space=sflag, size = 0x4, scoped, tag = 'scoped memory for ref_only_noised_unet_forward.2']
    %11 = vsyncpa [#allocation3], 0
    %12 = vsyncpa [#allocation5], 0
    loop: start=0, step=1, limit=4
    $region2: #{ref_only_noised_unet_forward.2} parent=1 // loop_pre_header
      _
    $region3: #{ref_only_noised_unet_forward.2} parent=1 // loop_header
      %s14 = sphi 0, %s18
      %p15 = scmp.ge.s32.totalorder %s14, 4
      %s22 = sphi 0, %s22
      %s24 = sphi 0, %s22
      %s25 = sphi 0, %s24
      %s39 = sphi 0, %s25
      %s43 = sphi 0, %s43
      %s45 = sphi 0, %s43
      %s46 = sphi 0, %s45
      %s60 = sphi 0, %s46
      %s66 = sphi 0, %s68
      %s69 = sphi 0, %s66
      %s70 = sphi 0, %s69
      %s86 = sphi 0, %s70
      %s92 = sphi 0, %s94
      %s95 = sphi 0, %s92
      %s96 = sphi 0, %s95
      %s112 = sphi 0, %s96
      %s116 = sphi 0, %s116
      %s118 = sphi 0, %s116
      %s119 = sphi 0, %s118
      %s133 = sphi 0, %s119
      %s137 = sphi 0, %s137
      %s139 = sphi 0, %s137
      %s140 = sphi 0, %s139
      %s154 = sphi 0, %s140
      %s160 = sphi 0, %s162
      %s163 = sphi 0, %s160
      %s164 = sphi 0, %s163
      %s180 = sphi 0, %s164
    $region4: #{ref_only_noised_unet_forward.2} parent=1 // loop_header_branch
      %17 = sbr.rel (%p15) target = $region8
    $region5: #{ref_only_noised_unet_forward.2} parent=1 // loop_body
      %s19 = ssub.s32 %s14, 1
      %s20 = ssub.s32 %s14, 2
      %s21 = sadd.s32 %s14, 1
      %s23 = sadd.s32 %s22, 1
      %p26 = scmp.eq.s32.totalorder %s14, 1
      %p27 = scmp.ne.s32.totalorder %s22, %s24
      %p28 = scmp.eq.s32.totalorder %s14, 0
      %p29 = por %p27, %p28
      %p30 = scmp.ne.s32.totalorder %s22, %s24
      %p31 = scmp.eq.s32.totalorder %s19, 1
      %p32 = por %p30, %p31
      %p33 = scmp.ne.s32.totalorder %s24, %s25
      %p34 = scmp.eq.s32.totalorder %s19, 0
      %p35 = por %p33, %p34
      %p36 = scmp.ne.s32.totalorder %s24, %s25
      %p37 = scmp.eq.s32.totalorder %s20, 1
      %p38 = por %p36, %p37
      %p40 = scmp.ne.s32.totalorder %s25, %s39
      %p41 = scmp.eq.s32.totalorder %s20, 0
      %p42 = por %p40, %p41
      %s44 = sadd.s32 %s43, 1
      %p47 = scmp.eq.s32.totalorder %s14, 1
      %p48 = scmp.ne.s32.totalorder %s43, %s45
      %p49 = scmp.eq.s32.totalorder %s14, 0
      %p50 = por %p48, %p49
      %p51 = scmp.ne.s32.totalorder %s43, %s45
      %p52 = scmp.eq.s32.totalorder %s19, 1
      %p53 = por %p51, %p52
      %p54 = scmp.ne.s32.totalorder %s45, %s46
      %p55 = scmp.eq.s32.totalorder %s19, 0
      %p56 = por %p54, %p55
      %p57 = scmp.ne.s32.totalorder %s45, %s46
      %p58 = scmp.eq.s32.totalorder %s20, 1
      %p59 = por %p57, %p58
      %p61 = scmp.ne.s32.totalorder %s46, %s60
      %p62 = scmp.eq.s32.totalorder %s20, 0
      %p63 = por %p61, %p62
      %s64 = ssub.s32 %s14, %s21
      %p65 = scmp.eq.s32.totalorder %s64, 0
      %s67 = sadd.s32 %s66, 1
      %s68 = scalar_select %p65, %s66, %s67
      %p71 = pneg %p65
      %p72 = scmp.eq.s32.totalorder %s14, 1
      %p73 = por %p71, %p72
      %p74 = scmp.ne.s32.totalorder %s66, %s69
      %p75 = scmp.eq.s32.totalorder %s14, 0
      %p76 = por %p74, %p75
      %p77 = scmp.ne.s32.totalorder %s66, %s69
      %p78 = scmp.eq.s32.totalorder %s19, 1
      %p79 = por %p77, %p78
      %p80 = scmp.ne.s32.totalorder %s69, %s70
      %p81 = scmp.eq.s32.totalorder %s19, 0
      %p82 = por %p80, %p81
      %p83 = scmp.ne.s32.totalorder %s69, %s70
      %p84 = scmp.eq.s32.totalorder %s20, 1
      %p85 = por %p83, %p84
      %p87 = scmp.ne.s32.totalorder %s70, %s86
      %p88 = scmp.eq.s32.totalorder %s20, 0
      %p89 = por %p87, %p88
      %s90 = ssub.s32 %s14, %s21
      %p91 = scmp.eq.s32.totalorder %s90, 0
      %s93 = sadd.s32 %s92, 1
      %s94 = scalar_select %p91, %s92, %s93
      %p97 = pneg %p91
      %p98 = scmp.eq.s32.totalorder %s14, 1
      %p99 = por %p97, %p98
      %p100 = scmp.ne.s32.totalorder %s92, %s95
      %p101 = scmp.eq.s32.totalorder %s14, 0
      %p102 = por %p100, %p101
      %p103 = scmp.ne.s32.totalorder %s92, %s95
      %p104 = scmp.eq.s32.totalorder %s19, 1
      %p105 = por %p103, %p104
      %p106 = scmp.ne.s32.totalorder %s95, %s96
      %p107 = scmp.eq.s32.totalorder %s19, 0
      %p108 = por %p106, %p107
      %p109 = scmp.ne.s32.totalorder %s95, %s96
      %p110 = scmp.eq.s32.totalorder %s20, 1
      %p111 = por %p109, %p110
      %p113 = scmp.ne.s32.totalorder %s96, %s112
      %p114 = scmp.eq.s32.totalorder %s20, 0
      %p115 = por %p113, %p114
      %s117 = sadd.s32 %s116, 1
      %p120 = scmp.eq.s32.totalorder %s14, 1
      %p121 = scmp.ne.s32.totalorder %s116, %s118
      %p122 = scmp.eq.s32.totalorder %s14, 0
      %p123 = por %p121, %p122
      %p124 = scmp.ne.s32.totalorder %s116, %s118
      %p125 = scmp.eq.s32.totalorder %s19, 1
      %p126 = por %p124, %p125
      %p127 = scmp.ne.s32.totalorder %s118, %s119
      %p128 = scmp.eq.s32.totalorder %s19, 0
      %p129 = por %p127, %p128
      %p130 = scmp.ne.s32.totalorder %s118, %s119
      %p131 = scmp.eq.s32.totalorder %s20, 1
      %p132 = por %p130, %p131
      %p134 = scmp.ne.s32.totalorder %s119, %s133
      %p135 = scmp.eq.s32.totalorder %s20, 0
      %p136 = por %p134, %p135
      %s138 = sadd.s32 %s137, 1
      %p141 = scmp.eq.s32.totalorder %s14, 1
      %p142 = scmp.ne.s32.totalorder %s137, %s139
      %p143 = scmp.eq.s32.totalorder %s14, 0
      %p144 = por %p142, %p143
      %p145 = scmp.ne.s32.totalorder %s137, %s139
      %p146 = scmp.eq.s32.totalorder %s19, 1
      %p147 = por %p145, %p146
      %p148 = scmp.ne.s32.totalorder %s139, %s140
      %p149 = scmp.eq.s32.totalorder %s19, 0
      %p150 = por %p148, %p149
      %p151 = scmp.ne.s32.totalorder %s139, %s140
      %p152 = scmp.eq.s32.totalorder %s20, 1
      %p153 = por %p151, %p152
      %p155 = scmp.ne.s32.totalorder %s140, %s154
      %p156 = scmp.eq.s32.totalorder %s20, 0
      %p157 = por %p155, %p156
      %s158 = ssub.s32 %s14, %s21
      %p159 = scmp.eq.s32.totalorder %s158, 0
      %s161 = sadd.s32 %s160, 1
      %s162 = scalar_select %p159, %s160, %s161
      %p165 = pneg %p159
      %p166 = scmp.eq.s32.totalorder %s14, 1
      %p167 = por %p165, %p166
      %p168 = scmp.ne.s32.totalorder %s160, %s163
      %p169 = scmp.eq.s32.totalorder %s14, 0
      %p170 = por %p168, %p169
      %p171 = scmp.ne.s32.totalorder %s160, %s163
      %p172 = scmp.eq.s32.totalorder %s19, 1
      %p173 = por %p171, %p172
      %p174 = scmp.ne.s32.totalorder %s163, %s164
      %p175 = scmp.eq.s32.totalorder %s19, 0
      %p176 = por %p174, %p175
      %p177 = scmp.ne.s32.totalorder %s163, %s164
      %p178 = scmp.eq.s32.totalorder %s20, 1
      %p179 = por %p177, %p178
      %p181 = scmp.ne.s32.totalorder %s164, %s180
      %p182 = scmp.eq.s32.totalorder %s20, 0
      %p183 = por %p181, %p182
      %p184 = scmp.le.s32.totalorder 1, %s14
      %p185 = scmp.lt.s32.totalorder %s14, 3
      %p186 = pnand %p184, %p185
      %p187 = pneg %p186
      // Predicated region
      $region9: #{ref_only_noised_unet_forward.2} parent=5 // pred_check
        _
      $region10: #{ref_only_noised_unet_forward.2} parent=5 // pred_check_branch
        %189 = sbr.rel (%p186) target = $region12
      $region11: #{ref_only_noised_unet_forward.2} parent=5 // pred_region
        %s190 = ssub.s32 %s14, 1
        // Predicated region
        $region13: #{ref_only_noised_unet_forward.2} parent=11 // pred_check
          %p191 = pneg %p35
        $region14: #{ref_only_noised_unet_forward.2} parent=11 // pred_check_branch
          %193 = sbr.rel (%p191) target = $region16
        $region15: #{ref_only_noised_unet_forward.2} parent=11 // pred_region
          %s195 = ssub.s32 16, 16
          %196 = vsyncadd [#allocation3], %s195
          %s198 = sshll.u32 %s0, 4
          %s199 = int_to_ptr.vmem [resolvable:$true] %s198
          %201 = dma.vmem_to_smem %s199, 16, [#allocation2], [#allocation3]
        $region16: #{ref_only_noised_unet_forward.2} parent=11 // pred_fallthru
          _
        // Predicated region
        $region17: #{ref_only_noised_unet_forward.2} parent=11 // pred_check
          %p202 = pneg %p56
        $region18: #{ref_only_noised_unet_forward.2} parent=11 // pred_check_branch
          %204 = sbr.rel (%p202) target = $region20
        $region19: #{ref_only_noised_unet_forward.2} parent=11 // pred_region
          %s206 = ssub.s32 16, 16
          %207 = vsyncadd [#allocation5], %s206
          %s209 = sshll.u32 %s1, 4
          %s210 = int_to_ptr.vmem [resolvable:$true] %s209
          %212 = dma.vmem_to_smem %s210, 16, [#allocation4], [#allocation5]
        $region20: #{ref_only_noised_unet_forward.2} parent=11 // pred_fallthru
          _
        // Predicated region
        $region21: #{ref_only_noised_unet_forward.2} parent=11 // pred_check
          %p213 = pneg %p129
        $region22: #{ref_only_noised_unet_forward.2} parent=11 // pred_check_branch
          %215 = sbr.rel (%p213) target = $region24
        $region23: #{ref_only_noised_unet_forward.2} parent=11 // pred_region
          _
        $region24: #{ref_only_noised_unet_forward.2} parent=11 // pred_fallthru
          _
        // Predicated region
        $region25: #{ref_only_noised_unet_forward.2} parent=11 // pred_check
          %p216 = pneg %p150
        $region26: #{ref_only_noised_unet_forward.2} parent=11 // pred_check_branch
          %218 = sbr.rel (%p216) target = $region28
        $region27: #{ref_only_noised_unet_forward.2} parent=11 // pred_region
          _
        $region28: #{ref_only_noised_unet_forward.2} parent=11 // pred_fallthru
          _
      $region12: #{ref_only_noised_unet_forward.2} parent=5 // pred_fallthru
        _
      %p219 = scmp.lt.s32.totalorder %s14, 2
      // Predicated region
      $region29: #{ref_only_noised_unet_forward.2} parent=5 // pred_check
        %p220 = pneg %p219
      $region30: #{ref_only_noised_unet_forward.2} parent=5 // pred_check_branch
        %222 = sbr.rel (%p220) target = $region32
      $region31: #{ref_only_noised_unet_forward.2} parent=5 // pred_region
        // Predicated region
        $region33: #{ref_only_noised_unet_forward.2} parent=31 // pred_check
          %p223 = pneg %p76
        $region34: #{ref_only_noised_unet_forward.2} parent=31 // pred_check_branch
          %225 = sbr.rel (%p223) target = $region36
        $region35: #{ref_only_noised_unet_forward.2} parent=31 // pred_region
          %p226 = scmp.lt.s32.totalorder %s14, 1
          %s227 = scalar_select %p226, %s14, 1
          %s228 = smul.addr %s227, 24
          %s229 = smul.addr %s228, 8
          %s230 = scalar_lea.vmem %s2, %s229
        $region36: #{ref_only_noised_unet_forward.2} parent=31 // pred_fallthru
          _
        // Predicated region
        $region37: #{ref_only_noised_unet_forward.2} parent=31 // pred_check
          %p231 = pneg %p102
        $region38: #{ref_only_noised_unet_forward.2} parent=31 // pred_check_branch
          %233 = sbr.rel (%p231) target = $region40
        $region39: #{ref_only_noised_unet_forward.2} parent=31 // pred_region
          %p234 = scmp.lt.s32.totalorder %s14, 1
          %s235 = scalar_select %p234, %s14, 1
          %s236 = smul.addr %s235, 24
          %s237 = smul.addr %s236, 8
          %s238 = scalar_lea.vmem %s3, %s237
        $region40: #{ref_only_noised_unet_forward.2} parent=31 // pred_fallthru
          _
      $region32: #{ref_only_noised_unet_forward.2} parent=5 // pred_fallthru
        _
      %p239 = scmp.le.s32.totalorder 1, %s14
      %p240 = scmp.lt.s32.totalorder %s14, 3
      %p241 = pnand %p239, %p240
      %p242 = pneg %p241
      // Predicated region
      $region41: #{ref_only_noised_unet_forward.2} parent=5 // pred_check
        _
      $region42: #{ref_only_noised_unet_forward.2} parent=5 // pred_check_branch
        %244 = sbr.rel (%p241) target = $region44
      $region43: #{ref_only_noised_unet_forward.2} parent=5 // pred_region
        %s245 = ssub.s32 %s14, 1
        // Predicated region
        $region45: #{ref_only_noised_unet_forward.2} parent=43 // pred_check
          %p246 = pneg %p35
        $region46: #{ref_only_noised_unet_forward.2} parent=43 // pred_check_branch
          %248 = sbr.rel (%p246) target = $region48
        $region47: #{ref_only_noised_unet_forward.2} parent=43 // pred_region
          %249 = dma.done [#allocation3], 16
        $region48: #{ref_only_noised_unet_forward.2} parent=43 // pred_fallthru
          _
        // Predicated region
        $region49: #{ref_only_noised_unet_forward.2} parent=43 // pred_check
          %p250 = pneg %p56
        $region50: #{ref_only_noised_unet_forward.2} parent=43 // pred_check_branch
          %252 = sbr.rel (%p250) target = $region52
        $region51: #{ref_only_noised_unet_forward.2} parent=43 // pred_region
          %253 = dma.done [#allocation5], 16
        $region52: #{ref_only_noised_unet_forward.2} parent=43 // pred_fallthru
          _
        %254 = sfence
        %p255 = pneg %p35
        %p256 = pneg %p32
        %p257 = pneg %p56
        %p258 = pneg %p53
        %p259 = scmp.lt.s32.totalorder %s19, 1
        %s260 = scalar_select %p259, %s19, 1
        %s261 = smul.addr %s260, 24
        %s262 = smul.addr %s261, 8
        %s263 = scalar_lea.vmem %s2, %s262
        %p264 = pneg %p82
        %p265 = pneg %p79
        %p266 = scmp.lt.s32.totalorder %s19, 1
        %s267 = scalar_select %p266, %s19, 1
        %s268 = smul.addr %s267, 24
        %s269 = smul.addr %s268, 8
        %s270 = scalar_lea.vmem %s3, %s269
        %p271 = pneg %p108
        %p272 = pneg %p105
        %p273 = pneg %p129
        %p274 = pneg %p126
        %p275 = pneg %p150
        %p276 = pneg %p147
        %p277 = pneg %p176
        %p278 = pneg %p173
        %p279 = scmp.lt.s32.totalorder %s19, 1
        %s280 = scalar_select %p279, %s19, 1
        %s281 = smul.addr %s280, 24
        %s282 = smul.addr %s281, 8
        %s283 = scalar_lea.vmem %s6, %s282
        %p284 = scmp.lt.s32.totalorder %s19, 1
        %s285 = scalar_select %p284, %s19, 1
        %s286 = smul.addr %s285, 24
        %s287 = smul.addr %s286, 8
        %s288 = scalar_lea.vmem %s2, %s287
        %p289 = scmp.lt.s32.totalorder %s19, 1
        %s290 = scalar_select %p289, %s19, 1
        %s291 = smul.addr %s290, 24
        %s292 = smul.addr %s291, 8
        %s293 = scalar_lea.vmem %s3, %s292
        %p294 = scmp.lt.s32.totalorder %s19, 1
        %s295 = scalar_select %p294, %s19, 1
        %s296 = smul.addr %s295, 24
        %s297 = smul.addr %s296, 8
        %s298 = scalar_lea.vmem %s6, %s297
        %s299 = sld [smem:[#allocation2 + %s19]]
        %s300 = sld [smem:[#allocation4 + %s19]]
        %v301 = vld [vmem:[%s288] sm:$0xff]
        %v302 = vld [vmem:[%s288 + $0x8] sm:$0xff]
        %v303 = vld [vmem:[%s288 + $0x10] sm:$0xff]
        %v304 = vld [vmem:[%s288 + $0x18] sm:$0xff]
        %v305 = vld [vmem:[%s288 + $0x20] sm:$0xff]
        %v306 = vld [vmem:[%s288 + $0x28] sm:$0xff]
        %v307 = vld [vmem:[%s288 + $0x30] sm:$0xff]
        %v308 = vld [vmem:[%s288 + $0x38] sm:$0xff]
        %v309 = vld [vmem:[%s288 + $0x40] sm:$0xff]
        %v310 = vld [vmem:[%s288 + $0x48] sm:$0xff]
        %v311 = vld [vmem:[%s288 + $0x50] sm:$0xff]
        %v312 = vld [vmem:[%s288 + $0x58] sm:$0xff]
        %v313 = vld [vmem:[%s288 + $0x60] sm:$0xff]
        %v314 = vld [vmem:[%s288 + $0x68] sm:$0xff]
        %v315 = vld [vmem:[%s288 + $0x70] sm:$0xff]
        %v316 = vld [vmem:[%s288 + $0x78] sm:$0xff]
        %v317 = vld [vmem:[%s288 + $0x80] sm:$0xff]
        %v318 = vld [vmem:[%s288 + $0x88] sm:$0xff]
        %v319 = vld [vmem:[%s288 + $0x90] sm:$0xff]
        %v320 = vld [vmem:[%s288 + $0x98] sm:$0xff]
        %v321 = vld [vmem:[%s288 + $0xa0] sm:$0xff]
        %v322 = vld [vmem:[%s288 + $0xa8] sm:$0xff]
        %v323 = vld [vmem:[%s288 + $0xb0] sm:$0xff]
        %v324 = vld [vmem:[%s288 + $0xb8] sm:$0xff]
        %v325 = vld [vmem:[%s293] sm:$0xff]
        %v326 = vld [vmem:[%s293 + $0x8] sm:$0xff]
        %v327 = vld [vmem:[%s293 + $0x10] sm:$0xff]
        %v328 = vld [vmem:[%s293 + $0x18] sm:$0xff]
        %v329 = vld [vmem:[%s293 + $0x20] sm:$0xff]
        %v330 = vld [vmem:[%s293 + $0x28] sm:$0xff]
        %v331 = vld [vmem:[%s293 + $0x30] sm:$0xff]
        %v332 = vld [vmem:[%s293 + $0x38] sm:$0xff]
        %v333 = vld [vmem:[%s293 + $0x40] sm:$0xff]
        %v334 = vld [vmem:[%s293 + $0x48] sm:$0xff]
        %v335 = vld [vmem:[%s293 + $0x50] sm:$0xff]
        %v336 = vld [vmem:[%s293 + $0x58] sm:$0xff]
        %v337 = vld [vmem:[%s293 + $0x60] sm:$0xff]
        %v338 = vld [vmem:[%s293 + $0x68] sm:$0xff]
        %v339 = vld [vmem:[%s293 + $0x70] sm:$0xff]
        %v340 = vld [vmem:[%s293 + $0x78] sm:$0xff]
        %v341 = vld [vmem:[%s293 + $0x80] sm:$0xff]
        %v342 = vld [vmem:[%s293 + $0x88] sm:$0xff]
        %v343 = vld [vmem:[%s293 + $0x90] sm:$0xff]
        %v344 = vld [vmem:[%s293 + $0x98] sm:$0xff]
        %v345 = vld [vmem:[%s293 + $0xa0] sm:$0xff]
        %v346 = vld [vmem:[%s293 + $0xa8] sm:$0xff]
        %v347 = vld [vmem:[%s293 + $0xb0] sm:$0xff]
        %v348 = vld [vmem:[%s293 + $0xb8] sm:$0xff]
        %v349 = vstv %s299
        %v350 = vmul.f32 %v349, %v325
        %v351 = vmul.f32 %v349, %v326
        %v352 = vmul.f32 %v349, %v327
        %v353 = vmul.f32 %v349, %v328
        %v354 = vmul.f32 %v349, %v329
        %v355 = vmul.f32 %v349, %v330
        %v356 = vmul.f32 %v349, %v331
        %v357 = vmul.f32 %v349, %v332
        %v358 = vmul.f32 %v349, %v333
        %v359 = vmul.f32 %v349, %v334
        %v360 = vmul.f32 %v349, %v335
        %v361 = vmul.f32 %v349, %v336
        %v362 = vmul.f32 %v349, %v337
        %v363 = vmul.f32 %v349, %v338
        %v364 = vmul.f32 %v349, %v339
        %v365 = vmul.f32 %v349, %v340
        %v366 = vmul.f32 %v349, %v341
        %v367 = vmul.f32 %v349, %v342
        %v368 = vmul.f32 %v349, %v343
        %v369 = vmul.f32 %v349, %v344
        %v370 = vmul.f32 %v349, %v345
        %v371 = vmul.f32 %v349, %v346
        %v372 = vmul.f32 %v349, %v347
        %v373 = vmul.f32 %v349, %v348
        %v374 = vadd.f32 %v301, %v350
        %v375 = vadd.f32 %v302, %v351
        %v376 = vadd.f32 %v303, %v352
        %v377 = vadd.f32 %v304, %v353
        %v378 = vadd.f32 %v305, %v354
        %v379 = vadd.f32 %v306, %v355
        %v380 = vadd.f32 %v307, %v356
        %v381 = vadd.f32 %v308, %v357
        %v382 = vadd.f32 %v309, %v358
        %v383 = vadd.f32 %v310, %v359
        %v384 = vadd.f32 %v311, %v360
        %v385 = vadd.f32 %v312, %v361
        %v386 = vadd.f32 %v313, %v362
        %v387 = vadd.f32 %v314, %v363
        %v388 = vadd.f32 %v315, %v364
        %v389 = vadd.f32 %v316, %v365
        %v390 = vadd.f32 %v317, %v366
        %v391 = vadd.f32 %v318, %v367
        %v392 = vadd.f32 %v319, %v368
        %v393 = vadd.f32 %v320, %v369
        %v394 = vadd.f32 %v321, %v370
        %v395 = vadd.f32 %v322, %v371
        %v396 = vadd.f32 %v323, %v372
        %v397 = vadd.f32 %v324, %v373
        %s398 = smul.f32 %s299, %s299
        %s399 = sadd.f32 %s398, 1.0
        %v400 = vstv %s399
        %v401 = vrsqrt.pop %v400
        %s402 = vtos %v401
        %v403 = vstv %s402
        %v404 = vmul.f32 %v374, %v403
        %v405 = vmul.f32 %v375, %v403
        %v406 = vmul.f32 %v376, %v403
        %v407 = vmul.f32 %v377, %v403
        %v408 = vmul.f32 %v378, %v403
        %v409 = vmul.f32 %v379, %v403
        %v410 = vmul.f32 %v380, %v403
        %v411 = vmul.f32 %v381, %v403
        %v412 = vmul.f32 %v382, %v403
        %v413 = vmul.f32 %v383, %v403
        %v414 = vmul.f32 %v384, %v403
        %v415 = vmul.f32 %v385, %v403
        %v416 = vmul.f32 %v386, %v403
        %v417 = vmul.f32 %v387, %v403
        %v418 = vmul.f32 %v388, %v403
        %v419 = vmul.f32 %v389, %v403
        %v420 = vmul.f32 %v390, %v403
        %v421 = vmul.f32 %v391, %v403
        %v422 = vmul.f32 %v392, %v403
        %v423 = vmul.f32 %v393, %v403
        %v424 = vmul.f32 %v394, %v403
        %v425 = vmul.f32 %v395, %v403
        %v426 = vmul.f32 %v396, %v403
        %v427 = vmul.f32 %v397, %v403
        %v428 = vld [vmem:[%s4] sm:$0xf]
        %v429 = vld [vmem:[%s5] sm:$0x1]
        %v430 = vstv %s300
        %v431 = vmul.f32 %v430, %v429
        %v433 = vlaneseq
        %v434 = vshrl.u32 %v433, 7
        %v435 = vsub.s32 0, %v434
        %v436 = vrot.slane %v431, %v435
        %vm438 = vcmask 31744
        %v440 = vsel %vm438, %v404, 0
        %v443 = vsel %vm438, %v405, 0
        %v446 = vsel %vm438, %v406, 0
        %v449 = vsel %vm438, %v407, 0
        %v452 = vsel %vm438, %v408, 0
        %v455 = vsel %vm438, %v409, 0
        %v458 = vsel %vm438, %v410, 0
        %v461 = vsel %vm438, %v411, 0
        %v464 = vsel %vm438, %v412, 0
        %v467 = vsel %vm438, %v413, 0
        %v470 = vsel %vm438, %v414, 0
        %v473 = vsel %vm438, %v415, 0
        %v476 = vsel %vm438, %v416, 0
        %v479 = vsel %vm438, %v417, 0
        %v482 = vsel %vm438, %v418, 0
        %v485 = vsel %vm438, %v419, 0
        %v488 = vsel %vm438, %v420, 0
        %v491 = vsel %vm438, %v421, 0
        %v494 = vsel %vm438, %v422, 0
        %v497 = vsel %vm438, %v423, 0
        %v500 = vsel %vm438, %v424, 0
        %v503 = vsel %vm438, %v425, 0
        %v506 = vsel %vm438, %v426, 0
        %v509 = vsel %vm438, %v427, 0
        %vm511 = vcmask 1043456
        %v513 = vsel %vm511, %v428, 0
        %515 = vmatprep.subr.mxu0 0.0
        %516 = vmatpush1.msra.mxu0 0.0
        %517 = vmatprep.subr.mxu0 0.0
        %518 = vmatpush1.msra.mxu0 0.0
        %519 = vmatprep.subr.mxu0 0.0
        %520 = vmatpush1.msra.mxu0 0.0
        %521 = vmatprep.subr.mxu0 0.0
        %522 = vmatpush1.msra.mxu0 0.0
        %523 = vmatprep.subr.mxu0 0.0
        %524 = vmatpush1.msra.mxu0 0.0
        %525 = vmatprep.subr.mxu0 0.0
        %526 = vmatpush1.msra.mxu0 0.0
        %527 = vmatprep.subr.mxu0 0.0
        %528 = vmatpush1.msra.mxu0 0.0
        %529 = vmatprep.subr.mxu0 0.0
        %530 = vmatpush1.msra.mxu0 0.0
        %531 = vmatprep.subr.mxu0 0.0
        %532 = vmatpush1.msra.mxu0 0.0
        %533 = vmatprep.subr.mxu0 0.0
        %534 = vmatpush1.msra.mxu0 0.0
        %535 = vmatprep.subr.mxu0 0.0
        %536 = vmatpush1.msra.mxu0 0.0
        %537 = vmatprep.subr.mxu0 0.0
        %538 = vmatpush1.msra.mxu0 0.0
        %539 = vmatprep.subr.mxu0 0.0
        %540 = vmatpush1.msra.mxu0 0.0
        %541 = vmatprep.subr.mxu0 0.0
        %542 = vmatpush1.msra.mxu0 0.0
        %543 = vmatprep.subr.mxu0 0.0
        %544 = vmatpush1.msra.mxu0 0.0
        %545 = vmatprep.subr.mxu0 0.0
        %546 = vmatpush1.msra.mxu0 %v513
        %547 = vmatprep.subr.mxu0 0.0
        %548 = vmatpush2.msra.mxu0 0.0
        %549 = vmatprep.subr.mxu0 0.0
        %550 = vmatpush2.msra.mxu0 0.0
        %551 = vmatprep.subr.mxu0 0.0
        %552 = vmatpush2.msra.mxu0 0.0
        %553 = vmatprep.subr.mxu0 0.0
        %554 = vmatpush2.msra.mxu0 0.0
        %555 = vmatprep.subr.mxu0 0.0
        %556 = vmatpush2.msra.mxu0 0.0
        %557 = vmatprep.subr.mxu0 0.0
        %558 = vmatpush2.msra.mxu0 0.0
        %559 = vmatprep.subr.mxu0 0.0
        %560 = vmatpush2.msra.mxu0 0.0
        %561 = vmatprep.subr.mxu0 0.0
        %562 = vmatpush2.msra.mxu0 0.0
        %563 = vmatprep.subr.mxu0 0.0
        %564 = vmatpush2.msra.mxu0 0.0
        %565 = vmatprep.subr.mxu0 0.0
        %566 = vmatpush2.msra.mxu0 0.0
        %567 = vmatprep.subr.mxu0 0.0
        %568 = vmatpush2.msra.mxu0 0.0
        %569 = vmatprep.subr.mxu0 0.0
        %570 = vmatpush2.msra.mxu0 0.0
        %571 = vmatprep.subr.mxu0 0.0
        %572 = vmatpush2.msra.mxu0 0.0
        %573 = vmatprep.subr.mxu0 0.0
        %574 = vmatpush2.msra.mxu0 0.0
        %575 = vmatprep.subr.mxu0 0.0
        %576 = vmatpush2.msra.mxu0 0.0
        %577 = vmatprep.subr.mxu0 0.0
        %578 = vmatpush2.msra.mxu0 0.0
        %579 = vmatprep.mubr.f32.mxu0 0.0
        %580 = vmatmul.mubr.f32.gmra.mxu0 %v440
        %v581 = vpop.f32.mrf.mxu0
        %v582 = vadd.f32 %v436, %v581
        %v583 = vpop.f32.mrf.mxu0
        %584 = vmatprep.mubr.f32.mxu0 0.0
        %585 = vmatmul.mubr.f32.gmra.mxu0 %v443
        %v586 = vpop.f32.mrf.mxu0
        %v587 = vadd.f32 %v436, %v586
        %v588 = vpop.f32.mrf.mxu0
        %589 = vmatprep.mubr.f32.mxu0 0.0
        %590 = vmatmul.mubr.f32.gmra.mxu0 %v446
        %v591 = vpop.f32.mrf.mxu0
        %v592 = vadd.f32 %v436, %v591
        %v593 = vpop.f32.mrf.mxu0
        %594 = vmatprep.mubr.f32.mxu0 0.0
        %595 = vmatmul.mubr.f32.gmra.mxu0 %v449
        %v596 = vpop.f32.mrf.mxu0
        %v597 = vadd.f32 %v436, %v596
        %v598 = vpop.f32.mrf.mxu0
        %599 = vmatprep.mubr.f32.mxu0 0.0
        %600 = vmatmul.mubr.f32.gmra.mxu0 %v452
        %v601 = vpop.f32.mrf.mxu0
        %v602 = vadd.f32 %v436, %v601
        %v603 = vpop.f32.mrf.mxu0
        %604 = vmatprep.mubr.f32.mxu0 0.0
        %605 = vmatmul.mubr.f32.gmra.mxu0 %v455
        %v606 = vpop.f32.mrf.mxu0
        %v607 = vadd.f32 %v436, %v606
        %v608 = vpop.f32.mrf.mxu0
        %609 = vmatprep.mubr.f32.mxu0 0.0
        %610 = vmatmul.mubr.f32.gmra.mxu0 %v458
        %v611 = vpop.f32.mrf.mxu0
        %v612 = vadd.f32 %v436, %v611
        %v613 = vpop.f32.mrf.mxu0
        %614 = vmatprep.mubr.f32.mxu0 0.0
        %615 = vmatmul.mubr.f32.gmra.mxu0 %v461
        %v616 = vpop.f32.mrf.mxu0
        %v617 = vadd.f32 %v436, %v616
        %v618 = vpop.f32.mrf.mxu0
        %619 = vmatprep.mubr.f32.mxu0 0.0
        %620 = vmatmul.mubr.f32.gmra.mxu0 %v464
        %v621 = vpop.f32.mrf.mxu0
        %v622 = vadd.f32 %v436, %v621
        %v623 = vpop.f32.mrf.mxu0
        %624 = vmatprep.mubr.f32.mxu0 0.0
        %625 = vmatmul.mubr.f32.gmra.mxu0 %v467
        %v626 = vpop.f32.mrf.mxu0
        %v627 = vadd.f32 %v436, %v626
        %v628 = vpop.f32.mrf.mxu0
        %629 = vmatprep.mubr.f32.mxu0 0.0
        %630 = vmatmul.mubr.f32.gmra.mxu0 %v470
        %v631 = vpop.f32.mrf.mxu0
        %v632 = vadd.f32 %v436, %v631
        %v633 = vpop.f32.mrf.mxu0
        %634 = vmatprep.mubr.f32.mxu0 0.0
        %635 = vmatmul.mubr.f32.gmra.mxu0 %v473
        %v636 = vpop.f32.mrf.mxu0
        %v637 = vadd.f32 %v436, %v636
        %v638 = vpop.f32.mrf.mxu0
        %639 = vmatprep.mubr.f32.mxu0 0.0
        %640 = vmatmul.mubr.f32.gmra.mxu0 %v476
        %v641 = vpop.f32.mrf.mxu0
        %v642 = vadd.f32 %v436, %v641
        %v643 = vpop.f32.mrf.mxu0
        %644 = vmatprep.mubr.f32.mxu0 0.0
        %645 = vmatmul.mubr.f32.gmra.mxu0 %v479
        %v646 = vpop.f32.mrf.mxu0
        %v647 = vadd.f32 %v436, %v646
        %v648 = vpop.f32.mrf.mxu0
        %649 = vmatprep.mubr.f32.mxu0 0.0
        %650 = vmatmul.mubr.f32.gmra.mxu0 %v482
        %v651 = vpop.f32.mrf.mxu0
        %v652 = vadd.f32 %v436, %v651
        %v653 = vpop.f32.mrf.mxu0
        %654 = vmatprep.mubr.f32.mxu0 0.0
        %655 = vmatmul.mubr.f32.gmra.mxu0 %v485
        %v656 = vpop.f32.mrf.mxu0
        %v657 = vadd.f32 %v436, %v656
        %v658 = vpop.f32.mrf.mxu0
        %659 = vmatprep.mubr.f32.mxu0 0.0
        %660 = vmatmul.mubr.f32.gmra.mxu0 %v488
        %v661 = vpop.f32.mrf.mxu0
        %v662 = vadd.f32 %v436, %v661
        %v663 = vpop.f32.mrf.mxu0
        %664 = vmatprep.mubr.f32.mxu0 0.0
        %665 = vmatmul.mubr.f32.gmra.mxu0 %v491
        %v666 = vpop.f32.mrf.mxu0
        %v667 = vadd.f32 %v436, %v666
        %v668 = vpop.f32.mrf.mxu0
        %669 = vmatprep.mubr.f32.mxu0 0.0
        %670 = vmatmul.mubr.f32.gmra.mxu0 %v494
        %v671 = vpop.f32.mrf.mxu0
        %v672 = vadd.f32 %v436, %v671
        %v673 = vpop.f32.mrf.mxu0
        %674 = vmatprep.mubr.f32.mxu0 0.0
        %675 = vmatmul.mubr.f32.gmra.mxu0 %v497
        %v676 = vpop.f32.mrf.mxu0
        %v677 = vadd.f32 %v436, %v676
        %v678 = vpop.f32.mrf.mxu0
        %679 = vmatprep.mubr.f32.mxu0 0.0
        %680 = vmatmul.mubr.f32.gmra.mxu0 %v500
        %v681 = vpop.f32.mrf.mxu0
        %v682 = vadd.f32 %v436, %v681
        %v683 = vpop.f32.mrf.mxu0
        %684 = vmatprep.mubr.f32.mxu0 0.0
        %685 = vmatmul.mubr.f32.gmra.mxu0 %v503
        %v686 = vpop.f32.mrf.mxu0
        %v687 = vadd.f32 %v436, %v686
        %v688 = vpop.f32.mrf.mxu0
        %689 = vmatprep.mubr.f32.mxu0 0.0
        %690 = vmatmul.mubr.f32.gmra.mxu0 %v506
        %v691 = vpop.f32.mrf.mxu0
        %v692 = vadd.f32 %v436, %v691
        %v693 = vpop.f32.mrf.mxu0
        %694 = vmatprep.mubr.f32.mxu0 0.0
        %695 = vmatmul.mubr.f32.gmra.mxu0 %v509
        %v696 = vpop.f32.mrf.mxu0
        %v697 = vadd.f32 %v436, %v696
        %v698 = vpop.f32.mrf.mxu0
        %699 = vdwg.mxu0
        %700 = vst [vmem:[%s298] sm:$0xff] %v582
        %701 = vst [vmem:[%s298 + $0x8] sm:$0xff] %v587
        %702 = vst [vmem:[%s298 + $0x10] sm:$0xff] %v592
        %703 = vst [vmem:[%s298 + $0x18] sm:$0xff] %v597
        %704 = vst [vmem:[%s298 + $0x20] sm:$0xff] %v602
        %705 = vst [vmem:[%s298 + $0x28] sm:$0xff] %v607
        %706 = vst [vmem:[%s298 + $0x30] sm:$0xff] %v612
        %707 = vst [vmem:[%s298 + $0x38] sm:$0xff] %v617
        %708 = vst [vmem:[%s298 + $0x40] sm:$0xff] %v622
        %709 = vst [vmem:[%s298 + $0x48] sm:$0xff] %v627
        %710 = vst [vmem:[%s298 + $0x50] sm:$0xff] %v632
        %711 = vst [vmem:[%s298 + $0x58] sm:$0xff] %v637
        %712 = vst [vmem:[%s298 + $0x60] sm:$0xff] %v642
        %713 = vst [vmem:[%s298 + $0x68] sm:$0xff] %v647
        %714 = vst [vmem:[%s298 + $0x70] sm:$0xff] %v652
        %715 = vst [vmem:[%s298 + $0x78] sm:$0xff] %v657
        %716 = vst [vmem:[%s298 + $0x80] sm:$0xff] %v662
        %717 = vst [vmem:[%s298 + $0x88] sm:$0xff] %v667
        %718 = vst [vmem:[%s298 + $0x90] sm:$0xff] %v672
        %719 = vst [vmem:[%s298 + $0x98] sm:$0xff] %v677
        %720 = vst [vmem:[%s298 + $0xa0] sm:$0xff] %v682
        %721 = vst [vmem:[%s298 + $0xa8] sm:$0xff] %v687
        %722 = vst [vmem:[%s298 + $0xb0] sm:$0xff] %v692
        %723 = vst [vmem:[%s298 + $0xb8] sm:$0xff] %v697
        %p724 = scmp.lt.s32.totalorder %s19, 1
        %s725 = scalar_select %p724, %s19, 1
        %s726 = smul.addr %s725, 24
        %s727 = smul.addr %s726, 8
        %s728 = scalar_lea.vmem %s6, %s727
        // Predicated region
        $region53: #{ref_only_noised_unet_forward.2} parent=43 // pred_check
          %p729 = pneg %p173
        $region54: #{ref_only_noised_unet_forward.2} parent=43 // pred_check_branch
          %731 = sbr.rel (%p729) target = $region56
        $region55: #{ref_only_noised_unet_forward.2} parent=43 // pred_region
          _
        $region56: #{ref_only_noised_unet_forward.2} parent=43 // pred_fallthru
          _
      $region44: #{ref_only_noised_unet_forward.2} parent=5 // pred_fallthru
        _
      %p732 = scmp.le.s32.totalorder 2, %s14
      // Predicated region
      $region57: #{ref_only_noised_unet_forward.2} parent=5 // pred_check
        %p733 = pneg %p732
      $region58: #{ref_only_noised_unet_forward.2} parent=5 // pred_check_branch
        %735 = sbr.rel (%p733) target = $region60
      $region59: #{ref_only_noised_unet_forward.2} parent=5 // pred_region
        %s736 = ssub.s32 %s14, 2
        // Predicated region
        $region61: #{ref_only_noised_unet_forward.2} parent=59 // pred_check
          %p737 = pneg %p179
        $region62: #{ref_only_noised_unet_forward.2} parent=59 // pred_check_branch
          %739 = sbr.rel (%p737) target = $region64
        $region63: #{ref_only_noised_unet_forward.2} parent=59 // pred_region
          %p740 = scmp.lt.s32.totalorder %s20, 1
          %s741 = scalar_select %p740, %s20, 1
          %s742 = smul.addr %s741, 24
          %s743 = smul.addr %s742, 8
          %s744 = scalar_lea.vmem %s6, %s743
        $region64: #{ref_only_noised_unet_forward.2} parent=59 // pred_fallthru
          _
      $region60: #{ref_only_noised_unet_forward.2} parent=5 // pred_fallthru
        _
    $region6: #{ref_only_noised_unet_forward.2} parent=1 // loop_footer
      %s18 = sadd.s32 1, %s14
    $region7: #{ref_only_noised_unet_forward.2} parent=1 // loop_footer_branch
      %13 = sbr.rel target = $region3
    $region8: #{ref_only_noised_unet_forward.2} parent=1 // loop_exit
      _
    %745 = vsyncpa [#allocation3], 1
    %s746 = scalar_lea.sflag [#allocation3], 1
    %747 = vsyncpa %s746, 1
    %748 = vsyncpa [#allocation5], 1

// kernel: ref_only_noised_unet_forward.3
$region0: #{ref_only_noised_unet_forward.3}
  #allocation0 [shape = 'u32[]', space=smem, size = 0x4, offset = 0x4, fixed_abs, tag = 'smem constant byte address 0x4 - core index']
  #allocation1 [shape = 'u32[144,128]{1,0:T(1,128)}', space=vmem, size = 0x12000, scoped, tag = 'internal scratch']
  %s0 = inlined_call_operand.vmem [shape: f32[2], index: 0, kind: input, shape index: {}]
  %s1 = inlined_call_operand.vmem [shape: f32[2,64,4], index: 1, kind: input, shape index: {}]
  %s2 = inlined_call_operand.vmem [shape: f32[2,8,128], index: 2, kind: input, shape index: {}]
  %s3 = inlined_call_operand.vmem [shape: f32[2,192,128], index: 3, kind: input, shape index: {}]
  %s4 = inlined_call_operand.vmem [shape: f32[4,128], index: 4, kind: input, shape index: {}]
  %s5 = inlined_call_operand.vmem [shape: f32[1,128], index: 5, kind: input, shape index: {}]
  %s6 = inlined_call_operand.vmem [shape: f32[128,128], index: 6, kind: input, shape index: {}]
  %s7 = inlined_call_operand.vmem [shape: f32[128,256], index: 7, kind: input, shape index: {}]
  %s8 = inlined_call_operand.vmem [shape: f32[128,128], index: 8, kind: input, shape index: {}]
  %s9 = inlined_call_operand.vmem [shape: f32[128,128], index: 9, kind: input, shape index: {}]
  %s10 = inlined_call_operand.vmem [shape: f32[128,256], index: 10, kind: input, shape index: {}]
  %s11 = inlined_call_operand.vmem [shape: f32[128,128], index: 11, kind: input, shape index: {}]
  %s12 = inlined_call_operand.vmem [shape: f32[128,4], index: 12, kind: input, shape index: {}]
  %s13 = inlined_call_operand.vmem [shape: f32[2,64,4], index: 13, kind: output, shape index: {}]
  %s14 = sld [smem:[#allocation0]]
  $region89: #{ref_only_noised_unet_forward.3} parent=0
    _
  %s16 = ssub.s32 1, %s14
  %s17 = scalar_select 0, %s16, %s14
  $region1: #{ref_only_noised_unet_forward.3} parent=0
    #allocation2 [shape = 'u8[512]{0}', space=smem, size = 0x200, scoped, tag = 'input window, operand 0, single buffered']
    #allocation3 [shape = 's32[2]{0}', space=sflag, size = 0x8, scoped, tag = 'scoped memory for ref_only_noised_unet_forward.3']
    %18 = vsyncpa [#allocation3], 0
    loop: start=0, step=1, limit=4
    $region2: #{ref_only_noised_unet_forward.3} parent=1 // loop_pre_header
      _
    $region3: #{ref_only_noised_unet_forward.3} parent=1 // loop_header
      %s20 = sphi 0, %s24
      %p21 = scmp.ge.s32.totalorder %s20, 4
      %s28 = sphi 0, %s28
      %s30 = sphi 0, %s28
      %s31 = sphi 0, %s30
      %s45 = sphi 0, %s31
      %s51 = sphi 0, %s53
      %s54 = sphi 0, %s51
      %s55 = sphi 0, %s54
      %s71 = sphi 0, %s55
      %s77 = sphi 0, %s79
      %s80 = sphi 0, %s77
      %s81 = sphi 0, %s80
      %s97 = sphi 0, %s81
      %s103 = sphi 0, %s105
      %s106 = sphi 0, %s103
      %s107 = sphi 0, %s106
      %s123 = sphi 0, %s107
      %s127 = sphi 0, %s127
      %s129 = sphi 0, %s127
      %s130 = sphi 0, %s129
      %s144 = sphi 0, %s130
      %s148 = sphi 0, %s148
      %s150 = sphi 0, %s148
      %s151 = sphi 0, %s150
      %s165 = sphi 0, %s151
      %s169 = sphi 0, %s169
      %s171 = sphi 0, %s169
      %s172 = sphi 0, %s171
      %s186 = sphi 0, %s172
      %s190 = sphi 0, %s190
      %s192 = sphi 0, %s190
      %s193 = sphi 0, %s192
      %s207 = sphi 0, %s193
      %s211 = sphi 0, %s211
      %s213 = sphi 0, %s211
      %s214 = sphi 0, %s213
      %s228 = sphi 0, %s214
      %s232 = sphi 0, %s232
      %s234 = sphi 0, %s232
      %s235 = sphi 0, %s234
      %s249 = sphi 0, %s235
      %s253 = sphi 0, %s253
      %s255 = sphi 0, %s253
      %s256 = sphi 0, %s255
      %s270 = sphi 0, %s256
      %s274 = sphi 0, %s274
      %s276 = sphi 0, %s274
      %s277 = sphi 0, %s276
      %s291 = sphi 0, %s277
      %s295 = sphi 0, %s295
      %s297 = sphi 0, %s295
      %s298 = sphi 0, %s297
      %s312 = sphi 0, %s298
      %s318 = sphi 0, %s320
      %s321 = sphi 0, %s318
      %s322 = sphi 0, %s321
      %s338 = sphi 0, %s322
    $region4: #{ref_only_noised_unet_forward.3} parent=1 // loop_header_branch
      %23 = sbr.rel (%p21) target = $region8
    $region5: #{ref_only_noised_unet_forward.3} parent=1 // loop_body
      %s25 = ssub.s32 %s20, 1
      %s26 = ssub.s32 %s20, 2
      %s27 = sadd.s32 %s20, 1
      %s29 = sadd.s32 %s28, 1
      %p32 = scmp.eq.s32.totalorder %s20, 1
      %p33 = scmp.ne.s32.totalorder %s28, %s30
      %p34 = scmp.eq.s32.totalorder %s20, 0
      %p35 = por %p33, %p34
      %p36 = scmp.ne.s32.totalorder %s28, %s30
      %p37 = scmp.eq.s32.totalorder %s25, 1
      %p38 = por %p36, %p37
      %p39 = scmp.ne.s32.totalorder %s30, %s31
      %p40 = scmp.eq.s32.totalorder %s25, 0
      %p41 = por %p39, %p40
      %p42 = scmp.ne.s32.totalorder %s30, %s31
      %p43 = scmp.eq.s32.totalorder %s26, 1
      %p44 = por %p42, %p43
      %p46 = scmp.ne.s32.totalorder %s31, %s45
      %p47 = scmp.eq.s32.totalorder %s26, 0
      %p48 = por %p46, %p47
      %s49 = ssub.s32 %s20, %s27
      %p50 = scmp.eq.s32.totalorder %s49, 0
      %s52 = sadd.s32 %s51, 1
      %s53 = scalar_select %p50, %s51, %s52
      %p56 = pneg %p50
      %p57 = scmp.eq.s32.totalorder %s20, 1
      %p58 = por %p56, %p57
      %p59 = scmp.ne.s32.totalorder %s51, %s54
      %p60 = scmp.eq.s32.totalorder %s20, 0
      %p61 = por %p59, %p60
      %p62 = scmp.ne.s32.totalorder %s51, %s54
      %p63 = scmp.eq.s32.totalorder %s25, 1
      %p64 = por %p62, %p63
      %p65 = scmp.ne.s32.totalorder %s54, %s55
      %p66 = scmp.eq.s32.totalorder %s25, 0
      %p67 = por %p65, %p66
      %p68 = scmp.ne.s32.totalorder %s54, %s55
      %p69 = scmp.eq.s32.totalorder %s26, 1
      %p70 = por %p68, %p69
      %p72 = scmp.ne.s32.totalorder %s55, %s71
      %p73 = scmp.eq.s32.totalorder %s26, 0
      %p74 = por %p72, %p73
      %s75 = ssub.s32 %s20, %s27
      %p76 = scmp.eq.s32.totalorder %s75, 0
      %s78 = sadd.s32 %s77, 1
      %s79 = scalar_select %p76, %s77, %s78
      %p82 = pneg %p76
      %p83 = scmp.eq.s32.totalorder %s20, 1
      %p84 = por %p82, %p83
      %p85 = scmp.ne.s32.totalorder %s77, %s80
      %p86 = scmp.eq.s32.totalorder %s20, 0
      %p87 = por %p85, %p86
      %p88 = scmp.ne.s32.totalorder %s77, %s80
      %p89 = scmp.eq.s32.totalorder %s25, 1
      %p90 = por %p88, %p89
      %p91 = scmp.ne.s32.totalorder %s80, %s81
      %p92 = scmp.eq.s32.totalorder %s25, 0
      %p93 = por %p91, %p92
      %p94 = scmp.ne.s32.totalorder %s80, %s81
      %p95 = scmp.eq.s32.totalorder %s26, 1
      %p96 = por %p94, %p95
      %p98 = scmp.ne.s32.totalorder %s81, %s97
      %p99 = scmp.eq.s32.totalorder %s26, 0
      %p100 = por %p98, %p99
      %s101 = ssub.s32 %s20, %s27
      %p102 = scmp.eq.s32.totalorder %s101, 0
      %s104 = sadd.s32 %s103, 1
      %s105 = scalar_select %p102, %s103, %s104
      %p108 = pneg %p102
      %p109 = scmp.eq.s32.totalorder %s20, 1
      %p110 = por %p108, %p109
      %p111 = scmp.ne.s32.totalorder %s103, %s106
      %p112 = scmp.eq.s32.totalorder %s20, 0
      %p113 = por %p111, %p112
      %p114 = scmp.ne.s32.totalorder %s103, %s106
      %p115 = scmp.eq.s32.totalorder %s25, 1
      %p116 = por %p114, %p115
      %p117 = scmp.ne.s32.totalorder %s106, %s107
      %p118 = scmp.eq.s32.totalorder %s25, 0
      %p119 = por %p117, %p118
      %p120 = scmp.ne.s32.totalorder %s106, %s107
      %p121 = scmp.eq.s32.totalorder %s26, 1
      %p122 = por %p120, %p121
      %p124 = scmp.ne.s32.totalorder %s107, %s123
      %p125 = scmp.eq.s32.totalorder %s26, 0
      %p126 = por %p124, %p125
      %s128 = sadd.s32 %s127, 1
      %p131 = scmp.eq.s32.totalorder %s20, 1
      %p132 = scmp.ne.s32.totalorder %s127, %s129
      %p133 = scmp.eq.s32.totalorder %s20, 0
      %p134 = por %p132, %p133
      %p135 = scmp.ne.s32.totalorder %s127, %s129
      %p136 = scmp.eq.s32.totalorder %s25, 1
      %p137 = por %p135, %p136
      %p138 = scmp.ne.s32.totalorder %s129, %s130
      %p139 = scmp.eq.s32.totalorder %s25, 0
      %p140 = por %p138, %p139
      %p141 = scmp.ne.s32.totalorder %s129, %s130
      %p142 = scmp.eq.s32.totalorder %s26, 1
      %p143 = por %p141, %p142
      %p145 = scmp.ne.s32.totalorder %s130, %s144
      %p146 = scmp.eq.s32.totalorder %s26, 0
      %p147 = por %p145, %p146
      %s149 = sadd.s32 %s148, 1
      %p152 = scmp.eq.s32.totalorder %s20, 1
      %p153 = scmp.ne.s32.totalorder %s148, %s150
      %p154 = scmp.eq.s32.totalorder %s20, 0
      %p155 = por %p153, %p154
      %p156 = scmp.ne.s32.totalorder %s148, %s150
      %p157 = scmp.eq.s32.totalorder %s25, 1
      %p158 = por %p156, %p157
      %p159 = scmp.ne.s32.totalorder %s150, %s151
      %p160 = scmp.eq.s32.totalorder %s25, 0
      %p161 = por %p159, %p160
      %p162 = scmp.ne.s32.totalorder %s150, %s151
      %p163 = scmp.eq.s32.totalorder %s26, 1
      %p164 = por %p162, %p163
      %p166 = scmp.ne.s32.totalorder %s151, %s165
      %p167 = scmp.eq.s32.totalorder %s26, 0
      %p168 = por %p166, %p167
      %s170 = sadd.s32 %s169, 1
      %p173 = scmp.eq.s32.totalorder %s20, 1
      %p174 = scmp.ne.s32.totalorder %s169, %s171
      %p175 = scmp.eq.s32.totalorder %s20, 0
      %p176 = por %p174, %p175
      %p177 = scmp.ne.s32.totalorder %s169, %s171
      %p178 = scmp.eq.s32.totalorder %s25, 1
      %p179 = por %p177, %p178
      %p180 = scmp.ne.s32.totalorder %s171, %s172
      %p181 = scmp.eq.s32.totalorder %s25, 0
      %p182 = por %p180, %p181
      %p183 = scmp.ne.s32.totalorder %s171, %s172
      %p184 = scmp.eq.s32.totalorder %s26, 1
      %p185 = por %p183, %p184
      %p187 = scmp.ne.s32.totalorder %s172, %s186
      %p188 = scmp.eq.s32.totalorder %s26, 0
      %p189 = por %p187, %p188
      %s191 = sadd.s32 %s190, 1
      %p194 = scmp.eq.s32.totalorder %s20, 1
      %p195 = scmp.ne.s32.totalorder %s190, %s192
      %p196 = scmp.eq.s32.totalorder %s20, 0
      %p197 = por %p195, %p196
      %p198 = scmp.ne.s32.totalorder %s190, %s192
      %p199 = scmp.eq.s32.totalorder %s25, 1
      %p200 = por %p198, %p199
      %p201 = scmp.ne.s32.totalorder %s192, %s193
      %p202 = scmp.eq.s32.totalorder %s25, 0
      %p203 = por %p201, %p202
      %p204 = scmp.ne.s32.totalorder %s192, %s193
      %p205 = scmp.eq.s32.totalorder %s26, 1
      %p206 = por %p204, %p205
      %p208 = scmp.ne.s32.totalorder %s193, %s207
      %p209 = scmp.eq.s32.totalorder %s26, 0
      %p210 = por %p208, %p209
      %s212 = sadd.s32 %s211, 1
      %p215 = scmp.eq.s32.totalorder %s20, 1
      %p216 = scmp.ne.s32.totalorder %s211, %s213
      %p217 = scmp.eq.s32.totalorder %s20, 0
      %p218 = por %p216, %p217
      %p219 = scmp.ne.s32.totalorder %s211, %s213
      %p220 = scmp.eq.s32.totalorder %s25, 1
      %p221 = por %p219, %p220
      %p222 = scmp.ne.s32.totalorder %s213, %s214
      %p223 = scmp.eq.s32.totalorder %s25, 0
      %p224 = por %p222, %p223
      %p225 = scmp.ne.s32.totalorder %s213, %s214
      %p226 = scmp.eq.s32.totalorder %s26, 1
      %p227 = por %p225, %p226
      %p229 = scmp.ne.s32.totalorder %s214, %s228
      %p230 = scmp.eq.s32.totalorder %s26, 0
      %p231 = por %p229, %p230
      %s233 = sadd.s32 %s232, 1
      %p236 = scmp.eq.s32.totalorder %s20, 1
      %p237 = scmp.ne.s32.totalorder %s232, %s234
      %p238 = scmp.eq.s32.totalorder %s20, 0
      %p239 = por %p237, %p238
      %p240 = scmp.ne.s32.totalorder %s232, %s234
      %p241 = scmp.eq.s32.totalorder %s25, 1
      %p242 = por %p240, %p241
      %p243 = scmp.ne.s32.totalorder %s234, %s235
      %p244 = scmp.eq.s32.totalorder %s25, 0
      %p245 = por %p243, %p244
      %p246 = scmp.ne.s32.totalorder %s234, %s235
      %p247 = scmp.eq.s32.totalorder %s26, 1
      %p248 = por %p246, %p247
      %p250 = scmp.ne.s32.totalorder %s235, %s249
      %p251 = scmp.eq.s32.totalorder %s26, 0
      %p252 = por %p250, %p251
      %s254 = sadd.s32 %s253, 1
      %p257 = scmp.eq.s32.totalorder %s20, 1
      %p258 = scmp.ne.s32.totalorder %s253, %s255
      %p259 = scmp.eq.s32.totalorder %s20, 0
      %p260 = por %p258, %p259
      %p261 = scmp.ne.s32.totalorder %s253, %s255
      %p262 = scmp.eq.s32.totalorder %s25, 1
      %p263 = por %p261, %p262
      %p264 = scmp.ne.s32.totalorder %s255, %s256
      %p265 = scmp.eq.s32.totalorder %s25, 0
      %p266 = por %p264, %p265
      %p267 = scmp.ne.s32.totalorder %s255, %s256
      %p268 = scmp.eq.s32.totalorder %s26, 1
      %p269 = por %p267, %p268
      %p271 = scmp.ne.s32.totalorder %s256, %s270
      %p272 = scmp.eq.s32.totalorder %s26, 0
      %p273 = por %p271, %p272
      %s275 = sadd.s32 %s274, 1
      %p278 = scmp.eq.s32.totalorder %s20, 1
      %p279 = scmp.ne.s32.totalorder %s274, %s276
      %p280 = scmp.eq.s32.totalorder %s20, 0
      %p281 = por %p279, %p280
      %p282 = scmp.ne.s32.totalorder %s274, %s276
      %p283 = scmp.eq.s32.totalorder %s25, 1
      %p284 = por %p282, %p283
      %p285 = scmp.ne.s32.totalorder %s276, %s277
      %p286 = scmp.eq.s32.totalorder %s25, 0
      %p287 = por %p285, %p286
      %p288 = scmp.ne.s32.totalorder %s276, %s277
      %p289 = scmp.eq.s32.totalorder %s26, 1
      %p290 = por %p288, %p289
      %p292 = scmp.ne.s32.totalorder %s277, %s291
      %p293 = scmp.eq.s32.totalorder %s26, 0
      %p294 = por %p292, %p293
      %s296 = sadd.s32 %s295, 1
      %p299 = scmp.eq.s32.totalorder %s20, 1
      %p300 = scmp.ne.s32.totalorder %s295, %s297
      %p301 = scmp.eq.s32.totalorder %s20, 0
      %p302 = por %p300, %p301
      %p303 = scmp.ne.s32.totalorder %s295, %s297
      %p304 = scmp.eq.s32.totalorder %s25, 1
      %p305 = por %p303, %p304
      %p306 = scmp.ne.s32.totalorder %s297, %s298
      %p307 = scmp.eq.s32.totalorder %s25, 0
      %p308 = por %p306, %p307
      %p309 = scmp.ne.s32.totalorder %s297, %s298
      %p310 = scmp.eq.s32.totalorder %s26, 1
      %p311 = por %p309, %p310
      %p313 = scmp.ne.s32.totalorder %s298, %s312
      %p314 = scmp.eq.s32.totalorder %s26, 0
      %p315 = por %p313, %p314
      %s316 = ssub.s32 %s20, %s27
      %p317 = scmp.eq.s32.totalorder %s316, 0
      %s319 = sadd.s32 %s318, 1
      %s320 = scalar_select %p317, %s318, %s319
      %p323 = pneg %p317
      %p324 = scmp.eq.s32.totalorder %s20, 1
      %p325 = por %p323, %p324
      %p326 = scmp.ne.s32.totalorder %s318, %s321
      %p327 = scmp.eq.s32.totalorder %s20, 0
      %p328 = por %p326, %p327
      %p329 = scmp.ne.s32.totalorder %s318, %s321
      %p330 = scmp.eq.s32.totalorder %s25, 1
      %p331 = por %p329, %p330
      %p332 = scmp.ne.s32.totalorder %s321, %s322
      %p333 = scmp.eq.s32.totalorder %s25, 0
      %p334 = por %p332, %p333
      %p335 = scmp.ne.s32.totalorder %s321, %s322
      %p336 = scmp.eq.s32.totalorder %s26, 1
      %p337 = por %p335, %p336
      %p339 = scmp.ne.s32.totalorder %s322, %s338
      %p340 = scmp.eq.s32.totalorder %s26, 0
      %p341 = por %p339, %p340
      %p342 = scmp.le.s32.totalorder 1, %s20
      %p343 = scmp.lt.s32.totalorder %s20, 3
      %p344 = pnand %p342, %p343
      %p345 = pneg %p344
      // Predicated region
      $region9: #{ref_only_noised_unet_forward.3} parent=5 // pred_check
        _
      $region10: #{ref_only_noised_unet_forward.3} parent=5 // pred_check_branch
        %347 = sbr.rel (%p344) target = $region12
      $region11: #{ref_only_noised_unet_forward.3} parent=5 // pred_region
        %s348 = ssub.s32 %s20, 1
        // Predicated region
        $region13: #{ref_only_noised_unet_forward.3} parent=11 // pred_check
          %p349 = pneg %p41
        $region14: #{ref_only_noised_unet_forward.3} parent=11 // pred_check_branch
          %351 = sbr.rel (%p349) target = $region16
        $region15: #{ref_only_noised_unet_forward.3} parent=11 // pred_region
          %s353 = ssub.s32 16, 16
          %354 = vsyncadd [#allocation3], %s353
          %s356 = sshll.u32 %s0, 4
          %s357 = int_to_ptr.vmem [resolvable:$true] %s356
          %359 = dma.vmem_to_smem %s357, 16, [#allocation2], [#allocation3]
        $region16: #{ref_only_noised_unet_forward.3} parent=11 // pred_fallthru
          _
        // Predicated region
        $region17: #{ref_only_noised_unet_forward.3} parent=11 // pred_check
          %p360 = pneg %p140
        $region18: #{ref_only_noised_unet_forward.3} parent=11 // pred_check_branch
          %362 = sbr.rel (%p360) target = $region20
        $region19: #{ref_only_noised_unet_forward.3} parent=11 // pred_region
          _
        $region20: #{ref_only_noised_unet_forward.3} parent=11 // pred_fallthru
          _
        // Predicated region
        $region21: #{ref_only_noised_unet_forward.3} parent=11 // pred_check
          %p363 = pneg %p161
        $region22: #{ref_only_noised_unet_forward.3} parent=11 // pred_check_branch
          %365 = sbr.rel (%p363) target = $region24
        $region23: #{ref_only_noised_unet_forward.3} parent=11 // pred_region
          _
        $region24: #{ref_only_noised_unet_forward.3} parent=11 // pred_fallthru
          _
        // Predicated region
        $region25: #{ref_only_noised_unet_forward.3} parent=11 // pred_check
          %p366 = pneg %p182
        $region26: #{ref_only_noised_unet_forward.3} parent=11 // pred_check_branch
          %368 = sbr.rel (%p366) target = $region28
        $region27: #{ref_only_noised_unet_forward.3} parent=11 // pred_region
          _
        $region28: #{ref_only_noised_unet_forward.3} parent=11 // pred_fallthru
          _
        // Predicated region
        $region29: #{ref_only_noised_unet_forward.3} parent=11 // pred_check
          %p369 = pneg %p203
        $region30: #{ref_only_noised_unet_forward.3} parent=11 // pred_check_branch
          %371 = sbr.rel (%p369) target = $region32
        $region31: #{ref_only_noised_unet_forward.3} parent=11 // pred_region
          _
        $region32: #{ref_only_noised_unet_forward.3} parent=11 // pred_fallthru
          _
        // Predicated region
        $region33: #{ref_only_noised_unet_forward.3} parent=11 // pred_check
          %p372 = pneg %p224
        $region34: #{ref_only_noised_unet_forward.3} parent=11 // pred_check_branch
          %374 = sbr.rel (%p372) target = $region36
        $region35: #{ref_only_noised_unet_forward.3} parent=11 // pred_region
          _
        $region36: #{ref_only_noised_unet_forward.3} parent=11 // pred_fallthru
          _
        // Predicated region
        $region37: #{ref_only_noised_unet_forward.3} parent=11 // pred_check
          %p375 = pneg %p245
        $region38: #{ref_only_noised_unet_forward.3} parent=11 // pred_check_branch
          %377 = sbr.rel (%p375) target = $region40
        $region39: #{ref_only_noised_unet_forward.3} parent=11 // pred_region
          _
        $region40: #{ref_only_noised_unet_forward.3} parent=11 // pred_fallthru
          _
        // Predicated region
        $region41: #{ref_only_noised_unet_forward.3} parent=11 // pred_check
          %p378 = pneg %p266
        $region42: #{ref_only_noised_unet_forward.3} parent=11 // pred_check_branch
          %380 = sbr.rel (%p378) target = $region44
        $region43: #{ref_only_noised_unet_forward.3} parent=11 // pred_region
          _
        $region44: #{ref_only_noised_unet_forward.3} parent=11 // pred_fallthru
          _
        // Predicated region
        $region45: #{ref_only_noised_unet_forward.3} parent=11 // pred_check
          %p381 = pneg %p287
        $region46: #{ref_only_noised_unet_forward.3} parent=11 // pred_check_branch
          %383 = sbr.rel (%p381) target = $region48
        $region47: #{ref_only_noised_unet_forward.3} parent=11 // pred_region
          _
        $region48: #{ref_only_noised_unet_forward.3} parent=11 // pred_fallthru
          _
        // Predicated region
        $region49: #{ref_only_noised_unet_forward.3} parent=11 // pred_check
          %p384 = pneg %p308
        $region50: #{ref_only_noised_unet_forward.3} parent=11 // pred_check_branch
          %386 = sbr.rel (%p384) target = $region52
        $region51: #{ref_only_noised_unet_forward.3} parent=11 // pred_region
          _
        $region52: #{ref_only_noised_unet_forward.3} parent=11 // pred_fallthru
          _
      $region12: #{ref_only_noised_unet_forward.3} parent=5 // pred_fallthru
        _
      %p387 = scmp.lt.s32.totalorder %s20, 2
      // Predicated region
      $region53: #{ref_only_noised_unet_forward.3} parent=5 // pred_check
        %p388 = pneg %p387
      $region54: #{ref_only_noised_unet_forward.3} parent=5 // pred_check_branch
        %390 = sbr.rel (%p388) target = $region56
      $region55: #{ref_only_noised_unet_forward.3} parent=5 // pred_region
        // Predicated region
        $region57: #{ref_only_noised_unet_forward.3} parent=55 // pred_check
          %p391 = pneg %p61
        $region58: #{ref_only_noised_unet_forward.3} parent=55 // pred_check_branch
          %393 = sbr.rel (%p391) target = $region60
        $region59: #{ref_only_noised_unet_forward.3} parent=55 // pred_region
          %p394 = scmp.lt.s32.totalorder %s20, 1
          %s395 = scalar_select %p394, %s20, 1
          %s396 = smul.addr %s395, 8
          %s397 = smul.addr %s396, 8
          %s398 = scalar_lea.vmem %s1, %s397
        $region60: #{ref_only_noised_unet_forward.3} parent=55 // pred_fallthru
          _
        // Predicated region
        $region61: #{ref_only_noised_unet_forward.3} parent=55 // pred_check
          %p399 = pneg %p87
        $region62: #{ref_only_noised_unet_forward.3} parent=55 // pred_check_branch
          %401 = sbr.rel (%p399) target = $region64
        $region63: #{ref_only_noised_unet_forward.3} parent=55 // pred_region
          %p402 = scmp.lt.s32.totalorder %s20, 1
          %s403 = scalar_select %p402, %s20, 1
          %s404 = smul.addr %s403, 8
          %s405 = scalar_lea.vmem %s2, %s404
        $region64: #{ref_only_noised_unet_forward.3} parent=55 // pred_fallthru
          _
        // Predicated region
        $region65: #{ref_only_noised_unet_forward.3} parent=55 // pred_check
          %p406 = pneg %p113
        $region66: #{ref_only_noised_unet_forward.3} parent=55 // pred_check_branch
          %408 = sbr.rel (%p406) target = $region68
        $region67: #{ref_only_noised_unet_forward.3} parent=55 // pred_region
          %p409 = scmp.lt.s32.totalorder %s20, 1
          %s410 = scalar_select %p409, %s20, 1
          %s411 = smul.addr %s410, 24
          %s412 = smul.addr %s411, 8
          %s413 = scalar_lea.vmem %s3, %s412
        $region68: #{ref_only_noised_unet_forward.3} parent=55 // pred_fallthru
          _
      $region56: #{ref_only_noised_unet_forward.3} parent=5 // pred_fallthru
        _
      %p414 = scmp.le.s32.totalorder 1, %s20
      %p415 = scmp.lt.s32.totalorder %s20, 3
      %p416 = pnand %p414, %p415
      %p417 = pneg %p416
      // Predicated region
      $region69: #{ref_only_noised_unet_forward.3} parent=5 // pred_check
        _
      $region70: #{ref_only_noised_unet_forward.3} parent=5 // pred_check_branch
        %419 = sbr.rel (%p416) target = $region72
      $region71: #{ref_only_noised_unet_forward.3} parent=5 // pred_region
        %s420 = ssub.s32 %s20, 1
        // Predicated region
        $region73: #{ref_only_noised_unet_forward.3} parent=71 // pred_check
          %p421 = pneg %p41
        $region74: #{ref_only_noised_unet_forward.3} parent=71 // pred_check_branch
          %423 = sbr.rel (%p421) target = $region76
        $region75: #{ref_only_noised_unet_forward.3} parent=71 // pred_region
          %424 = dma.done [#allocation3], 16
        $region76: #{ref_only_noised_unet_forward.3} parent=71 // pred_fallthru
          _
        %425 = sfence
        %p426 = pneg %p41
        %p427 = pneg %p38
        %p428 = scmp.lt.s32.totalorder %s25, 1
        %s429 = scalar_select %p428, %s25, 1
        %s430 = smul.addr %s429, 8
        %s431 = smul.addr %s430, 8
        %s432 = scalar_lea.vmem %s1, %s431
        %p433 = pneg %p67
        %p434 = pneg %p64
        %p435 = scmp.lt.s32.totalorder %s25, 1
        %s436 = scalar_select %p435, %s25, 1
        %s437 = smul.addr %s436, 8
        %s438 = scalar_lea.vmem %s2, %s437
        %p439 = pneg %p93
        %p440 = pneg %p90
        %p441 = scmp.lt.s32.totalorder %s25, 1
        %s442 = scalar_select %p441, %s25, 1
        %s443 = smul.addr %s442, 24
        %s444 = smul.addr %s443, 8
        %s445 = scalar_lea.vmem %s3, %s444
        %p446 = pneg %p119
        %p447 = pneg %p116
        %p448 = pneg %p140
        %p449 = pneg %p137
        %p450 = pneg %p161
        %p451 = pneg %p158
        %p452 = pneg %p182
        %p453 = pneg %p179
        %p454 = pneg %p203
        %p455 = pneg %p200
        %p456 = pneg %p224
        %p457 = pneg %p221
        %p458 = pneg %p245
        %p459 = pneg %p242
        %p460 = pneg %p266
        %p461 = pneg %p263
        %p462 = pneg %p287
        %p463 = pneg %p284
        %p464 = pneg %p308
        %p465 = pneg %p305
        %p466 = pneg %p334
        %p467 = pneg %p331
        %p468 = scmp.lt.s32.totalorder %s25, 1
        %s469 = scalar_select %p468, %s25, 1
        %s470 = smul.addr %s469, 8
        %s471 = smul.addr %s470, 8
        %s472 = scalar_lea.vmem %s13, %s471
        %p473 = scmp.lt.s32.totalorder %s25, 1
        %s474 = scalar_select %p473, %s25, 1
        %s475 = smul.addr %s474, 8
        %s476 = smul.addr %s475, 8
        %s477 = scalar_lea.vmem %s1, %s476
        %p478 = scmp.lt.s32.totalorder %s25, 1
        %s479 = scalar_select %p478, %s25, 1
        %s480 = smul.addr %s479, 8
        %s481 = scalar_lea.vmem %s2, %s480
        %p482 = scmp.lt.s32.totalorder %s25, 1
        %s483 = scalar_select %p482, %s25, 1
        %s484 = smul.addr %s483, 24
        %s485 = smul.addr %s484, 8
        %s486 = scalar_lea.vmem %s3, %s485
        %p487 = scmp.lt.s32.totalorder %s25, 1
        %s488 = scalar_select %p487, %s25, 1
        %s489 = smul.addr %s488, 8
        %s490 = smul.addr %s489, 8
        %s491 = scalar_lea.vmem %s13, %s490
        %s492 = sld [smem:[#allocation2 + %s25]]
        %v493 = vld [vmem:[%s477] sm:$0xff]
        %v494 = vld [vmem:[%s477 + $0x8] sm:$0xff]
        %v495 = vld [vmem:[%s477 + $0x10] sm:$0xff]
        %v496 = vld [vmem:[%s477 + $0x18] sm:$0xff]
        %v497 = vld [vmem:[%s477 + $0x20] sm:$0xff]
        %v498 = vld [vmem:[%s477 + $0x28] sm:$0xff]
        %v499 = vld [vmem:[%s477 + $0x30] sm:$0xff]
        %v500 = vld [vmem:[%s477 + $0x38] sm:$0xff]
        %v501 = vld [vmem:[%s4] sm:$0xf]
        %v502 = vld [vmem:[%s5] sm:$0x1]
        %v503 = vstv %s492
        %v504 = vmul.f32 %v503, %v502
        %v506 = vlaneseq
        %v507 = vshrl.u32 %v506, 7
        %v508 = vsub.s32 0, %v507
        %v509 = vrot.slane %v504, %v508
        %vm511 = vcmask 31744
        %v513 = vsel %vm511, %v493, 0
        %v516 = vsel %vm511, %v494, 0
        %v519 = vsel %vm511, %v495, 0
        %v522 = vsel %vm511, %v496, 0
        %v525 = vsel %vm511, %v497, 0
        %v528 = vsel %vm511, %v498, 0
        %v531 = vsel %vm511, %v499, 0
        %v534 = vsel %vm511, %v500, 0
        %vm536 = vcmask 1043456
        %v538 = vsel %vm536, %v501, 0
        %540 = vmatprep.subr.mxu0 0.0
        %541 = vmatpush1.msra.mxu0 0.0
        %542 = vmatprep.subr.mxu0 0.0
        %543 = vmatpush1.msra.mxu0 0.0
        %544 = vmatprep.subr.mxu0 0.0
        %545 = vmatpush1.msra.mxu0 0.0
        %546 = vmatprep.subr.mxu0 0.0
        %547 = vmatpush1.msra.mxu0 0.0
        %548 = vmatprep.subr.mxu0 0.0
        %549 = vmatpush1.msra.mxu0 0.0
        %550 = vmatprep.subr.mxu0 0.0
        %551 = vmatpush1.msra.mxu0 0.0
        %552 = vmatprep.subr.mxu0 0.0
        %553 = vmatpush1.msra.mxu0 0.0
        %554 = vmatprep.subr.mxu0 0.0
        %555 = vmatpush1.msra.mxu0 0.0
        %556 = vmatprep.subr.mxu0 0.0
        %557 = vmatpush1.msra.mxu0 0.0
        %558 = vmatprep.subr.mxu0 0.0
        %559 = vmatpush1.msra.mxu0 0.0
        %560 = vmatprep.subr.mxu0 0.0
        %561 = vmatpush1.msra.mxu0 0.0
        %562 = vmatprep.subr.mxu0 0.0
        %563 = vmatpush1.msra.mxu0 0.0
        %564 = vmatprep.subr.mxu0 0.0
        %565 = vmatpush1.msra.mxu0 0.0
        %566 = vmatprep.subr.mxu0 0.0
        %567 = vmatpush1.msra.mxu0 0.0
        %568 = vmatprep.subr.mxu0 0.0
        %569 = vmatpush1.msra.mxu0 0.0
        %570 = vmatprep.subr.mxu0 0.0
        %571 = vmatpush1.msra.mxu0 %v538
        %572 = vmatprep.subr.mxu0 0.0
        %573 = vmatpush2.msra.mxu0 0.0
        %574 = vmatprep.subr.mxu0 0.0
        %575 = vmatpush2.msra.mxu0 0.0
        %576 = vmatprep.subr.mxu0 0.0
        %577 = vmatpush2.msra.mxu0 0.0
        %578 = vmatprep.subr.mxu0 0.0
        %579 = vmatpush2.msra.mxu0 0.0
        %580 = vmatprep.subr.mxu0 0.0
        %581 = vmatpush2.msra.mxu0 0.0
        %582 = vmatprep.subr.mxu0 0.0
        %583 = vmatpush2.msra.mxu0 0.0
        %584 = vmatprep.subr.mxu0 0.0
        %585 = vmatpush2.msra.mxu0 0.0
        %586 = vmatprep.subr.mxu0 0.0
        %587 = vmatpush2.msra.mxu0 0.0
        %588 = vmatprep.subr.mxu0 0.0
        %589 = vmatpush2.msra.mxu0 0.0
        %590 = vmatprep.subr.mxu0 0.0
        %591 = vmatpush2.msra.mxu0 0.0
        %592 = vmatprep.subr.mxu0 0.0
        %593 = vmatpush2.msra.mxu0 0.0
        %594 = vmatprep.subr.mxu0 0.0
        %595 = vmatpush2.msra.mxu0 0.0
        %596 = vmatprep.subr.mxu0 0.0
        %597 = vmatpush2.msra.mxu0 0.0
        %598 = vmatprep.subr.mxu0 0.0
        %599 = vmatpush2.msra.mxu0 0.0
        %600 = vmatprep.subr.mxu0 0.0
        %601 = vmatpush2.msra.mxu0 0.0
        %602 = vmatprep.subr.mxu0 0.0
        %603 = vmatpush2.msra.mxu0 0.0
        %604 = vmatprep.mubr.f32.mxu0 0.0
        %605 = vmatmul.mubr.f32.gmra.mxu0 %v513
        %v606 = vpop.f32.mrf.mxu0
        %v607 = vadd.f32 %v509, %v606
        %v608 = vpop.f32.mrf.mxu0
        %609 = vmatprep.mubr.f32.mxu0 0.0
        %610 = vmatmul.mubr.f32.gmra.mxu0 %v516
        %v611 = vpop.f32.mrf.mxu0
        %v612 = vadd.f32 %v509, %v611
        %v613 = vpop.f32.mrf.mxu0
        %614 = vmatprep.mubr.f32.mxu0 0.0
        %615 = vmatmul.mubr.f32.gmra.mxu0 %v519
        %v616 = vpop.f32.mrf.mxu0
        %v617 = vadd.f32 %v509, %v616
        %v618 = vpop.f32.mrf.mxu0
        %619 = vmatprep.mubr.f32.mxu0 0.0
        %620 = vmatmul.mubr.f32.gmra.mxu0 %v522
        %v621 = vpop.f32.mrf.mxu0
        %v622 = vadd.f32 %v509, %v621
        %v623 = vpop.f32.mrf.mxu0
        %624 = vmatprep.mubr.f32.mxu0 0.0
        %625 = vmatmul.mubr.f32.gmra.mxu0 %v525
        %v626 = vpop.f32.mrf.mxu0
        %v627 = vadd.f32 %v509, %v626
        %v628 = vpop.f32.mrf.mxu0
        %629 = vmatprep.mubr.f32.mxu0 0.0
        %630 = vmatmul.mubr.f32.gmra.mxu0 %v528
        %v631 = vpop.f32.mrf.mxu0
        %v632 = vadd.f32 %v509, %v631
        %v633 = vpop.f32.mrf.mxu0
        %634 = vmatprep.mubr.f32.mxu0 0.0
        %635 = vmatmul.mubr.f32.gmra.mxu0 %v531
        %v636 = vpop.f32.mrf.mxu0
        %v637 = vadd.f32 %v509, %v636
        %v638 = vpop.f32.mrf.mxu0
        %639 = vmatprep.mubr.f32.mxu0 0.0
        %640 = vmatmul.mubr.f32.gmra.mxu0 %v534
        %v641 = vpop.f32.mrf.mxu0
        %v642 = vadd.f32 %v509, %v641
        %v643 = vpop.f32.mrf.mxu0
        %644 = vdwg.mxu0
        %v645 = vld [vmem:[%s486] sm:$0xff]
        %v646 = vld [vmem:[%s486 + $0x8] sm:$0xff]
        %v647 = vld [vmem:[%s486 + $0x10] sm:$0xff]
        %v648 = vld [vmem:[%s486 + $0x18] sm:$0xff]
        %v649 = vld [vmem:[%s486 + $0x20] sm:$0xff]
        %v650 = vld [vmem:[%s486 + $0x28] sm:$0xff]
        %v651 = vld [vmem:[%s486 + $0x30] sm:$0xff]
        %v652 = vld [vmem:[%s486 + $0x38] sm:$0xff]
        %v653 = vld [vmem:[%s486 + $0x40] sm:$0xff]
        %v654 = vld [vmem:[%s486 + $0x48] sm:$0xff]
        %v655 = vld [vmem:[%s486 + $0x50] sm:$0xff]
        %v656 = vld [vmem:[%s486 + $0x58] sm:$0xff]
        %v657 = vld [vmem:[%s486 + $0x60] sm:$0xff]
        %v658 = vld [vmem:[%s486 + $0x68] sm:$0xff]
        %v659 = vld [vmem:[%s486 + $0x70] sm:$0xff]
        %v660 = vld [vmem:[%s486 + $0x78] sm:$0xff]
        %v661 = vld [vmem:[%s486 + $0x80] sm:$0xff]
        %v662 = vld [vmem:[%s486 + $0x88] sm:$0xff]
        %v663 = vld [vmem:[%s486 + $0x90] sm:$0xff]
        %v664 = vld [vmem:[%s486 + $0x98] sm:$0xff]
        %v665 = vld [vmem:[%s486 + $0xa0] sm:$0xff]
        %v666 = vld [vmem:[%s486 + $0xa8] sm:$0xff]
        %v667 = vld [vmem:[%s486 + $0xb0] sm:$0xff]
        %v668 = vld [vmem:[%s486 + $0xb8] sm:$0xff]
        %v669 = vld [vmem:[%s6] sm:$0xff]
        %v670 = vld [vmem:[%s6 + $0x8] sm:$0xff]
        %v671 = vld [vmem:[%s6 + $0x10] sm:$0xff]
        %v672 = vld [vmem:[%s6 + $0x18] sm:$0xff]
        %v673 = vld [vmem:[%s6 + $0x20] sm:$0xff]
        %v674 = vld [vmem:[%s6 + $0x28] sm:$0xff]
        %v675 = vld [vmem:[%s6 + $0x30] sm:$0xff]
        %v676 = vld [vmem:[%s6 + $0x38] sm:$0xff]
        %v677 = vld [vmem:[%s6 + $0x40] sm:$0xff]
        %v678 = vld [vmem:[%s6 + $0x48] sm:$0xff]
        %v679 = vld [vmem:[%s6 + $0x50] sm:$0xff]
        %v680 = vld [vmem:[%s6 + $0x58] sm:$0xff]
        %v681 = vld [vmem:[%s6 + $0x60] sm:$0xff]
        %v682 = vld [vmem:[%s6 + $0x68] sm:$0xff]
        %v683 = vld [vmem:[%s6 + $0x70] sm:$0xff]
        %v684 = vld [vmem:[%s6 + $0x78] sm:$0xff]
        %685 = vmatprep.subr.mxu0 0.0
        %686 = vmatpush1.msra.mxu0 %v684
        %687 = vmatprep.subr.mxu0 0.0
        %688 = vmatpush1.msra.mxu0 %v683
        %689 = vmatprep.subr.mxu0 0.0
        %690 = vmatpush1.msra.mxu0 %v682
        %691 = vmatprep.subr.mxu0 0.0
        %692 = vmatpush1.msra.mxu0 %v681
        %693 = vmatprep.subr.mxu0 0.0
        %694 = vmatpush1.msra.mxu0 %v680
        %695 = vmatprep.subr.mxu0 0.0
        %696 = vmatpush1.msra.mxu0 %v679
        %697 = vmatprep.subr.mxu0 0.0
        %698 = vmatpush1.msra.mxu0 %v678
        %699 = vmatprep.subr.mxu0 0.0
        %700 = vmatpush1.msra.mxu0 %v677
        %701 = vmatprep.subr.mxu0 0.0
        %702 = vmatpush1.msra.mxu0 %v676
        %703 = vmatprep.subr.mxu0 0.0
        %704 = vmatpush1.msra.mxu0 %v675
        %705 = vmatprep.subr.mxu0 0.0
        %706 = vmatpush1.msra.mxu0 %v674
        %707 = vmatprep.subr.mxu0 0.0
        %708 = vmatpush1.msra.mxu0 %v673
        %709 = vmatprep.subr.mxu0 0.0
        %710 = vmatpush1.msra.mxu0 %v672
        %711 = vmatprep.subr.mxu0 0.0
        %712 = vmatpush1.msra.mxu0 %v671
        %713 = vmatprep.subr.mxu0 0.0
        %714 = vmatpush1.msra.mxu0 %v670
        %715 = vmatprep.subr.mxu0 0.0
        %716 = vmatpush1.msra.mxu0 %v669
        %717 = vmatprep.subr.mxu0 0.0
        %718 = vmatpush2.msra.mxu0 0.0
        %719 = vmatprep.subr.mxu0 0.0
        %720 = vmatpush2.msra.mxu0 0.0
        %721 = vmatprep.subr.mxu0 0.0
        %722 = vmatpush2.msra.mxu0 0.0
        %723 = vmatprep.subr.mxu0 0.0
        %724 = vmatpush2.msra.mxu0 0.0
        %725 = vmatprep.subr.mxu0 0.0
        %726 = vmatpush2.msra.mxu0 0.0
        %727 = vmatprep.subr.mxu0 0.0
        %728 = vmatpush2.msra.mxu0 0.0
        %729 = vmatprep.subr.mxu0 0.0
        %730 = vmatpush2.msra.mxu0 0.0
        %731 = vmatprep.subr.mxu0 0.0
        %732 = vmatpush2.msra.mxu0 0.0
        %733 = vmatprep.subr.mxu0 0.0
        %734 = vmatpush2.msra.mxu0 0.0
        %735 = vmatprep.subr.mxu0 0.0
        %736 = vmatpush2.msra.mxu0 0.0
        %737 = vmatprep.subr.mxu0 0.0
        %738 = vmatpush2.msra.mxu0 0.0
        %739 = vmatprep.subr.mxu0 0.0
        %740 = vmatpush2.msra.mxu0 0.0
        %741 = vmatprep.subr.mxu0 0.0
        %742 = vmatpush2.msra.mxu0 0.0
        %743 = vmatprep.subr.mxu0 0.0
        %744 = vmatpush2.msra.mxu0 0.0
        %745 = vmatprep.subr.mxu0 0.0
        %746 = vmatpush2.msra.mxu0 0.0
        %747 = vmatprep.subr.mxu0 0.0
        %748 = vmatpush2.msra.mxu0 0.0
        %749 = vmatprep.mubr.f32.mxu0 0.0
        %750 = vmatmul.mubr.f32.gmra.mxu0 %v607
        %v751 = vpop.f32.mrf.mxu0
        %v752 = vadd.f32 0.0, %v751
        %v753 = vpop.f32.mrf.mxu0
        %754 = vmatprep.mubr.f32.mxu0 0.0
        %755 = vmatmul.mubr.f32.gmra.mxu0 %v612
        %v756 = vpop.f32.mrf.mxu0
        %v757 = vadd.f32 0.0, %v756
        %v758 = vpop.f32.mrf.mxu0
        %759 = vmatprep.mubr.f32.mxu0 0.0
        %760 = vmatmul.mubr.f32.gmra.mxu0 %v617
        %v761 = vpop.f32.mrf.mxu0
        %v762 = vadd.f32 0.0, %v761
        %v763 = vpop.f32.mrf.mxu0
        %764 = vmatprep.mubr.f32.mxu0 0.0
        %765 = vmatmul.mubr.f32.gmra.mxu0 %v622
        %v766 = vpop.f32.mrf.mxu0
        %v767 = vadd.f32 0.0, %v766
        %v768 = vpop.f32.mrf.mxu0
        %769 = vmatprep.mubr.f32.mxu0 0.0
        %770 = vmatmul.mubr.f32.gmra.mxu0 %v627
        %v771 = vpop.f32.mrf.mxu0
        %v772 = vadd.f32 0.0, %v771
        %v773 = vpop.f32.mrf.mxu0
        %774 = vmatprep.mubr.f32.mxu0 0.0
        %775 = vmatmul.mubr.f32.gmra.mxu0 %v632
        %v776 = vpop.f32.mrf.mxu0
        %v777 = vadd.f32 0.0, %v776
        %v778 = vpop.f32.mrf.mxu0
        %779 = vmatprep.mubr.f32.mxu0 0.0
        %780 = vmatmul.mubr.f32.gmra.mxu0 %v637
        %v781 = vpop.f32.mrf.mxu0
        %v782 = vadd.f32 0.0, %v781
        %v783 = vpop.f32.mrf.mxu0
        %784 = vmatprep.mubr.f32.mxu0 0.0
        %785 = vmatmul.mubr.f32.gmra.mxu0 %v642
        %v786 = vpop.f32.mrf.mxu0
        %v787 = vadd.f32 0.0, %v786
        %v788 = vpop.f32.mrf.mxu0
        %789 = vdwg.mxu0
        %v790 = vld [vmem:[%s7] sm:$0xff]
        %v791 = vld [vmem:[%s7 + $0x8] sm:$0xff]
        %v792 = vld [vmem:[%s7 + $0x10] sm:$0xff]
        %v793 = vld [vmem:[%s7 + $0x18] sm:$0xff]
        %v794 = vld [vmem:[%s7 + $0x20] sm:$0xff]
        %v795 = vld [vmem:[%s7 + $0x28] sm:$0xff]
        %v796 = vld [vmem:[%s7 + $0x30] sm:$0xff]
        %v797 = vld [vmem:[%s7 + $0x38] sm:$0xff]
        %v798 = vld [vmem:[%s7 + $0x40] sm:$0xff]
        %v799 = vld [vmem:[%s7 + $0x48] sm:$0xff]
        %v800 = vld [vmem:[%s7 + $0x50] sm:$0xff]
        %v801 = vld [vmem:[%s7 + $0x58] sm:$0xff]
        %v802 = vld [vmem:[%s7 + $0x60] sm:$0xff]
        %v803 = vld [vmem:[%s7 + $0x68] sm:$0xff]
        %v804 = vld [vmem:[%s7 + $0x70] sm:$0xff]
        %v805 = vld [vmem:[%s7 + $0x78] sm:$0xff]
        %v806 = vld [vmem:[%s7 + $0x80] sm:$0xff]
        %v807 = vld [vmem:[%s7 + $0x88] sm:$0xff]
        %v808 = vld [vmem:[%s7 + $0x90] sm:$0xff]
        %v809 = vld [vmem:[%s7 + $0x98] sm:$0xff]
        %v810 = vld [vmem:[%s7 + $0xa0] sm:$0xff]
        %v811 = vld [vmem:[%s7 + $0xa8] sm:$0xff]
        %v812 = vld [vmem:[%s7 + $0xb0] sm:$0xff]
        %v813 = vld [vmem:[%s7 + $0xb8] sm:$0xff]
        %v814 = vld [vmem:[%s7 + $0xc0] sm:$0xff]
        %v815 = vld [vmem:[%s7 + $0xc8] sm:$0xff]
        %v816 = vld [vmem:[%s7 + $0xd0] sm:$0xff]
        %v817 = vld [vmem:[%s7 + $0xd8] sm:$0xff]
        %v818 = vld [vmem:[%s7 + $0xe0] sm:$0xff]
        %v819 = vld [vmem:[%s7 + $0xe8] sm:$0xff]
        %v820 = vld [vmem:[%s7 + $0xf0] sm:$0xff]
        %v821 = vld [vmem:[%s7 + $0xf8] sm:$0xff]
        %822 = vmatprep.subr.mxu0 %v821
        %823 = vmatpush1.msra.mxu0 %v820
        %824 = vmatprep.subr.mxu0 %v819
        %825 = vmatpush1.msra.mxu0 %v818
        %826 = vmatprep.subr.mxu0 %v817
        %827 = vmatpush1.msra.mxu0 %v816
        %828 = vmatprep.subr.mxu0 %v815
        %829 = vmatpush1.msra.mxu0 %v814
        %830 = vmatprep.subr.mxu0 %v813
        %831 = vmatpush1.msra.mxu0 %v812
        %832 = vmatprep.subr.mxu0 %v811
        %833 = vmatpush1.msra.mxu0 %v810
        %834 = vmatprep.subr.mxu0 %v809
        %835 = vmatpush1.msra.mxu0 %v808
        %836 = vmatprep.subr.mxu0 %v807
        %837 = vmatpush1.msra.mxu0 %v806
        %838 = vmatprep.subr.mxu0 %v805
        %839 = vmatpush1.msra.mxu0 %v804
        %840 = vmatprep.subr.mxu0 %v803
        %841 = vmatpush1.msra.mxu0 %v802
        %842 = vmatprep.subr.mxu0 %v801
        %843 = vmatpush1.msra.mxu0 %v800
        %844 = vmatprep.subr.mxu0 %v799
        %845 = vmatpush1.msra.mxu0 %v798
        %846 = vmatprep.subr.mxu0 %v797
        %847 = vmatpush1.msra.mxu0 %v796
        %848 = vmatprep.subr.mxu0 %v795
        %849 = vmatpush1.msra.mxu0 %v794
        %850 = vmatprep.subr.mxu0 %v793
        %851 = vmatpush1.msra.mxu0 %v792
        %852 = vmatprep.subr.mxu0 %v791
        %853 = vmatpush1.msra.mxu0 %v790
        %854 = vmatprep.subr.mxu0 0.0
        %855 = vmatpush2.msra.mxu0 0.0
        %856 = vmatprep.subr.mxu0 0.0
        %857 = vmatpush2.msra.mxu0 0.0
        %858 = vmatprep.subr.mxu0 0.0
        %859 = vmatpush2.msra.mxu0 0.0
        %860 = vmatprep.subr.mxu0 0.0
        %861 = vmatpush2.msra.mxu0 0.0
        %862 = vmatprep.subr.mxu0 0.0
        %863 = vmatpush2.msra.mxu0 0.0
        %864 = vmatprep.subr.mxu0 0.0
        %865 = vmatpush2.msra.mxu0 0.0
        %866 = vmatprep.subr.mxu0 0.0
        %867 = vmatpush2.msra.mxu0 0.0
        %868 = vmatprep.subr.mxu0 0.0
        %869 = vmatpush2.msra.mxu0 0.0
        %870 = vmatprep.subr.mxu0 0.0
        %871 = vmatpush2.msra.mxu0 0.0
        %872 = vmatprep.subr.mxu0 0.0
        %873 = vmatpush2.msra.mxu0 0.0
        %874 = vmatprep.subr.mxu0 0.0
        %875 = vmatpush2.msra.mxu0 0.0
        %876 = vmatprep.subr.mxu0 0.0
        %877 = vmatpush2.msra.mxu0 0.0
        %878 = vmatprep.subr.mxu0 0.0
        %879 = vmatpush2.msra.mxu0 0.0
        %880 = vmatprep.subr.mxu0 0.0
        %881 = vmatpush2.msra.mxu0 0.0
        %882 = vmatprep.subr.mxu0 0.0
        %883 = vmatpush2.msra.mxu0 0.0
        %884 = vmatprep.subr.mxu0 0.0
        %885 = vmatpush2.msra.mxu0 0.0
        %886 = vmatprep.mubr.f32.mxu0 0.0
        %887 = vmatmul.mubr.f32.gmra.mxu0 %v607
        %v888 = vpop.f32.mrf.mxu0
        %v889 = vadd.f32 0.0, %v888
        %v890 = vpop.f32.mrf.mxu0
        %v891 = vadd.f32 0.0, %v890
        %892 = vmatprep.mubr.f32.mxu0 0.0
        %893 = vmatmul.mubr.f32.gmra.mxu0 %v612
        %v894 = vpop.f32.mrf.mxu0
        %v895 = vadd.f32 0.0, %v894
        %v896 = vpop.f32.mrf.mxu0
        %v897 = vadd.f32 0.0, %v896
        %898 = vmatprep.mubr.f32.mxu0 0.0
        %899 = vmatmul.mubr.f32.gmra.mxu0 %v617
        %v900 = vpop.f32.mrf.mxu0
        %v901 = vadd.f32 0.0, %v900
        %v902 = vpop.f32.mrf.mxu0
        %v903 = vadd.f32 0.0, %v902
        %904 = vmatprep.mubr.f32.mxu0 0.0
        %905 = vmatmul.mubr.f32.gmra.mxu0 %v622
        %v906 = vpop.f32.mrf.mxu0
        %v907 = vadd.f32 0.0, %v906
        %v908 = vpop.f32.mrf.mxu0
        %v909 = vadd.f32 0.0, %v908
        %910 = vmatprep.mubr.f32.mxu0 0.0
        %911 = vmatmul.mubr.f32.gmra.mxu0 %v627
        %v912 = vpop.f32.mrf.mxu0
        %v913 = vadd.f32 0.0, %v912
        %v914 = vpop.f32.mrf.mxu0
        %v915 = vadd.f32 0.0, %v914
        %916 = vmatprep.mubr.f32.mxu0 0.0
        %917 = vmatmul.mubr.f32.gmra.mxu0 %v632
        %v918 = vpop.f32.mrf.mxu0
        %v919 = vadd.f32 0.0, %v918
        %v920 = vpop.f32.mrf.mxu0
        %v921 = vadd.f32 0.0, %v920
        %922 = vmatprep.mubr.f32.mxu0 0.0
        %923 = vmatmul.mubr.f32.gmra.mxu0 %v637
        %v924 = vpop.f32.mrf.mxu0
        %v925 = vadd.f32 0.0, %v924
        %v926 = vpop.f32.mrf.mxu0
        %v927 = vadd.f32 0.0, %v926
        %928 = vmatprep.mubr.f32.mxu0 0.0
        %929 = vmatmul.mubr.f32.gmra.mxu0 %v642
        %v930 = vpop.f32.mrf.mxu0
        %v931 = vadd.f32 0.0, %v930
        %v932 = vpop.f32.mrf.mxu0
        %v933 = vadd.f32 0.0, %v932
        %934 = vmatprep.mubr.f32.mxu0 0.0
        %935 = vmatmul.mubr.f32.gmra.mxu0 %v645
        %v936 = vpop.f32.mrf.mxu0
        %v937 = vadd.f32 0.0, %v936
        %v938 = vpop.f32.mrf.mxu0
        %v939 = vadd.f32 0.0, %v938
        %940 = vmatprep.mubr.f32.mxu0 0.0
        %941 = vmatmul.mubr.f32.gmra.mxu0 %v646
        %v942 = vpop.f32.mrf.mxu0
        %v943 = vadd.f32 0.0, %v942
        %v944 = vpop.f32.mrf.mxu0
        %v945 = vadd.f32 0.0, %v944
        %946 = vmatprep.mubr.f32.mxu0 0.0
        %947 = vmatmul.mubr.f32.gmra.mxu0 %v647
        %v948 = vpop.f32.mrf.mxu0
        %v949 = vadd.f32 0.0, %v948
        %v950 = vpop.f32.mrf.mxu0
        %v951 = vadd.f32 0.0, %v950
        %952 = vmatprep.mubr.f32.mxu0 0.0
        %953 = vmatmul.mubr.f32.gmra.mxu0 %v648
        %v954 = vpop.f32.mrf.mxu0
        %v955 = vadd.f32 0.0, %v954
        %v956 = vpop.f32.mrf.mxu0
        %v957 = vadd.f32 0.0, %v956
        %958 = vmatprep.mubr.f32.mxu0 0.0
        %959 = vmatmul.mubr.f32.gmra.mxu0 %v649
        %v960 = vpop.f32.mrf.mxu0
        %v961 = vadd.f32 0.0, %v960
        %v962 = vpop.f32.mrf.mxu0
        %v963 = vadd.f32 0.0, %v962
        %964 = vmatprep.mubr.f32.mxu0 0.0
        %965 = vmatmul.mubr.f32.gmra.mxu0 %v650
        %v966 = vpop.f32.mrf.mxu0
        %v967 = vadd.f32 0.0, %v966
        %v968 = vpop.f32.mrf.mxu0
        %v969 = vadd.f32 0.0, %v968
        %970 = vmatprep.mubr.f32.mxu0 0.0
        %971 = vmatmul.mubr.f32.gmra.mxu0 %v651
        %v972 = vpop.f32.mrf.mxu0
        %v973 = vadd.f32 0.0, %v972
        %v974 = vpop.f32.mrf.mxu0
        %v975 = vadd.f32 0.0, %v974
        %976 = vmatprep.mubr.f32.mxu0 0.0
        %977 = vmatmul.mubr.f32.gmra.mxu0 %v652
        %v978 = vpop.f32.mrf.mxu0
        %v979 = vadd.f32 0.0, %v978
        %v980 = vpop.f32.mrf.mxu0
        %v981 = vadd.f32 0.0, %v980
        %982 = vmatprep.mubr.f32.mxu0 0.0
        %983 = vmatmul.mubr.f32.gmra.mxu0 %v653
        %v984 = vpop.f32.mrf.mxu0
        %v985 = vadd.f32 0.0, %v984
        %v986 = vpop.f32.mrf.mxu0
        %v987 = vadd.f32 0.0, %v986
        %988 = vmatprep.mubr.f32.mxu0 0.0
        %989 = vmatmul.mubr.f32.gmra.mxu0 %v654
        %v990 = vpop.f32.mrf.mxu0
        %v991 = vadd.f32 0.0, %v990
        %v992 = vpop.f32.mrf.mxu0
        %v993 = vadd.f32 0.0, %v992
        %994 = vmatprep.mubr.f32.mxu0 0.0
        %995 = vmatmul.mubr.f32.gmra.mxu0 %v655
        %v996 = vpop.f32.mrf.mxu0
        %v997 = vadd.f32 0.0, %v996
        %v998 = vpop.f32.mrf.mxu0
        %v999 = vadd.f32 0.0, %v998
        %1000 = vmatprep.mubr.f32.mxu0 0.0
        %1001 = vmatmul.mubr.f32.gmra.mxu0 %v656
        %v1002 = vpop.f32.mrf.mxu0
        %v1003 = vadd.f32 0.0, %v1002
        %v1004 = vpop.f32.mrf.mxu0
        %v1005 = vadd.f32 0.0, %v1004
        %1006 = vmatprep.mubr.f32.mxu0 0.0
        %1007 = vmatmul.mubr.f32.gmra.mxu0 %v657
        %v1008 = vpop.f32.mrf.mxu0
        %v1009 = vadd.f32 0.0, %v1008
        %v1010 = vpop.f32.mrf.mxu0
        %v1011 = vadd.f32 0.0, %v1010
        %1012 = vmatprep.mubr.f32.mxu0 0.0
        %1013 = vmatmul.mubr.f32.gmra.mxu0 %v658
        %v1014 = vpop.f32.mrf.mxu0
        %v1015 = vadd.f32 0.0, %v1014
        %v1016 = vpop.f32.mrf.mxu0
        %v1017 = vadd.f32 0.0, %v1016
        %1018 = vmatprep.mubr.f32.mxu0 0.0
        %1019 = vmatmul.mubr.f32.gmra.mxu0 %v659
        %v1020 = vpop.f32.mrf.mxu0
        %v1021 = vadd.f32 0.0, %v1020
        %v1022 = vpop.f32.mrf.mxu0
        %v1023 = vadd.f32 0.0, %v1022
        %1024 = vmatprep.mubr.f32.mxu0 0.0
        %1025 = vmatmul.mubr.f32.gmra.mxu0 %v660
        %v1026 = vpop.f32.mrf.mxu0
        %v1027 = vadd.f32 0.0, %v1026
        %v1028 = vpop.f32.mrf.mxu0
        %v1029 = vadd.f32 0.0, %v1028
        %1030 = vmatprep.mubr.f32.mxu0 0.0
        %1031 = vmatmul.mubr.f32.gmra.mxu0 %v661
        %v1032 = vpop.f32.mrf.mxu0
        %v1033 = vadd.f32 0.0, %v1032
        %v1034 = vpop.f32.mrf.mxu0
        %v1035 = vadd.f32 0.0, %v1034
        %1036 = vmatprep.mubr.f32.mxu0 0.0
        %1037 = vmatmul.mubr.f32.gmra.mxu0 %v662
        %v1038 = vpop.f32.mrf.mxu0
        %v1039 = vadd.f32 0.0, %v1038
        %v1040 = vpop.f32.mrf.mxu0
        %v1041 = vadd.f32 0.0, %v1040
        %1042 = vmatprep.mubr.f32.mxu0 0.0
        %1043 = vmatmul.mubr.f32.gmra.mxu0 %v663
        %v1044 = vpop.f32.mrf.mxu0
        %v1045 = vadd.f32 0.0, %v1044
        %v1046 = vpop.f32.mrf.mxu0
        %v1047 = vadd.f32 0.0, %v1046
        %1048 = vmatprep.mubr.f32.mxu0 0.0
        %1049 = vmatmul.mubr.f32.gmra.mxu0 %v664
        %v1050 = vpop.f32.mrf.mxu0
        %v1051 = vadd.f32 0.0, %v1050
        %v1052 = vpop.f32.mrf.mxu0
        %v1053 = vadd.f32 0.0, %v1052
        %1054 = vmatprep.mubr.f32.mxu0 0.0
        %1055 = vmatmul.mubr.f32.gmra.mxu0 %v665
        %v1056 = vpop.f32.mrf.mxu0
        %v1057 = vadd.f32 0.0, %v1056
        %v1058 = vpop.f32.mrf.mxu0
        %v1059 = vadd.f32 0.0, %v1058
        %1060 = vmatprep.mubr.f32.mxu0 0.0
        %1061 = vmatmul.mubr.f32.gmra.mxu0 %v666
        %v1062 = vpop.f32.mrf.mxu0
        %v1063 = vadd.f32 0.0, %v1062
        %v1064 = vpop.f32.mrf.mxu0
        %v1065 = vadd.f32 0.0, %v1064
        %1066 = vmatprep.mubr.f32.mxu0 0.0
        %1067 = vmatmul.mubr.f32.gmra.mxu0 %v667
        %v1068 = vpop.f32.mrf.mxu0
        %v1069 = vadd.f32 0.0, %v1068
        %v1070 = vpop.f32.mrf.mxu0
        %v1071 = vadd.f32 0.0, %v1070
        %1072 = vmatprep.mubr.f32.mxu0 0.0
        %1073 = vmatmul.mubr.f32.gmra.mxu0 %v668
        %v1074 = vpop.f32.mrf.mxu0
        %v1075 = vadd.f32 0.0, %v1074
        %v1076 = vpop.f32.mrf.mxu0
        %v1077 = vadd.f32 0.0, %v1076
        %1078 = vdwg.mxu0
        %1079 = vmatprep.subr.mxu0 0.0
        %1080 = vmatpush1.xpose.msra.mxu0 %v979
        %1081 = vmatprep.subr.mxu0 0.0
        %1082 = vmatpush1.xpose.msra.mxu0 %v973
        %1083 = vmatprep.subr.mxu0 0.0
        %1084 = vmatpush1.xpose.msra.mxu0 %v967
        %1085 = vmatprep.subr.mxu0 0.0
        %1086 = vmatpush1.xpose.msra.mxu0 %v961
        %1087 = vmatprep.subr.mxu0 0.0
        %1088 = vmatpush1.xpose.msra.mxu0 %v955
        %1089 = vmatprep.subr.mxu0 0.0
        %1090 = vmatpush1.xpose.msra.mxu0 %v949
        %1091 = vmatprep.subr.mxu0 0.0
        %1092 = vmatpush1.xpose.msra.mxu0 %v943
        %1093 = vmatprep.subr.mxu0 0.0
        %1094 = vmatpush1.xpose.msra.mxu0 %v937
        %1095 = vmatprep.subr.mxu0 0.0
        %1096 = vmatpush1.xpose.msra.mxu0 %v931
        %1097 = vmatprep.subr.mxu0 0.0
        %1098 = vmatpush1.xpose.msra.mxu0 %v925
        %1099 = vmatprep.subr.mxu0 0.0
        %1100 = vmatpush1.xpose.msra.mxu0 %v919
        %1101 = vmatprep.subr.mxu0 0.0
        %1102 = vmatpush1.xpose.msra.mxu0 %v913
        %1103 = vmatprep.subr.mxu0 0.0
        %1104 = vmatpush1.xpose.msra.mxu0 %v907
        %1105 = vmatprep.subr.mxu0 0.0
        %1106 = vmatpush1.xpose.msra.mxu0 %v901
        %1107 = vmatprep.subr.mxu0 0.0
        %1108 = vmatpush1.xpose.msra.mxu0 %v895
        %1109 = vmatprep.subr.mxu0 0.0
        %1110 = vmatpush1.xpose.msra.mxu0 %v889
        %1111 = vmatprep.subr.mxu0 0.0
        %1112 = vmatpush2.xpose.msra.mxu0 %v1075
        %1113 = vmatprep.subr.mxu0 0.0
        %1114 = vmatpush2.xpose.msra.mxu0 %v1069
        %1115 = vmatprep.subr.mxu0 0.0
        %1116 = vmatpush2.xpose.msra.mxu0 %v1063
        %1117 = vmatprep.subr.mxu0 0.0
        %1118 = vmatpush2.xpose.msra.mxu0 %v1057
        %1119 = vmatprep.subr.mxu0 0.0
        %1120 = vmatpush2.xpose.msra.mxu0 %v1051
        %1121 = vmatprep.subr.mxu0 0.0
        %1122 = vmatpush2.xpose.msra.mxu0 %v1045
        %1123 = vmatprep.subr.mxu0 0.0
        %1124 = vmatpush2.xpose.msra.mxu0 %v1039
        %1125 = vmatprep.subr.mxu0 0.0
        %1126 = vmatpush2.xpose.msra.mxu0 %v1033
        %1127 = vmatprep.subr.mxu0 0.0
        %1128 = vmatpush2.xpose.msra.mxu0 %v1027
        %1129 = vmatprep.subr.mxu0 0.0
        %1130 = vmatpush2.xpose.msra.mxu0 %v1021
        %1131 = vmatprep.subr.mxu0 0.0
        %1132 = vmatpush2.xpose.msra.mxu0 %v1015
        %1133 = vmatprep.subr.mxu0 0.0
        %1134 = vmatpush2.xpose.msra.mxu0 %v1009
        %1135 = vmatprep.subr.mxu0 0.0
        %1136 = vmatpush2.xpose.msra.mxu0 %v1003
        %1137 = vmatprep.subr.mxu0 0.0
        %1138 = vmatpush2.xpose.msra.mxu0 %v997
        %1139 = vmatprep.subr.mxu0 0.0
        %1140 = vmatpush2.xpose.msra.mxu0 %v991
        %1141 = vmatprep.subr.mxu0 0.0
        %1142 = vmatpush2.xpose.msra.mxu0 %v985
        %1143 = vmatprep.mubr.f32.mxu0 0.0
        %1144 = vmatmul.mubr.f32.gmra.mxu0 %v752
        %v1145 = vpop.f32.mrf.mxu0
        %v1146 = vadd.f32 0.0, %v1145
        %v1147 = vpop.f32.mrf.mxu0
        %v1148 = vadd.f32 0.0, %v1147
        %1149 = vmatprep.mubr.f32.mxu0 0.0
        %1150 = vmatmul.mubr.f32.gmra.mxu0 %v757
        %v1151 = vpop.f32.mrf.mxu0
        %v1152 = vadd.f32 0.0, %v1151
        %v1153 = vpop.f32.mrf.mxu0
        %v1154 = vadd.f32 0.0, %v1153
        %1155 = vmatprep.mubr.f32.mxu0 0.0
        %1156 = vmatmul.mubr.f32.gmra.mxu0 %v762
        %v1157 = vpop.f32.mrf.mxu0
        %v1158 = vadd.f32 0.0, %v1157
        %v1159 = vpop.f32.mrf.mxu0
        %v1160 = vadd.f32 0.0, %v1159
        %1161 = vmatprep.mubr.f32.mxu0 0.0
        %1162 = vmatmul.mubr.f32.gmra.mxu0 %v767
        %v1163 = vpop.f32.mrf.mxu0
        %v1164 = vadd.f32 0.0, %v1163
        %v1165 = vpop.f32.mrf.mxu0
        %v1166 = vadd.f32 0.0, %v1165
        %1167 = vmatprep.mubr.f32.mxu0 0.0
        %1168 = vmatmul.mubr.f32.gmra.mxu0 %v772
        %v1169 = vpop.f32.mrf.mxu0
        %v1170 = vadd.f32 0.0, %v1169
        %v1171 = vpop.f32.mrf.mxu0
        %v1172 = vadd.f32 0.0, %v1171
        %1173 = vmatprep.mubr.f32.mxu0 0.0
        %1174 = vmatmul.mubr.f32.gmra.mxu0 %v777
        %v1175 = vpop.f32.mrf.mxu0
        %v1176 = vadd.f32 0.0, %v1175
        %v1177 = vpop.f32.mrf.mxu0
        %v1178 = vadd.f32 0.0, %v1177
        %1179 = vmatprep.mubr.f32.mxu0 0.0
        %1180 = vmatmul.mubr.f32.gmra.mxu0 %v782
        %v1181 = vpop.f32.mrf.mxu0
        %v1182 = vadd.f32 0.0, %v1181
        %v1183 = vpop.f32.mrf.mxu0
        %v1184 = vadd.f32 0.0, %v1183
        %1185 = vmatprep.mubr.f32.mxu0 0.0
        %1186 = vmatmul.mubr.f32.gmra.mxu0 %v787
        %v1187 = vpop.f32.mrf.mxu0
        %v1188 = vadd.f32 0.0, %v1187
        %v1189 = vpop.f32.mrf.mxu0
        %v1190 = vadd.f32 0.0, %v1189
        %1191 = vdwg.mxu0
        %v1192 = vmax.f32 %v1146, %v1148
        %1193 = vmax.xlane.f32.xlu0 %v1192
        %v1194 = vpop.xlane.xlu0 %1193
        %v1195 = vmax.f32 %v1152, %v1154
        %1196 = vmax.xlane.f32.xlu0 %v1195
        %v1197 = vpop.xlane.xlu0 %1196
        %v1198 = vmax.f32 %v1158, %v1160
        %1199 = vmax.xlane.f32.xlu0 %v1198
        %v1200 = vpop.xlane.xlu0 %1199
        %v1201 = vmax.f32 %v1164, %v1166
        %1202 = vmax.xlane.f32.xlu0 %v1201
        %v1203 = vpop.xlane.xlu0 %1202
        %v1204 = vmax.f32 %v1170, %v1172
        %1205 = vmax.xlane.f32.xlu0 %v1204
        %v1206 = vpop.xlane.xlu0 %1205
        %v1207 = vmax.f32 %v1176, %v1178
        %1208 = vmax.xlane.f32.xlu0 %v1207
        %v1209 = vpop.xlane.xlu0 %1208
        %v1210 = vmax.f32 %v1182, %v1184
        %1211 = vmax.xlane.f32.xlu0 %v1210
        %v1212 = vpop.xlane.xlu0 %1211
        %v1213 = vmax.f32 %v1188, %v1190
        %1214 = vmax.xlane.f32.xlu0 %v1213
        %v1215 = vpop.xlane.xlu0 %1214
        %v1216 = vsub.f32 %v1146, %v1194
        %v1217 = vsub.f32 %v1148, %v1194
        %v1218 = vsub.f32 %v1152, %v1197
        %v1219 = vsub.f32 %v1154, %v1197
        %v1220 = vsub.f32 %v1158, %v1200
        %v1221 = vsub.f32 %v1160, %v1200
        %v1222 = vsub.f32 %v1164, %v1203
        %v1223 = vsub.f32 %v1166, %v1203
        %v1224 = vsub.f32 %v1170, %v1206
        %v1225 = vsub.f32 %v1172, %v1206
        %v1226 = vsub.f32 %v1176, %v1209
        %v1227 = vsub.f32 %v1178, %v1209
        %v1228 = vsub.f32 %v1182, %v1212
        %v1229 = vsub.f32 %v1184, %v1212
        %v1230 = vsub.f32 %v1188, %v1215
        %v1231 = vsub.f32 %v1190, %v1215
        %v1232 = vmul.f32 %v1216, 1.442695
        %v1233 = vpow.pop %v1232
        %v1234 = vmul.f32 %v1217, 1.442695
        %v1235 = vpow.pop %v1234
        %v1236 = vmul.f32 %v1218, 1.442695
        %v1237 = vpow.pop %v1236
        %v1238 = vmul.f32 %v1219, 1.442695
        %v1239 = vpow.pop %v1238
        %v1240 = vmul.f32 %v1220, 1.442695
        %v1241 = vpow.pop %v1240
        %v1242 = vmul.f32 %v1221, 1.442695
        %v1243 = vpow.pop %v1242
        %v1244 = vmul.f32 %v1222, 1.442695
        %v1245 = vpow.pop %v1244
        %v1246 = vmul.f32 %v1223, 1.442695
        %v1247 = vpow.pop %v1246
        %v1248 = vmul.f32 %v1224, 1.442695
        %v1249 = vpow.pop %v1248
        %v1250 = vmul.f32 %v1225, 1.442695
        %v1251 = vpow.pop %v1250
        %v1252 = vmul.f32 %v1226, 1.442695
        %v1253 = vpow.pop %v1252
        %v1254 = vmul.f32 %v1227, 1.442695
        %v1255 = vpow.pop %v1254
        %v1256 = vmul.f32 %v1228, 1.442695
        %v1257 = vpow.pop %v1256
        %v1258 = vmul.f32 %v1229, 1.442695
        %v1259 = vpow.pop %v1258
        %v1260 = vmul.f32 %v1230, 1.442695
        %v1261 = vpow.pop %v1260
        %v1262 = vmul.f32 %v1231, 1.442695
        %v1263 = vpow.pop %v1262
        %v1264 = vadd.f32 %v1233, %v1235
        %1265 = vadd.xlane.f32.xlu0 %v1264
        %v1266 = vpop.xlane.xlu0 %1265
        %v1267 = vadd.f32 %v1237, %v1239
        %1268 = vadd.xlane.f32.xlu0 %v1267
        %v1269 = vpop.xlane.xlu0 %1268
        %v1270 = vadd.f32 %v1241, %v1243
        %1271 = vadd.xlane.f32.xlu0 %v1270
        %v1272 = vpop.xlane.xlu0 %1271
        %v1273 = vadd.f32 %v1245, %v1247
        %1274 = vadd.xlane.f32.xlu0 %v1273
        %v1275 = vpop.xlane.xlu0 %1274
        %v1276 = vadd.f32 %v1249, %v1251
        %1277 = vadd.xlane.f32.xlu0 %v1276
        %v1278 = vpop.xlane.xlu0 %1277
        %v1279 = vadd.f32 %v1253, %v1255
        %1280 = vadd.xlane.f32.xlu0 %v1279
        %v1281 = vpop.xlane.xlu0 %1280
        %v1282 = vadd.f32 %v1257, %v1259
        %1283 = vadd.xlane.f32.xlu0 %v1282
        %v1284 = vpop.xlane.xlu0 %1283
        %v1285 = vadd.f32 %v1261, %v1263
        %1286 = vadd.xlane.f32.xlu0 %v1285
        %v1287 = vpop.xlane.xlu0 %1286
        %1288 = vmatprep.subr.mxu0 0.0
        %1289 = vmatpush1.msra.mxu0 %v981
        %1290 = vmatprep.subr.mxu0 0.0
        %1291 = vmatpush1.msra.mxu0 %v975
        %1292 = vmatprep.subr.mxu0 0.0
        %1293 = vmatpush1.msra.mxu0 %v969
        %1294 = vmatprep.subr.mxu0 0.0
        %1295 = vmatpush1.msra.mxu0 %v963
        %1296 = vmatprep.subr.mxu0 0.0
        %1297 = vmatpush1.msra.mxu0 %v957
        %1298 = vmatprep.subr.mxu0 0.0
        %1299 = vmatpush1.msra.mxu0 %v951
        %1300 = vmatprep.subr.mxu0 0.0
        %1301 = vmatpush1.msra.mxu0 %v945
        %1302 = vmatprep.subr.mxu0 0.0
        %1303 = vmatpush1.msra.mxu0 %v939
        %1304 = vmatprep.subr.mxu0 0.0
        %1305 = vmatpush1.msra.mxu0 %v933
        %1306 = vmatprep.subr.mxu0 0.0
        %1307 = vmatpush1.msra.mxu0 %v927
        %1308 = vmatprep.subr.mxu0 0.0
        %1309 = vmatpush1.msra.mxu0 %v921
        %1310 = vmatprep.subr.mxu0 0.0
        %1311 = vmatpush1.msra.mxu0 %v915
        %1312 = vmatprep.subr.mxu0 0.0
        %1313 = vmatpush1.msra.mxu0 %v909
        %1314 = vmatprep.subr.mxu0 0.0
        %1315 = vmatpush1.msra.mxu0 %v903
        %1316 = vmatprep.subr.mxu0 0.0
        %1317 = vmatpush1.msra.mxu0 %v897
        %1318 = vmatprep.subr.mxu0 0.0
        %1319 = vmatpush1.msra.mxu0 %v891
        %1320 = vmatprep.subr.mxu0 0.0
        %1321 = vmatpush2.msra.mxu0 %v1077
        %1322 = vmatprep.subr.mxu0 0.0
        %1323 = vmatpush2.msra.mxu0 %v1071
        %1324 = vmatprep.subr.mxu0 0.0
        %1325 = vmatpush2.msra.mxu0 %v1065
        %1326 = vmatprep.subr.mxu0 0.0
        %1327 = vmatpush2.msra.mxu0 %v1059
        %1328 = vmatprep.subr.mxu0 0.0
        %1329 = vmatpush2.msra.mxu0 %v1053
        %1330 = vmatprep.subr.mxu0 0.0
        %1331 = vmatpush2.msra.mxu0 %v1047
        %1332 = vmatprep.subr.mxu0 0.0
        %1333 = vmatpush2.msra.mxu0 %v1041
        %1334 = vmatprep.subr.mxu0 0.0
        %1335 = vmatpush2.msra.mxu0 %v1035
        %1336 = vmatprep.subr.mxu0 0.0
        %1337 = vmatpush2.msra.mxu0 %v1029
        %1338 = vmatprep.subr.mxu0 0.0
        %1339 = vmatpush2.msra.mxu0 %v1023
        %1340 = vmatprep.subr.mxu0 0.0
        %1341 = vmatpush2.msra.mxu0 %v1017
        %1342 = vmatprep.subr.mxu0 0.0
        %1343 = vmatpush2.msra.mxu0 %v1011
        %1344 = vmatprep.subr.mxu0 0.0
        %1345 = vmatpush2.msra.mxu0 %v1005
        %1346 = vmatprep.subr.mxu0 0.0
        %1347 = vmatpush2.msra.mxu0 %v999
        %1348 = vmatprep.subr.mxu0 0.0
        %1349 = vmatpush2.msra.mxu0 %v993
        %1350 = vmatprep.subr.mxu0 0.0
        %1351 = vmatpush2.msra.mxu0 %v987
        %1352 = vmatprep.mubr.f32.mxu0 %v1235
        %1353 = vmatmul.mubr.f32.gmra.mxu0 %v1233
        %v1354 = vpop.f32.mrf.mxu0
        %v1355 = vadd.f32 0.0, %v1354
        %v1356 = vpop.f32.mrf.mxu0
        %1357 = vmatprep.mubr.f32.mxu0 %v1239
        %1358 = vmatmul.mubr.f32.gmra.mxu0 %v1237
        %v1359 = vpop.f32.mrf.mxu0
        %v1360 = vadd.f32 0.0, %v1359
        %v1361 = vpop.f32.mrf.mxu0
        %1362 = vmatprep.mubr.f32.mxu0 %v1243
        %1363 = vmatmul.mubr.f32.gmra.mxu0 %v1241
        %v1364 = vpop.f32.mrf.mxu0
        %v1365 = vadd.f32 0.0, %v1364
        %v1366 = vpop.f32.mrf.mxu0
        %1367 = vmatprep.mubr.f32.mxu0 %v1247
        %1368 = vmatmul.mubr.f32.gmra.mxu0 %v1245
        %v1369 = vpop.f32.mrf.mxu0
        %v1370 = vadd.f32 0.0, %v1369
        %v1371 = vpop.f32.mrf.mxu0
        %1372 = vmatprep.mubr.f32.mxu0 %v1251
        %1373 = vmatmul.mubr.f32.gmra.mxu0 %v1249
        %v1374 = vpop.f32.mrf.mxu0
        %v1375 = vadd.f32 0.0, %v1374
        %v1376 = vpop.f32.mrf.mxu0
        %1377 = vmatprep.mubr.f32.mxu0 %v1255
        %1378 = vmatmul.mubr.f32.gmra.mxu0 %v1253
        %v1379 = vpop.f32.mrf.mxu0
        %v1380 = vadd.f32 0.0, %v1379
        %v1381 = vpop.f32.mrf.mxu0
        %1382 = vmatprep.mubr.f32.mxu0 %v1259
        %1383 = vmatmul.mubr.f32.gmra.mxu0 %v1257
        %v1384 = vpop.f32.mrf.mxu0
        %v1385 = vadd.f32 0.0, %v1384
        %v1386 = vpop.f32.mrf.mxu0
        %1387 = vmatprep.mubr.f32.mxu0 %v1263
        %1388 = vmatmul.mubr.f32.gmra.mxu0 %v1261
        %v1389 = vpop.f32.mrf.mxu0
        %v1390 = vadd.f32 0.0, %v1389
        %v1391 = vpop.f32.mrf.mxu0
        %1392 = vdwg.mxu0
        %v1393 = vrcp.pop %v1266
        %v1394 = vrcp.pop %v1269
        %v1395 = vrcp.pop %v1272
        %v1396 = vrcp.pop %v1275
        %v1397 = vrcp.pop %v1278
        %v1398 = vrcp.pop %v1281
        %v1399 = vrcp.pop %v1284
        %v1400 = vrcp.pop %v1287
        %v1401 = vmul.f32 %v1355, %v1393
        %v1402 = vmul.f32 %v1360, %v1394
        %v1403 = vmul.f32 %v1365, %v1395
        %v1404 = vmul.f32 %v1370, %v1396
        %v1405 = vmul.f32 %v1375, %v1397
        %v1406 = vmul.f32 %v1380, %v1398
        %v1407 = vmul.f32 %v1385, %v1399
        %v1408 = vmul.f32 %v1390, %v1400
        %v1409 = vld [vmem:[%s8] sm:$0xff]
        %v1410 = vld [vmem:[%s8 + $0x8] sm:$0xff]
        %v1411 = vld [vmem:[%s8 + $0x10] sm:$0xff]
        %v1412 = vld [vmem:[%s8 + $0x18] sm:$0xff]
        %v1413 = vld [vmem:[%s8 + $0x20] sm:$0xff]
        %v1414 = vld [vmem:[%s8 + $0x28] sm:$0xff]
        %v1415 = vld [vmem:[%s8 + $0x30] sm:$0xff]
        %v1416 = vld [vmem:[%s8 + $0x38] sm:$0xff]
        %v1417 = vld [vmem:[%s8 + $0x40] sm:$0xff]
        %v1418 = vld [vmem:[%s8 + $0x48] sm:$0xff]
        %v1419 = vld [vmem:[%s8 + $0x50] sm:$0xff]
        %v1420 = vld [vmem:[%s8 + $0x58] sm:$0xff]
        %v1421 = vld [vmem:[%s8 + $0x60] sm:$0xff]
        %v1422 = vld [vmem:[%s8 + $0x68] sm:$0xff]
        %v1423 = vld [vmem:[%s8 + $0x70] sm:$0xff]
        %v1424 = vld [vmem:[%s8 + $0x78] sm:$0xff]
        %1425 = vmatprep.subr.mxu0 0.0
        %1426 = vmatpush1.msra.mxu0 %v1424
        %1427 = vmatprep.subr.mxu0 0.0
        %1428 = vmatpush1.msra.mxu0 %v1423
        %1429 = vmatprep.subr.mxu0 0.0
        %1430 = vmatpush1.msra.mxu0 %v1422
        %1431 = vmatprep.subr.mxu0 0.0
        %1432 = vmatpush1.msra.mxu0 %v1421
        %1433 = vmatprep.subr.mxu0 0.0
        %1434 = vmatpush1.msra.mxu0 %v1420
        %1435 = vmatprep.subr.mxu0 0.0
        %1436 = vmatpush1.msra.mxu0 %v1419
        %1437 = vmatprep.subr.mxu0 0.0
        %1438 = vmatpush1.msra.mxu0 %v1418
        %1439 = vmatprep.subr.mxu0 0.0
        %1440 = vmatpush1.msra.mxu0 %v1417
        %1441 = vmatprep.subr.mxu0 0.0
        %1442 = vmatpush1.msra.mxu0 %v1416
        %1443 = vmatprep.subr.mxu0 0.0
        %1444 = vmatpush1.msra.mxu0 %v1415
        %1445 = vmatprep.subr.mxu0 0.0
        %1446 = vmatpush1.msra.mxu0 %v1414
        %1447 = vmatprep.subr.mxu0 0.0
        %1448 = vmatpush1.msra.mxu0 %v1413
        %1449 = vmatprep.subr.mxu0 0.0
        %1450 = vmatpush1.msra.mxu0 %v1412
        %1451 = vmatprep.subr.mxu0 0.0
        %1452 = vmatpush1.msra.mxu0 %v1411
        %1453 = vmatprep.subr.mxu0 0.0
        %1454 = vmatpush1.msra.mxu0 %v1410
        %1455 = vmatprep.subr.mxu0 0.0
        %1456 = vmatpush1.msra.mxu0 %v1409
        %1457 = vmatprep.subr.mxu0 0.0
        %1458 = vmatpush2.msra.mxu0 0.0
        %1459 = vmatprep.subr.mxu0 0.0
        %1460 = vmatpush2.msra.mxu0 0.0
        %1461 = vmatprep.subr.mxu0 0.0
        %1462 = vmatpush2.msra.mxu0 0.0
        %1463 = vmatprep.subr.mxu0 0.0
        %1464 = vmatpush2.msra.mxu0 0.0
        %1465 = vmatprep.subr.mxu0 0.0
        %1466 = vmatpush2.msra.mxu0 0.0
        %1467 = vmatprep.subr.mxu0 0.0
        %1468 = vmatpush2.msra.mxu0 0.0
        %1469 = vmatprep.subr.mxu0 0.0
        %1470 = vmatpush2.msra.mxu0 0.0
        %1471 = vmatprep.subr.mxu0 0.0
        %1472 = vmatpush2.msra.mxu0 0.0
        %1473 = vmatprep.subr.mxu0 0.0
        %1474 = vmatpush2.msra.mxu0 0.0
        %1475 = vmatprep.subr.mxu0 0.0
        %1476 = vmatpush2.msra.mxu0 0.0
        %1477 = vmatprep.subr.mxu0 0.0
        %1478 = vmatpush2.msra.mxu0 0.0
        %1479 = vmatprep.subr.mxu0 0.0
        %1480 = vmatpush2.msra.mxu0 0.0
        %1481 = vmatprep.subr.mxu0 0.0
        %1482 = vmatpush2.msra.mxu0 0.0
        %1483 = vmatprep.subr.mxu0 0.0
        %1484 = vmatpush2.msra.mxu0 0.0
        %1485 = vmatprep.subr.mxu0 0.0
        %1486 = vmatpush2.msra.mxu0 0.0
        %1487 = vmatprep.subr.mxu0 0.0
        %1488 = vmatpush2.msra.mxu0 0.0
        %1489 = vmatprep.mubr.f32.mxu0 0.0
        %1490 = vmatmul.mubr.f32.gmra.mxu0 %v1401
        %v1491 = vpop.f32.mrf.mxu0
        %v1492 = vadd.f32 0.0, %v1491
        %v1493 = vpop.f32.mrf.mxu0
        %1494 = vmatprep.mubr.f32.mxu0 0.0
        %1495 = vmatmul.mubr.f32.gmra.mxu0 %v1402
        %v1496 = vpop.f32.mrf.mxu0
        %v1497 = vadd.f32 0.0, %v1496
        %v1498 = vpop.f32.mrf.mxu0
        %1499 = vmatprep.mubr.f32.mxu0 0.0
        %1500 = vmatmul.mubr.f32.gmra.mxu0 %v1403
        %v1501 = vpop.f32.mrf.mxu0
        %v1502 = vadd.f32 0.0, %v1501
        %v1503 = vpop.f32.mrf.mxu0
        %1504 = vmatprep.mubr.f32.mxu0 0.0
        %1505 = vmatmul.mubr.f32.gmra.mxu0 %v1404
        %v1506 = vpop.f32.mrf.mxu0
        %v1507 = vadd.f32 0.0, %v1506
        %v1508 = vpop.f32.mrf.mxu0
        %1509 = vmatprep.mubr.f32.mxu0 0.0
        %1510 = vmatmul.mubr.f32.gmra.mxu0 %v1405
        %v1511 = vpop.f32.mrf.mxu0
        %v1512 = vadd.f32 0.0, %v1511
        %v1513 = vpop.f32.mrf.mxu0
        %1514 = vmatprep.mubr.f32.mxu0 0.0
        %1515 = vmatmul.mubr.f32.gmra.mxu0 %v1406
        %v1516 = vpop.f32.mrf.mxu0
        %v1517 = vadd.f32 0.0, %v1516
        %v1518 = vpop.f32.mrf.mxu0
        %1519 = vmatprep.mubr.f32.mxu0 0.0
        %1520 = vmatmul.mubr.f32.gmra.mxu0 %v1407
        %v1521 = vpop.f32.mrf.mxu0
        %v1522 = vadd.f32 0.0, %v1521
        %v1523 = vpop.f32.mrf.mxu0
        %1524 = vmatprep.mubr.f32.mxu0 0.0
        %1525 = vmatmul.mubr.f32.gmra.mxu0 %v1408
        %v1526 = vpop.f32.mrf.mxu0
        %v1527 = vadd.f32 0.0, %v1526
        %v1528 = vpop.f32.mrf.mxu0
        %1529 = vdwg.mxu0
        %v1530 = vadd.f32 %v607, %v1492
        %v1531 = vadd.f32 %v612, %v1497
        %v1532 = vadd.f32 %v617, %v1502
        %v1533 = vadd.f32 %v622, %v1507
        %v1534 = vadd.f32 %v627, %v1512
        %v1535 = vadd.f32 %v632, %v1517
        %v1536 = vadd.f32 %v637, %v1522
        %v1537 = vadd.f32 %v642, %v1527
        %v1538 = vld [vmem:[%s9] sm:$0xff]
        %v1539 = vld [vmem:[%s9 + $0x8] sm:$0xff]
        %v1540 = vld [vmem:[%s9 + $0x10] sm:$0xff]
        %v1541 = vld [vmem:[%s9 + $0x18] sm:$0xff]
        %v1542 = vld [vmem:[%s9 + $0x20] sm:$0xff]
        %v1543 = vld [vmem:[%s9 + $0x28] sm:$0xff]
        %v1544 = vld [vmem:[%s9 + $0x30] sm:$0xff]
        %v1545 = vld [vmem:[%s9 + $0x38] sm:$0xff]
        %v1546 = vld [vmem:[%s9 + $0x40] sm:$0xff]
        %v1547 = vld [vmem:[%s9 + $0x48] sm:$0xff]
        %v1548 = vld [vmem:[%s9 + $0x50] sm:$0xff]
        %v1549 = vld [vmem:[%s9 + $0x58] sm:$0xff]
        %v1550 = vld [vmem:[%s9 + $0x60] sm:$0xff]
        %v1551 = vld [vmem:[%s9 + $0x68] sm:$0xff]
        %v1552 = vld [vmem:[%s9 + $0x70] sm:$0xff]
        %v1553 = vld [vmem:[%s9 + $0x78] sm:$0xff]
        %1554 = vmatprep.subr.mxu0 0.0
        %1555 = vmatpush1.msra.mxu0 %v1553
        %1556 = vmatprep.subr.mxu0 0.0
        %1557 = vmatpush1.msra.mxu0 %v1552
        %1558 = vmatprep.subr.mxu0 0.0
        %1559 = vmatpush1.msra.mxu0 %v1551
        %1560 = vmatprep.subr.mxu0 0.0
        %1561 = vmatpush1.msra.mxu0 %v1550
        %1562 = vmatprep.subr.mxu0 0.0
        %1563 = vmatpush1.msra.mxu0 %v1549
        %1564 = vmatprep.subr.mxu0 0.0
        %1565 = vmatpush1.msra.mxu0 %v1548
        %1566 = vmatprep.subr.mxu0 0.0
        %1567 = vmatpush1.msra.mxu0 %v1547
        %1568 = vmatprep.subr.mxu0 0.0
        %1569 = vmatpush1.msra.mxu0 %v1546
        %1570 = vmatprep.subr.mxu0 0.0
        %1571 = vmatpush1.msra.mxu0 %v1545
        %1572 = vmatprep.subr.mxu0 0.0
        %1573 = vmatpush1.msra.mxu0 %v1544
        %1574 = vmatprep.subr.mxu0 0.0
        %1575 = vmatpush1.msra.mxu0 %v1543
        %1576 = vmatprep.subr.mxu0 0.0
        %1577 = vmatpush1.msra.mxu0 %v1542
        %1578 = vmatprep.subr.mxu0 0.0
        %1579 = vmatpush1.msra.mxu0 %v1541
        %1580 = vmatprep.subr.mxu0 0.0
        %1581 = vmatpush1.msra.mxu0 %v1540
        %1582 = vmatprep.subr.mxu0 0.0
        %1583 = vmatpush1.msra.mxu0 %v1539
        %1584 = vmatprep.subr.mxu0 0.0
        %1585 = vmatpush1.msra.mxu0 %v1538
        %1586 = vmatprep.subr.mxu0 0.0
        %1587 = vmatpush2.msra.mxu0 0.0
        %1588 = vmatprep.subr.mxu0 0.0
        %1589 = vmatpush2.msra.mxu0 0.0
        %1590 = vmatprep.subr.mxu0 0.0
        %1591 = vmatpush2.msra.mxu0 0.0
        %1592 = vmatprep.subr.mxu0 0.0
        %1593 = vmatpush2.msra.mxu0 0.0
        %1594 = vmatprep.subr.mxu0 0.0
        %1595 = vmatpush2.msra.mxu0 0.0
        %1596 = vmatprep.subr.mxu0 0.0
        %1597 = vmatpush2.msra.mxu0 0.0
        %1598 = vmatprep.subr.mxu0 0.0
        %1599 = vmatpush2.msra.mxu0 0.0
        %1600 = vmatprep.subr.mxu0 0.0
        %1601 = vmatpush2.msra.mxu0 0.0
        %1602 = vmatprep.subr.mxu0 0.0
        %1603 = vmatpush2.msra.mxu0 0.0
        %1604 = vmatprep.subr.mxu0 0.0
        %1605 = vmatpush2.msra.mxu0 0.0
        %1606 = vmatprep.subr.mxu0 0.0
        %1607 = vmatpush2.msra.mxu0 0.0
        %1608 = vmatprep.subr.mxu0 0.0
        %1609 = vmatpush2.msra.mxu0 0.0
        %1610 = vmatprep.subr.mxu0 0.0
        %1611 = vmatpush2.msra.mxu0 0.0
        %1612 = vmatprep.subr.mxu0 0.0
        %1613 = vmatpush2.msra.mxu0 0.0
        %1614 = vmatprep.subr.mxu0 0.0
        %1615 = vmatpush2.msra.mxu0 0.0
        %1616 = vmatprep.subr.mxu0 0.0
        %1617 = vmatpush2.msra.mxu0 0.0
        %1618 = vmatprep.mubr.f32.mxu0 0.0
        %1619 = vmatmul.mubr.f32.gmra.mxu0 %v1530
        %v1620 = vpop.f32.mrf.mxu0
        %v1621 = vadd.f32 0.0, %v1620
        %v1622 = vpop.f32.mrf.mxu0
        %1623 = vmatprep.mubr.f32.mxu0 0.0
        %1624 = vmatmul.mubr.f32.gmra.mxu0 %v1531
        %v1625 = vpop.f32.mrf.mxu0
        %v1626 = vadd.f32 0.0, %v1625
        %v1627 = vpop.f32.mrf.mxu0
        %1628 = vmatprep.mubr.f32.mxu0 0.0
        %1629 = vmatmul.mubr.f32.gmra.mxu0 %v1532
        %v1630 = vpop.f32.mrf.mxu0
        %v1631 = vadd.f32 0.0, %v1630
        %v1632 = vpop.f32.mrf.mxu0
        %1633 = vmatprep.mubr.f32.mxu0 0.0
        %1634 = vmatmul.mubr.f32.gmra.mxu0 %v1533
        %v1635 = vpop.f32.mrf.mxu0
        %v1636 = vadd.f32 0.0, %v1635
        %v1637 = vpop.f32.mrf.mxu0
        %1638 = vmatprep.mubr.f32.mxu0 0.0
        %1639 = vmatmul.mubr.f32.gmra.mxu0 %v1534
        %v1640 = vpop.f32.mrf.mxu0
        %v1641 = vadd.f32 0.0, %v1640
        %v1642 = vpop.f32.mrf.mxu0
        %1643 = vmatprep.mubr.f32.mxu0 0.0
        %1644 = vmatmul.mubr.f32.gmra.mxu0 %v1535
        %v1645 = vpop.f32.mrf.mxu0
        %v1646 = vadd.f32 0.0, %v1645
        %v1647 = vpop.f32.mrf.mxu0
        %1648 = vmatprep.mubr.f32.mxu0 0.0
        %1649 = vmatmul.mubr.f32.gmra.mxu0 %v1536
        %v1650 = vpop.f32.mrf.mxu0
        %v1651 = vadd.f32 0.0, %v1650
        %v1652 = vpop.f32.mrf.mxu0
        %1653 = vmatprep.mubr.f32.mxu0 0.0
        %1654 = vmatmul.mubr.f32.gmra.mxu0 %v1537
        %v1655 = vpop.f32.mrf.mxu0
        %v1656 = vadd.f32 0.0, %v1655
        %v1657 = vpop.f32.mrf.mxu0
        %1658 = vdwg.mxu0
        %v1659 = vld [vmem:[%s481] sm:$0xff]
        %v1660 = vld [vmem:[%s10] sm:$0xff]
        %v1661 = vld [vmem:[%s10 + $0x8] sm:$0xff]
        %v1662 = vld [vmem:[%s10 + $0x10] sm:$0xff]
        %v1663 = vld [vmem:[%s10 + $0x18] sm:$0xff]
        %v1664 = vld [vmem:[%s10 + $0x20] sm:$0xff]
        %v1665 = vld [vmem:[%s10 + $0x28] sm:$0xff]
        %v1666 = vld [vmem:[%s10 + $0x30] sm:$0xff]
        %v1667 = vld [vmem:[%s10 + $0x38] sm:$0xff]
        %v1668 = vld [vmem:[%s10 + $0x40] sm:$0xff]
        %v1669 = vld [vmem:[%s10 + $0x48] sm:$0xff]
        %v1670 = vld [vmem:[%s10 + $0x50] sm:$0xff]
        %v1671 = vld [vmem:[%s10 + $0x58] sm:$0xff]
        %v1672 = vld [vmem:[%s10 + $0x60] sm:$0xff]
        %v1673 = vld [vmem:[%s10 + $0x68] sm:$0xff]
        %v1674 = vld [vmem:[%s10 + $0x70] sm:$0xff]
        %v1675 = vld [vmem:[%s10 + $0x78] sm:$0xff]
        %v1676 = vld [vmem:[%s10 + $0x80] sm:$0xff]
        %v1677 = vld [vmem:[%s10 + $0x88] sm:$0xff]
        %v1678 = vld [vmem:[%s10 + $0x90] sm:$0xff]
        %v1679 = vld [vmem:[%s10 + $0x98] sm:$0xff]
        %v1680 = vld [vmem:[%s10 + $0xa0] sm:$0xff]
        %v1681 = vld [vmem:[%s10 + $0xa8] sm:$0xff]
        %v1682 = vld [vmem:[%s10 + $0xb0] sm:$0xff]
        %v1683 = vld [vmem:[%s10 + $0xb8] sm:$0xff]
        %v1684 = vld [vmem:[%s10 + $0xc0] sm:$0xff]
        %v1685 = vld [vmem:[%s10 + $0xc8] sm:$0xff]
        %v1686 = vld [vmem:[%s10 + $0xd0] sm:$0xff]
        %v1687 = vld [vmem:[%s10 + $0xd8] sm:$0xff]
        %v1688 = vld [vmem:[%s10 + $0xe0] sm:$0xff]
        %v1689 = vld [vmem:[%s10 + $0xe8] sm:$0xff]
        %v1690 = vld [vmem:[%s10 + $0xf0] sm:$0xff]
        %v1691 = vld [vmem:[%s10 + $0xf8] sm:$0xff]
        %1692 = vmatprep.subr.mxu0 %v1691
        %1693 = vmatpush1.msra.mxu0 %v1690
        %1694 = vmatprep.subr.mxu0 %v1689
        %1695 = vmatpush1.msra.mxu0 %v1688
        %1696 = vmatprep.subr.mxu0 %v1687
        %1697 = vmatpush1.msra.mxu0 %v1686
        %1698 = vmatprep.subr.mxu0 %v1685
        %1699 = vmatpush1.msra.mxu0 %v1684
        %1700 = vmatprep.subr.mxu0 %v1683
        %1701 = vmatpush1.msra.mxu0 %v1682
        %1702 = vmatprep.subr.mxu0 %v1681
        %1703 = vmatpush1.msra.mxu0 %v1680
        %1704 = vmatprep.subr.mxu0 %v1679
        %1705 = vmatpush1.msra.mxu0 %v1678
        %1706 = vmatprep.subr.mxu0 %v1677
        %1707 = vmatpush1.msra.mxu0 %v1676
        %1708 = vmatprep.subr.mxu0 %v1675
        %1709 = vmatpush1.msra.mxu0 %v1674
        %1710 = vmatprep.subr.mxu0 %v1673
        %1711 = vmatpush1.msra.mxu0 %v1672
        %1712 = vmatprep.subr.mxu0 %v1671
        %1713 = vmatpush1.msra.mxu0 %v1670
        %1714 = vmatprep.subr.mxu0 %v1669
        %1715 = vmatpush1.msra.mxu0 %v1668
        %1716 = vmatprep.subr.mxu0 %v1667
        %1717 = vmatpush1.msra.mxu0 %v1666
        %1718 = vmatprep.subr.mxu0 %v1665
        %1719 = vmatpush1.msra.mxu0 %v1664
        %1720 = vmatprep.subr.mxu0 %v1663
        %1721 = vmatpush1.msra.mxu0 %v1662
        %1722 = vmatprep.subr.mxu0 %v1661
        %1723 = vmatpush1.msra.mxu0 %v1660
        %1724 = vmatprep.subr.mxu0 0.0
        %1725 = vmatpush2.msra.mxu0 0.0
        %1726 = vmatprep.subr.mxu0 0.0
        %1727 = vmatpush2.msra.mxu0 0.0
        %1728 = vmatprep.subr.mxu0 0.0
        %1729 = vmatpush2.msra.mxu0 0.0
        %1730 = vmatprep.subr.mxu0 0.0
        %1731 = vmatpush2.msra.mxu0 0.0
        %1732 = vmatprep.subr.mxu0 0.0
        %1733 = vmatpush2.msra.mxu0 0.0
        %1734 = vmatprep.subr.mxu0 0.0
        %1735 = vmatpush2.msra.mxu0 0.0
        %1736 = vmatprep.subr.mxu0 0.0
        %1737 = vmatpush2.msra.mxu0 0.0
        %1738 = vmatprep.subr.mxu0 0.0
        %1739 = vmatpush2.msra.mxu0 0.0
        %1740 = vmatprep.subr.mxu0 0.0
        %1741 = vmatpush2.msra.mxu0 0.0
        %1742 = vmatprep.subr.mxu0 0.0
        %1743 = vmatpush2.msra.mxu0 0.0
        %1744 = vmatprep.subr.mxu0 0.0
        %1745 = vmatpush2.msra.mxu0 0.0
        %1746 = vmatprep.subr.mxu0 0.0
        %1747 = vmatpush2.msra.mxu0 0.0
        %1748 = vmatprep.subr.mxu0 0.0
        %1749 = vmatpush2.msra.mxu0 0.0
        %1750 = vmatprep.subr.mxu0 0.0
        %1751 = vmatpush2.msra.mxu0 0.0
        %1752 = vmatprep.subr.mxu0 0.0
        %1753 = vmatpush2.msra.mxu0 0.0
        %1754 = vmatprep.subr.mxu0 0.0
        %1755 = vmatpush2.msra.mxu0 0.0
        %1756 = vmatprep.mubr.f32.mxu0 0.0
        %1757 = vmatmul.mubr.f32.gmra.mxu0 %v1659
        %v1758 = vpop.f32.mrf.mxu0
        %v1759 = vadd.f32 0.0, %v1758
        %v1760 = vpop.f32.mrf.mxu0
        %v1761 = vadd.f32 0.0, %v1760
        %1762 = vdwg.mxu0
        %1763 = vmatprep.subr.mxu0 0.0
        %1764 = vmatpush1.xpose.msra.mxu0 0.0
        %1765 = vmatprep.subr.mxu0 0.0
        %1766 = vmatpush1.xpose.msra.mxu0 0.0
        %1767 = vmatprep.subr.mxu0 0.0
        %1768 = vmatpush1.xpose.msra.mxu0 0.0
        %1769 = vmatprep.subr.mxu0 0.0
        %1770 = vmatpush1.xpose.msra.mxu0 0.0
        %1771 = vmatprep.subr.mxu0 0.0
        %1772 = vmatpush1.xpose.msra.mxu0 0.0
        %1773 = vmatprep.subr.mxu0 0.0
        %1774 = vmatpush1.xpose.msra.mxu0 0.0
        %1775 = vmatprep.subr.mxu0 0.0
        %1776 = vmatpush1.xpose.msra.mxu0 0.0
        %1777 = vmatprep.subr.mxu0 0.0
        %1778 = vmatpush1.xpose.msra.mxu0 0.0
        %1779 = vmatprep.subr.mxu0 0.0
        %1780 = vmatpush1.xpose.msra.mxu0 0.0
        %1781 = vmatprep.subr.mxu0 0.0
        %1782 = vmatpush1.xpose.msra.mxu0 0.0
        %1783 = vmatprep.subr.mxu0 0.0
        %1784 = vmatpush1.xpose.msra.mxu0 0.0
        %1785 = vmatprep.subr.mxu0 0.0
        %1786 = vmatpush1.xpose.msra.mxu0 0.0
        %1787 = vmatprep.subr.mxu0 0.0
        %1788 = vmatpush1.xpose.msra.mxu0 0.0
        %1789 = vmatprep.subr.mxu0 0.0
        %1790 = vmatpush1.xpose.msra.mxu0 0.0
        %1791 = vmatprep.subr.mxu0 0.0
        %1792 = vmatpush1.xpose.msra.mxu0 0.0
        %1793 = vmatprep.subr.mxu0 0.0
        %1794 = vmatpush1.xpose.msra.mxu0 %v1759
        %1795 = vmatprep.subr.mxu0 0.0
        %1796 = vmatpush2.xpose.msra.mxu0 0.0
        %1797 = vmatprep.subr.mxu0 0.0
        %1798 = vmatpush2.xpose.msra.mxu0 0.0
        %1799 = vmatprep.subr.mxu0 0.0
        %1800 = vmatpush2.xpose.msra.mxu0 0.0
        %1801 = vmatprep.subr.mxu0 0.0
        %1802 = vmatpush2.xpose.msra.mxu0 0.0
        %1803 = vmatprep.subr.mxu0 0.0
        %1804 = vmatpush2.xpose.msra.mxu0 0.0
        %1805 = vmatprep.subr.mxu0 0.0
        %1806 = vmatpush2.xpose.msra.mxu0 0.0
        %1807 = vmatprep.subr.mxu0 0.0
        %1808 = vmatpush2.xpose.msra.mxu0 0.0
        %1809 = vmatprep.subr.mxu0 0.0
        %1810 = vmatpush2.xpose.msra.mxu0 0.0
        %1811 = vmatprep.subr.mxu0 0.0
        %1812 = vmatpush2.xpose.msra.mxu0 0.0
        %1813 = vmatprep.subr.mxu0 0.0
        %1814 = vmatpush2.xpose.msra.mxu0 0.0
        %1815 = vmatprep.subr.mxu0 0.0
        %1816 = vmatpush2.xpose.msra.mxu0 0.0
        %1817 = vmatprep.subr.mxu0 0.0
        %1818 = vmatpush2.xpose.msra.mxu0 0.0
        %1819 = vmatprep.subr.mxu0 0.0
        %1820 = vmatpush2.xpose.msra.mxu0 0.0
        %1821 = vmatprep.subr.mxu0 0.0
        %1822 = vmatpush2.xpose.msra.mxu0 0.0
        %1823 = vmatprep.subr.mxu0 0.0
        %1824 = vmatpush2.xpose.msra.mxu0 0.0
        %1825 = vmatprep.subr.mxu0 0.0
        %1826 = vmatpush2.xpose.msra.mxu0 0.0
        %1827 = vmatprep.mubr.f32.mxu0 0.0
        %1828 = vmatmul.mubr.f32.gmra.mxu0 %v1621
        %v1829 = vpop.f32.mrf.mxu0
        %v1830 = vadd.f32 0.0, %v1829
        %v1831 = vpop.f32.mrf.mxu0
        %1832 = vmatprep.mubr.f32.mxu0 0.0
        %1833 = vmatmul.mubr.f32.gmra.mxu0 %v1626
        %v1834 = vpop.f32.mrf.mxu0
        %v1835 = vadd.f32 0.0, %v1834
        %v1836 = vpop.f32.mrf.mxu0
        %1837 = vmatprep.mubr.f32.mxu0 0.0
        %1838 = vmatmul.mubr.f32.gmra.mxu0 %v1631
        %v1839 = vpop.f32.mrf.mxu0
        %v1840 = vadd.f32 0.0, %v1839
        %v1841 = vpop.f32.mrf.mxu0
        %1842 = vmatprep.mubr.f32.mxu0 0.0
        %1843 = vmatmul.mubr.f32.gmra.mxu0 %v1636
        %v1844 = vpop.f32.mrf.mxu0
        %v1845 = vadd.f32 0.0, %v1844
        %v1846 = vpop.f32.mrf.mxu0
        %1847 = vmatprep.mubr.f32.mxu0 0.0
        %1848 = vmatmul.mubr.f32.gmra.mxu0 %v1641
        %v1849 = vpop.f32.mrf.mxu0
        %v1850 = vadd.f32 0.0, %v1849
        %v1851 = vpop.f32.mrf.mxu0
        %1852 = vmatprep.mubr.f32.mxu0 0.0
        %1853 = vmatmul.mubr.f32.gmra.mxu0 %v1646
        %v1854 = vpop.f32.mrf.mxu0
        %v1855 = vadd.f32 0.0, %v1854
        %v1856 = vpop.f32.mrf.mxu0
        %1857 = vmatprep.mubr.f32.mxu0 0.0
        %1858 = vmatmul.mubr.f32.gmra.mxu0 %v1651
        %v1859 = vpop.f32.mrf.mxu0
        %v1860 = vadd.f32 0.0, %v1859
        %v1861 = vpop.f32.mrf.mxu0
        %1862 = vmatprep.mubr.f32.mxu0 0.0
        %1863 = vmatmul.mubr.f32.gmra.mxu0 %v1656
        %v1864 = vpop.f32.mrf.mxu0
        %v1865 = vadd.f32 0.0, %v1864
        %v1866 = vpop.f32.mrf.mxu0
        %1867 = vdwg.mxu0
        %vm1868 = vcmask 64512
        %v1869 = vsel %vm1868, %v1830, -inf
        %1870 = vmax.xlane.f32.xlu0 %v1869
        %v1871 = vpop.xlane.xlu0 %1870
        %v1872 = vsel %vm1868, %v1835, -inf
        %1873 = vmax.xlane.f32.xlu0 %v1872
        %v1874 = vpop.xlane.xlu0 %1873
        %v1875 = vsel %vm1868, %v1840, -inf
        %1876 = vmax.xlane.f32.xlu0 %v1875
        %v1877 = vpop.xlane.xlu0 %1876
        %v1878 = vsel %vm1868, %v1845, -inf
        %1879 = vmax.xlane.f32.xlu0 %v1878
        %v1880 = vpop.xlane.xlu0 %1879
        %v1881 = vsel %vm1868, %v1850, -inf
        %1882 = vmax.xlane.f32.xlu0 %v1881
        %v1883 = vpop.xlane.xlu0 %1882
        %v1884 = vsel %vm1868, %v1855, -inf
        %1885 = vmax.xlane.f32.xlu0 %v1884
        %v1886 = vpop.xlane.xlu0 %1885
        %v1887 = vsel %vm1868, %v1860, -inf
        %1888 = vmax.xlane.f32.xlu0 %v1887
        %v1889 = vpop.xlane.xlu0 %1888
        %v1890 = vsel %vm1868, %v1865, -inf
        %1891 = vmax.xlane.f32.xlu0 %v1890
        %v1892 = vpop.xlane.xlu0 %1891
        %v1893 = vsub.f32 %v1830, %v1871
        %v1894 = vsub.f32 %v1835, %v1874
        %v1895 = vsub.f32 %v1840, %v1877
        %v1896 = vsub.f32 %v1845, %v1880
        %v1897 = vsub.f32 %v1850, %v1883
        %v1898 = vsub.f32 %v1855, %v1886
        %v1899 = vsub.f32 %v1860, %v1889
        %v1900 = vsub.f32 %v1865, %v1892
        %v1901 = vmul.f32 %v1893, 1.442695
        %v1902 = vpow.pop %v1901
        %v1903 = vmul.f32 %v1894, 1.442695
        %v1904 = vpow.pop %v1903
        %v1905 = vmul.f32 %v1895, 1.442695
        %v1906 = vpow.pop %v1905
        %v1907 = vmul.f32 %v1896, 1.442695
        %v1908 = vpow.pop %v1907
        %v1909 = vmul.f32 %v1897, 1.442695
        %v1910 = vpow.pop %v1909
        %v1911 = vmul.f32 %v1898, 1.442695
        %v1912 = vpow.pop %v1911
        %v1913 = vmul.f32 %v1899, 1.442695
        %v1914 = vpow.pop %v1913
        %v1915 = vmul.f32 %v1900, 1.442695
        %v1916 = vpow.pop %v1915
        %v1917 = vsel %vm1868, %v1902, 0.0
        %1918 = vadd.xlane.f32.xlu0 %v1917
        %v1919 = vpop.xlane.xlu0 %1918
        %v1920 = vsel %vm1868, %v1904, 0.0
        %1921 = vadd.xlane.f32.xlu0 %v1920
        %v1922 = vpop.xlane.xlu0 %1921
        %v1923 = vsel %vm1868, %v1906, 0.0
        %1924 = vadd.xlane.f32.xlu0 %v1923
        %v1925 = vpop.xlane.xlu0 %1924
        %v1926 = vsel %vm1868, %v1908, 0.0
        %1927 = vadd.xlane.f32.xlu0 %v1926
        %v1928 = vpop.xlane.xlu0 %1927
        %v1929 = vsel %vm1868, %v1910, 0.0
        %1930 = vadd.xlane.f32.xlu0 %v1929
        %v1931 = vpop.xlane.xlu0 %1930
        %v1932 = vsel %vm1868, %v1912, 0.0
        %1933 = vadd.xlane.f32.xlu0 %v1932
        %v1934 = vpop.xlane.xlu0 %1933
        %v1935 = vsel %vm1868, %v1914, 0.0
        %1936 = vadd.xlane.f32.xlu0 %v1935
        %v1937 = vpop.xlane.xlu0 %1936
        %v1938 = vsel %vm1868, %v1916, 0.0
        %1939 = vadd.xlane.f32.xlu0 %v1938
        %v1940 = vpop.xlane.xlu0 %1939
        %v1942 = vsel %vm1868, %v1902, 0
        %v1945 = vsel %vm1868, %v1904, 0
        %v1948 = vsel %vm1868, %v1906, 0
        %v1951 = vsel %vm1868, %v1908, 0
        %v1954 = vsel %vm1868, %v1910, 0
        %v1957 = vsel %vm1868, %v1912, 0
        %v1960 = vsel %vm1868, %v1914, 0
        %v1963 = vsel %vm1868, %v1916, 0
        %1965 = vmatprep.subr.mxu0 0.0
        %1966 = vmatpush1.msra.mxu0 0.0
        %1967 = vmatprep.subr.mxu0 0.0
        %1968 = vmatpush1.msra.mxu0 0.0
        %1969 = vmatprep.subr.mxu0 0.0
        %1970 = vmatpush1.msra.mxu0 0.0
        %1971 = vmatprep.subr.mxu0 0.0
        %1972 = vmatpush1.msra.mxu0 0.0
        %1973 = vmatprep.subr.mxu0 0.0
        %1974 = vmatpush1.msra.mxu0 0.0
        %1975 = vmatprep.subr.mxu0 0.0
        %1976 = vmatpush1.msra.mxu0 0.0
        %1977 = vmatprep.subr.mxu0 0.0
        %1978 = vmatpush1.msra.mxu0 0.0
        %1979 = vmatprep.subr.mxu0 0.0
        %1980 = vmatpush1.msra.mxu0 0.0
        %1981 = vmatprep.subr.mxu0 0.0
        %1982 = vmatpush1.msra.mxu0 0.0
        %1983 = vmatprep.subr.mxu0 0.0
        %1984 = vmatpush1.msra.mxu0 0.0
        %1985 = vmatprep.subr.mxu0 0.0
        %1986 = vmatpush1.msra.mxu0 0.0
        %1987 = vmatprep.subr.mxu0 0.0
        %1988 = vmatpush1.msra.mxu0 0.0
        %1989 = vmatprep.subr.mxu0 0.0
        %1990 = vmatpush1.msra.mxu0 0.0
        %1991 = vmatprep.subr.mxu0 0.0
        %1992 = vmatpush1.msra.mxu0 0.0
        %1993 = vmatprep.subr.mxu0 0.0
        %1994 = vmatpush1.msra.mxu0 0.0
        %1995 = vmatprep.subr.mxu0 0.0
        %1996 = vmatpush1.msra.mxu0 %v1761
        %1997 = vmatprep.subr.mxu0 0.0
        %1998 = vmatpush2.msra.mxu0 0.0
        %1999 = vmatprep.subr.mxu0 0.0
        %2000 = vmatpush2.msra.mxu0 0.0
        %2001 = vmatprep.subr.mxu0 0.0
        %2002 = vmatpush2.msra.mxu0 0.0
        %2003 = vmatprep.subr.mxu0 0.0
        %2004 = vmatpush2.msra.mxu0 0.0
        %2005 = vmatprep.subr.mxu0 0.0
        %2006 = vmatpush2.msra.mxu0 0.0
        %2007 = vmatprep.subr.mxu0 0.0
        %2008 = vmatpush2.msra.mxu0 0.0
        %2009 = vmatprep.subr.mxu0 0.0
        %2010 = vmatpush2.msra.mxu0 0.0
        %2011 = vmatprep.subr.mxu0 0.0
        %2012 = vmatpush2.msra.mxu0 0.0
        %2013 = vmatprep.subr.mxu0 0.0
        %2014 = vmatpush2.msra.mxu0 0.0
        %2015 = vmatprep.subr.mxu0 0.0
        %2016 = vmatpush2.msra.mxu0 0.0
        %2017 = vmatprep.subr.mxu0 0.0
        %2018 = vmatpush2.msra.mxu0 0.0
        %2019 = vmatprep.subr.mxu0 0.0
        %2020 = vmatpush2.msra.mxu0 0.0
        %2021 = vmatprep.subr.mxu0 0.0
        %2022 = vmatpush2.msra.mxu0 0.0
        %2023 = vmatprep.subr.mxu0 0.0
        %2024 = vmatpush2.msra.mxu0 0.0
        %2025 = vmatprep.subr.mxu0 0.0
        %2026 = vmatpush2.msra.mxu0 0.0
        %2027 = vmatprep.subr.mxu0 0.0
        %2028 = vmatpush2.msra.mxu0 0.0
        %2029 = vmatprep.mubr.f32.mxu0 0.0
        %2030 = vmatmul.mubr.f32.gmra.mxu0 %v1942
        %v2031 = vpop.f32.mrf.mxu0
        %v2032 = vadd.f32 0.0, %v2031
        %v2033 = vpop.f32.mrf.mxu0
        %2034 = vmatprep.mubr.f32.mxu0 0.0
        %2035 = vmatmul.mubr.f32.gmra.mxu0 %v1945
        %v2036 = vpop.f32.mrf.mxu0
        %v2037 = vadd.f32 0.0, %v2036
        %v2038 = vpop.f32.mrf.mxu0
        %2039 = vmatprep.mubr.f32.mxu0 0.0
        %2040 = vmatmul.mubr.f32.gmra.mxu0 %v1948
        %v2041 = vpop.f32.mrf.mxu0
        %v2042 = vadd.f32 0.0, %v2041
        %v2043 = vpop.f32.mrf.mxu0
        %2044 = vmatprep.mubr.f32.mxu0 0.0
        %2045 = vmatmul.mubr.f32.gmra.mxu0 %v1951
        %v2046 = vpop.f32.mrf.mxu0
        %v2047 = vadd.f32 0.0, %v2046
        %v2048 = vpop.f32.mrf.mxu0
        %2049 = vmatprep.mubr.f32.mxu0 0.0
        %2050 = vmatmul.mubr.f32.gmra.mxu0 %v1954
        %v2051 = vpop.f32.mrf.mxu0
        %v2052 = vadd.f32 0.0, %v2051
        %v2053 = vpop.f32.mrf.mxu0
        %2054 = vmatprep.mubr.f32.mxu0 0.0
        %2055 = vmatmul.mubr.f32.gmra.mxu0 %v1957
        %v2056 = vpop.f32.mrf.mxu0
        %v2057 = vadd.f32 0.0, %v2056
        %v2058 = vpop.f32.mrf.mxu0
        %2059 = vmatprep.mubr.f32.mxu0 0.0
        %2060 = vmatmul.mubr.f32.gmra.mxu0 %v1960
        %v2061 = vpop.f32.mrf.mxu0
        %v2062 = vadd.f32 0.0, %v2061
        %v2063 = vpop.f32.mrf.mxu0
        %2064 = vmatprep.mubr.f32.mxu0 0.0
        %2065 = vmatmul.mubr.f32.gmra.mxu0 %v1963
        %v2066 = vpop.f32.mrf.mxu0
        %v2067 = vadd.f32 0.0, %v2066
        %v2068 = vpop.f32.mrf.mxu0
        %2069 = vdwg.mxu0
        %v2070 = vrcp.pop %v1919
        %v2071 = vrcp.pop %v1922
        %v2072 = vrcp.pop %v1925
        %v2073 = vrcp.pop %v1928
        %v2074 = vrcp.pop %v1931
        %v2075 = vrcp.pop %v1934
        %v2076 = vrcp.pop %v1937
        %v2077 = vrcp.pop %v1940
        %v2078 = vmul.f32 %v2032, %v2070
        %v2079 = vmul.f32 %v2037, %v2071
        %v2080 = vmul.f32 %v2042, %v2072
        %v2081 = vmul.f32 %v2047, %v2073
        %v2082 = vmul.f32 %v2052, %v2074
        %v2083 = vmul.f32 %v2057, %v2075
        %v2084 = vmul.f32 %v2062, %v2076
        %v2085 = vmul.f32 %v2067, %v2077
        %v2086 = vld [vmem:[%s11] sm:$0xff]
        %v2087 = vld [vmem:[%s11 + $0x8] sm:$0xff]
        %v2088 = vld [vmem:[%s11 + $0x10] sm:$0xff]
        %v2089 = vld [vmem:[%s11 + $0x18] sm:$0xff]
        %v2090 = vld [vmem:[%s11 + $0x20] sm:$0xff]
        %v2091 = vld [vmem:[%s11 + $0x28] sm:$0xff]
        %v2092 = vld [vmem:[%s11 + $0x30] sm:$0xff]
        %v2093 = vld [vmem:[%s11 + $0x38] sm:$0xff]
        %v2094 = vld [vmem:[%s11 + $0x40] sm:$0xff]
        %v2095 = vld [vmem:[%s11 + $0x48] sm:$0xff]
        %v2096 = vld [vmem:[%s11 + $0x50] sm:$0xff]
        %v2097 = vld [vmem:[%s11 + $0x58] sm:$0xff]
        %v2098 = vld [vmem:[%s11 + $0x60] sm:$0xff]
        %v2099 = vld [vmem:[%s11 + $0x68] sm:$0xff]
        %v2100 = vld [vmem:[%s11 + $0x70] sm:$0xff]
        %v2101 = vld [vmem:[%s11 + $0x78] sm:$0xff]
        %2102 = vmatprep.subr.mxu0 0.0
        %2103 = vmatpush1.msra.mxu0 %v2101
        %2104 = vmatprep.subr.mxu0 0.0
        %2105 = vmatpush1.msra.mxu0 %v2100
        %2106 = vmatprep.subr.mxu0 0.0
        %2107 = vmatpush1.msra.mxu0 %v2099
        %2108 = vmatprep.subr.mxu0 0.0
        %2109 = vmatpush1.msra.mxu0 %v2098
        %2110 = vmatprep.subr.mxu0 0.0
        %2111 = vmatpush1.msra.mxu0 %v2097
        %2112 = vmatprep.subr.mxu0 0.0
        %2113 = vmatpush1.msra.mxu0 %v2096
        %2114 = vmatprep.subr.mxu0 0.0
        %2115 = vmatpush1.msra.mxu0 %v2095
        %2116 = vmatprep.subr.mxu0 0.0
        %2117 = vmatpush1.msra.mxu0 %v2094
        %2118 = vmatprep.subr.mxu0 0.0
        %2119 = vmatpush1.msra.mxu0 %v2093
        %2120 = vmatprep.subr.mxu0 0.0
        %2121 = vmatpush1.msra.mxu0 %v2092
        %2122 = vmatprep.subr.mxu0 0.0
        %2123 = vmatpush1.msra.mxu0 %v2091
        %2124 = vmatprep.subr.mxu0 0.0
        %2125 = vmatpush1.msra.mxu0 %v2090
        %2126 = vmatprep.subr.mxu0 0.0
        %2127 = vmatpush1.msra.mxu0 %v2089
        %2128 = vmatprep.subr.mxu0 0.0
        %2129 = vmatpush1.msra.mxu0 %v2088
        %2130 = vmatprep.subr.mxu0 0.0
        %2131 = vmatpush1.msra.mxu0 %v2087
        %2132 = vmatprep.subr.mxu0 0.0
        %2133 = vmatpush1.msra.mxu0 %v2086
        %2134 = vmatprep.subr.mxu0 0.0
        %2135 = vmatpush2.msra.mxu0 0.0
        %2136 = vmatprep.subr.mxu0 0.0
        %2137 = vmatpush2.msra.mxu0 0.0
        %2138 = vmatprep.subr.mxu0 0.0
        %2139 = vmatpush2.msra.mxu0 0.0
        %2140 = vmatprep.subr.mxu0 0.0
        %2141 = vmatpush2.msra.mxu0 0.0
        %2142 = vmatprep.subr.mxu0 0.0
        %2143 = vmatpush2.msra.mxu0 0.0
        %2144 = vmatprep.subr.mxu0 0.0
        %2145 = vmatpush2.msra.mxu0 0.0
        %2146 = vmatprep.subr.mxu0 0.0
        %2147 = vmatpush2.msra.mxu0 0.0
        %2148 = vmatprep.subr.mxu0 0.0
        %2149 = vmatpush2.msra.mxu0 0.0
        %2150 = vmatprep.subr.mxu0 0.0
        %2151 = vmatpush2.msra.mxu0 0.0
        %2152 = vmatprep.subr.mxu0 0.0
        %2153 = vmatpush2.msra.mxu0 0.0
        %2154 = vmatprep.subr.mxu0 0.0
        %2155 = vmatpush2.msra.mxu0 0.0
        %2156 = vmatprep.subr.mxu0 0.0
        %2157 = vmatpush2.msra.mxu0 0.0
        %2158 = vmatprep.subr.mxu0 0.0
        %2159 = vmatpush2.msra.mxu0 0.0
        %2160 = vmatprep.subr.mxu0 0.0
        %2161 = vmatpush2.msra.mxu0 0.0
        %2162 = vmatprep.subr.mxu0 0.0
        %2163 = vmatpush2.msra.mxu0 0.0
        %2164 = vmatprep.subr.mxu0 0.0
        %2165 = vmatpush2.msra.mxu0 0.0
        %2166 = vmatprep.mubr.f32.mxu0 0.0
        %2167 = vmatmul.mubr.f32.gmra.mxu0 %v2078
        %v2168 = vpop.f32.mrf.mxu0
        %v2169 = vadd.f32 0.0, %v2168
        %v2170 = vpop.f32.mrf.mxu0
        %2171 = vmatprep.mubr.f32.mxu0 0.0
        %2172 = vmatmul.mubr.f32.gmra.mxu0 %v2079
        %v2173 = vpop.f32.mrf.mxu0
        %v2174 = vadd.f32 0.0, %v2173
        %v2175 = vpop.f32.mrf.mxu0
        %2176 = vmatprep.mubr.f32.mxu0 0.0
        %2177 = vmatmul.mubr.f32.gmra.mxu0 %v2080
        %v2178 = vpop.f32.mrf.mxu0
        %v2179 = vadd.f32 0.0, %v2178
        %v2180 = vpop.f32.mrf.mxu0
        %2181 = vmatprep.mubr.f32.mxu0 0.0
        %2182 = vmatmul.mubr.f32.gmra.mxu0 %v2081
        %v2183 = vpop.f32.mrf.mxu0
        %v2184 = vadd.f32 0.0, %v2183
        %v2185 = vpop.f32.mrf.mxu0
        %2186 = vmatprep.mubr.f32.mxu0 0.0
        %2187 = vmatmul.mubr.f32.gmra.mxu0 %v2082
        %v2188 = vpop.f32.mrf.mxu0
        %v2189 = vadd.f32 0.0, %v2188
        %v2190 = vpop.f32.mrf.mxu0
        %2191 = vmatprep.mubr.f32.mxu0 0.0
        %2192 = vmatmul.mubr.f32.gmra.mxu0 %v2083
        %v2193 = vpop.f32.mrf.mxu0
        %v2194 = vadd.f32 0.0, %v2193
        %v2195 = vpop.f32.mrf.mxu0
        %2196 = vmatprep.mubr.f32.mxu0 0.0
        %2197 = vmatmul.mubr.f32.gmra.mxu0 %v2084
        %v2198 = vpop.f32.mrf.mxu0
        %v2199 = vadd.f32 0.0, %v2198
        %v2200 = vpop.f32.mrf.mxu0
        %2201 = vmatprep.mubr.f32.mxu0 0.0
        %2202 = vmatmul.mubr.f32.gmra.mxu0 %v2085
        %v2203 = vpop.f32.mrf.mxu0
        %v2204 = vadd.f32 0.0, %v2203
        %v2205 = vpop.f32.mrf.mxu0
        %2206 = vdwg.mxu0
        %v2207 = vadd.f32 %v1530, %v2169
        %v2208 = vadd.f32 %v1531, %v2174
        %v2209 = vadd.f32 %v1532, %v2179
        %v2210 = vadd.f32 %v1533, %v2184
        %v2211 = vadd.f32 %v1534, %v2189
        %v2212 = vadd.f32 %v1535, %v2194
        %v2213 = vadd.f32 %v1536, %v2199
        %v2214 = vadd.f32 %v1537, %v2204
        %v2215 = vld [vmem:[%s12] sm:$0xff]
        %v2216 = vld [vmem:[%s12 + $0x8] sm:$0xff]
        %v2217 = vld [vmem:[%s12 + $0x10] sm:$0xff]
        %v2218 = vld [vmem:[%s12 + $0x18] sm:$0xff]
        %v2219 = vld [vmem:[%s12 + $0x20] sm:$0xff]
        %v2220 = vld [vmem:[%s12 + $0x28] sm:$0xff]
        %v2221 = vld [vmem:[%s12 + $0x30] sm:$0xff]
        %v2222 = vld [vmem:[%s12 + $0x38] sm:$0xff]
        %v2223 = vld [vmem:[%s12 + $0x40] sm:$0xff]
        %v2224 = vld [vmem:[%s12 + $0x48] sm:$0xff]
        %v2225 = vld [vmem:[%s12 + $0x50] sm:$0xff]
        %v2226 = vld [vmem:[%s12 + $0x58] sm:$0xff]
        %v2227 = vld [vmem:[%s12 + $0x60] sm:$0xff]
        %v2228 = vld [vmem:[%s12 + $0x68] sm:$0xff]
        %v2229 = vld [vmem:[%s12 + $0x70] sm:$0xff]
        %v2230 = vld [vmem:[%s12 + $0x78] sm:$0xff]
        %2231 = vmatprep.subr.mxu0 0.0
        %2232 = vmatpush1.msra.mxu0 %v2230
        %2233 = vmatprep.subr.mxu0 0.0
        %2234 = vmatpush1.msra.mxu0 %v2229
        %2235 = vmatprep.subr.mxu0 0.0
        %2236 = vmatpush1.msra.mxu0 %v2228
        %2237 = vmatprep.subr.mxu0 0.0
        %2238 = vmatpush1.msra.mxu0 %v2227
        %2239 = vmatprep.subr.mxu0 0.0
        %2240 = vmatpush1.msra.mxu0 %v2226
        %2241 = vmatprep.subr.mxu0 0.0
        %2242 = vmatpush1.msra.mxu0 %v2225
        %2243 = vmatprep.subr.mxu0 0.0
        %2244 = vmatpush1.msra.mxu0 %v2224
        %2245 = vmatprep.subr.mxu0 0.0
        %2246 = vmatpush1.msra.mxu0 %v2223
        %2247 = vmatprep.subr.mxu0 0.0
        %2248 = vmatpush1.msra.mxu0 %v2222
        %2249 = vmatprep.subr.mxu0 0.0
        %2250 = vmatpush1.msra.mxu0 %v2221
        %2251 = vmatprep.subr.mxu0 0.0
        %2252 = vmatpush1.msra.mxu0 %v2220
        %2253 = vmatprep.subr.mxu0 0.0
        %2254 = vmatpush1.msra.mxu0 %v2219
        %2255 = vmatprep.subr.mxu0 0.0
        %2256 = vmatpush1.msra.mxu0 %v2218
        %2257 = vmatprep.subr.mxu0 0.0
        %2258 = vmatpush1.msra.mxu0 %v2217
        %2259 = vmatprep.subr.mxu0 0.0
        %2260 = vmatpush1.msra.mxu0 %v2216
        %2261 = vmatprep.subr.mxu0 0.0
        %2262 = vmatpush1.msra.mxu0 %v2215
        %2263 = vmatprep.subr.mxu0 0.0
        %2264 = vmatpush2.msra.mxu0 0.0
        %2265 = vmatprep.subr.mxu0 0.0
        %2266 = vmatpush2.msra.mxu0 0.0
        %2267 = vmatprep.subr.mxu0 0.0
        %2268 = vmatpush2.msra.mxu0 0.0
        %2269 = vmatprep.subr.mxu0 0.0
        %2270 = vmatpush2.msra.mxu0 0.0
        %2271 = vmatprep.subr.mxu0 0.0
        %2272 = vmatpush2.msra.mxu0 0.0
        %2273 = vmatprep.subr.mxu0 0.0
        %2274 = vmatpush2.msra.mxu0 0.0
        %2275 = vmatprep.subr.mxu0 0.0
        %2276 = vmatpush2.msra.mxu0 0.0
        %2277 = vmatprep.subr.mxu0 0.0
        %2278 = vmatpush2.msra.mxu0 0.0
        %2279 = vmatprep.subr.mxu0 0.0
        %2280 = vmatpush2.msra.mxu0 0.0
        %2281 = vmatprep.subr.mxu0 0.0
        %2282 = vmatpush2.msra.mxu0 0.0
        %2283 = vmatprep.subr.mxu0 0.0
        %2284 = vmatpush2.msra.mxu0 0.0
        %2285 = vmatprep.subr.mxu0 0.0
        %2286 = vmatpush2.msra.mxu0 0.0
        %2287 = vmatprep.subr.mxu0 0.0
        %2288 = vmatpush2.msra.mxu0 0.0
        %2289 = vmatprep.subr.mxu0 0.0
        %2290 = vmatpush2.msra.mxu0 0.0
        %2291 = vmatprep.subr.mxu0 0.0
        %2292 = vmatpush2.msra.mxu0 0.0
        %2293 = vmatprep.subr.mxu0 0.0
        %2294 = vmatpush2.msra.mxu0 0.0
        %2295 = vmatprep.mubr.f32.mxu0 0.0
        %2296 = vmatmul.mubr.f32.gmra.mxu0 %v2207
        %v2297 = vpop.f32.mrf.mxu0
        %v2298 = vadd.f32 0.0, %v2297
        %v2299 = vpop.f32.mrf.mxu0
        %2300 = vmatprep.mubr.f32.mxu0 0.0
        %2301 = vmatmul.mubr.f32.gmra.mxu0 %v2208
        %v2302 = vpop.f32.mrf.mxu0
        %v2303 = vadd.f32 0.0, %v2302
        %v2304 = vpop.f32.mrf.mxu0
        %2305 = vmatprep.mubr.f32.mxu0 0.0
        %2306 = vmatmul.mubr.f32.gmra.mxu0 %v2209
        %v2307 = vpop.f32.mrf.mxu0
        %v2308 = vadd.f32 0.0, %v2307
        %v2309 = vpop.f32.mrf.mxu0
        %2310 = vmatprep.mubr.f32.mxu0 0.0
        %2311 = vmatmul.mubr.f32.gmra.mxu0 %v2210
        %v2312 = vpop.f32.mrf.mxu0
        %v2313 = vadd.f32 0.0, %v2312
        %v2314 = vpop.f32.mrf.mxu0
        %2315 = vmatprep.mubr.f32.mxu0 0.0
        %2316 = vmatmul.mubr.f32.gmra.mxu0 %v2211
        %v2317 = vpop.f32.mrf.mxu0
        %v2318 = vadd.f32 0.0, %v2317
        %v2319 = vpop.f32.mrf.mxu0
        %2320 = vmatprep.mubr.f32.mxu0 0.0
        %2321 = vmatmul.mubr.f32.gmra.mxu0 %v2212
        %v2322 = vpop.f32.mrf.mxu0
        %v2323 = vadd.f32 0.0, %v2322
        %v2324 = vpop.f32.mrf.mxu0
        %2325 = vmatprep.mubr.f32.mxu0 0.0
        %2326 = vmatmul.mubr.f32.gmra.mxu0 %v2213
        %v2327 = vpop.f32.mrf.mxu0
        %v2328 = vadd.f32 0.0, %v2327
        %v2329 = vpop.f32.mrf.mxu0
        %2330 = vmatprep.mubr.f32.mxu0 0.0
        %2331 = vmatmul.mubr.f32.gmra.mxu0 %v2214
        %v2332 = vpop.f32.mrf.mxu0
        %v2333 = vadd.f32 0.0, %v2332
        %v2334 = vpop.f32.mrf.mxu0
        %2335 = vdwg.mxu0
        %v2336 = vadd.f32 %v493, %v2298
        %v2337 = vadd.f32 %v494, %v2303
        %v2338 = vadd.f32 %v495, %v2308
        %v2339 = vadd.f32 %v496, %v2313
        %v2340 = vadd.f32 %v497, %v2318
        %v2341 = vadd.f32 %v498, %v2323
        %v2342 = vadd.f32 %v499, %v2328
        %v2343 = vadd.f32 %v500, %v2333
        %2344 = vst.msk [vmem:[%s491] sm:$0xff] %vm511, %v2336
        %2345 = vst.msk [vmem:[%s491 + $0x8] sm:$0xff] %vm511, %v2337
        %2346 = vst.msk [vmem:[%s491 + $0x10] sm:$0xff] %vm511, %v2338
        %2347 = vst.msk [vmem:[%s491 + $0x18] sm:$0xff] %vm511, %v2339
        %2348 = vst.msk [vmem:[%s491 + $0x20] sm:$0xff] %vm511, %v2340
        %2349 = vst.msk [vmem:[%s491 + $0x28] sm:$0xff] %vm511, %v2341
        %2350 = vst.msk [vmem:[%s491 + $0x30] sm:$0xff] %vm511, %v2342
        %2351 = vst.msk [vmem:[%s491 + $0x38] sm:$0xff] %vm511, %v2343
        %p2352 = scmp.lt.s32.totalorder %s25, 1
        %s2353 = scalar_select %p2352, %s25, 1
        %s2354 = smul.addr %s2353, 8
        %s2355 = smul.addr %s2354, 8
        %s2356 = scalar_lea.vmem %s13, %s2355
        // Predicated region
        $region77: #{ref_only_noised_unet_forward.3} parent=71 // pred_check
          %p2357 = pneg %p331
        $region78: #{ref_only_noised_unet_forward.3} parent=71 // pred_check_branch
          %2359 = sbr.rel (%p2357) target = $region80
        $region79: #{ref_only_noised_unet_forward.3} parent=71 // pred_region
          _
        $region80: #{ref_only_noised_unet_forward.3} parent=71 // pred_fallthru
          _
      $region72: #{ref_only_noised_unet_forward.3} parent=5 // pred_fallthru
        _
      %p2360 = scmp.le.s32.totalorder 2, %s20
      // Predicated region
      $region81: #{ref_only_noised_unet_forward.3} parent=5 // pred_check
        %p2361 = pneg %p2360
      $region82: #{ref_only_noised_unet_forward.3} parent=5 // pred_check_branch
        %2363 = sbr.rel (%p2361) target = $region84
      $region83: #{ref_only_noised_unet_forward.3} parent=5 // pred_region
        %s2364 = ssub.s32 %s20, 2
        // Predicated region
        $region85: #{ref_only_noised_unet_forward.3} parent=83 // pred_check
          %p2365 = pneg %p337
        $region86: #{ref_only_noised_unet_forward.3} parent=83 // pred_check_branch
          %2367 = sbr.rel (%p2365) target = $region88
        $region87: #{ref_only_noised_unet_forward.3} parent=83 // pred_region
          %p2368 = scmp.lt.s32.totalorder %s26, 1
          %s2369 = scalar_select %p2368, %s26, 1
          %s2370 = smul.addr %s2369, 8
          %s2371 = smul.addr %s2370, 8
          %s2372 = scalar_lea.vmem %s13, %s2371
        $region88: #{ref_only_noised_unet_forward.3} parent=83 // pred_fallthru
          _
      $region84: #{ref_only_noised_unet_forward.3} parent=5 // pred_fallthru
        _
    $region6: #{ref_only_noised_unet_forward.3} parent=1 // loop_footer
      %s24 = sadd.s32 1, %s20
    $region7: #{ref_only_noised_unet_forward.3} parent=1 // loop_footer_branch
      %19 = sbr.rel target = $region3
    $region8: #{ref_only_noised_unet_forward.3} parent=1 // loop_exit
      _
    %2373 = vsyncpa [#allocation3], 1
    %s2374 = scalar_lea.sflag [#allocation3], 1
    %2375 = vsyncpa %s2374, 1

</llo_original>
